<compile_context>
chip_gen: v5e
topology: v5e:2x2
jax: 0.10.0
libtpu: 0.0.40
codegen_flags: <defaults>
</compile_context>

<pallas_src>
import functools
import math

import jax
import jax.numpy as jnp
import numpy as np
from jax import lax
from jax.experimental import pallas as pl
from jax.experimental.pallas import tpu as pltpu

INPUT_DIM = 16
RATIO = 2
MAX_TM = 2048          # per-step VMEM stays well under the 32 MiB scoped limit


def _seq_dims(input_dim, ratio=RATIO):
    r = ratio
    return [
        # layers_5
        [(input_dim, int(16 * r)), (int(16 * r), int(8 * r)),
         (int(8 * r), int(4 * r)), (int(4 * r), int(2 * r)), (int(2 * r), 1)],
        # layers_4
        [(input_dim, int(8 * r)), (int(8 * r), int(4 * r)),
         (int(4 * r), int(2 * r)), (int(2 * r), 1)],
        # layers_3
        [(input_dim, int(4 * r)), (int(4 * r), int(2 * r)), (int(2 * r), 1)],
        # layers_2
        [(input_dim, int(2 * r)), (int(2 * r), 1)],
        # layers_1
        [(input_dim, 1)],
        # integrate_layers
        [(5, 1)],
    ]


def init_params(key, input_dim):
    """Deterministic PyTorch-style init: U(-1/sqrt(fan_in), 1/sqrt(fan_in)).

    Weights are stored (in, out) so y = x @ W + b.  Flat ordering: 3
    MySequential modules, each [layers_5..layers_1, integrate], with
    (weight, bias) pairs per Linear.
    """
    params = []
    dims_list = _seq_dims(input_dim)
    for _m in range(3):
        for dims in dims_list:
            for (fi, fo) in dims:
                key, kw, kb = jax.random.split(key, 3)
                bound = 1.0 / math.sqrt(fi)
                w = jax.random.uniform(kw, (fi, fo), jnp.float32, -bound, bound)
                b = jax.random.uniform(kb, (1, fo), jnp.float32, -bound, bound)
                params.append(w)
                params.append(b)
    return params


def _structured(params, input_dim):
    """Regroup the flat (w, b) list as mods[m][seq][layer] = (w, b)."""
    dims_list = _seq_dims(input_dim)
    mods, idx = [], 0
    for _m in range(3):
        seqs = []
        for dims in dims_list:
            layers = []
            for _ in dims:
                layers.append((params[idx], params[idx + 1]))
                idx += 2
            seqs.append(layers)
        mods.append(seqs)
    return mods


def d1_row_info(input_dim=INPUT_DIM):
    """(#real depth-1 output rows, 8-aligned offset of the logit-selector rows)."""
    dims_list = _seq_dims(input_dim)
    d1_rows = 3 + 3 * sum(dims_list[s][0][1] for s in range(4))   # 183
    d1_pad = ((d1_rows + 7) // 8) * 8                             # 184
    return d1_rows, d1_pad


def pack_params(params, input_dim=INPUT_DIM):
    """Fuse the 96 per-layer params into 12 arrays for the Pallas kernel.

    Depth-d activation row layout (d = 1..5):
      rows 0..2 : output of the branch that FINISHES at depth d (s = 5 - d),
                  one row per module (m = 0, 1, 2),
      rows 3..  : per module m, the depth-d outputs of the still-active
                  branches s = 0..4-d (ordered by decreasing branch depth).
    A_d is block-diagonal over (module, branch); columns 0..2 (the previously
    finished rows) are zero, so those values are inert afterwards and only get
    folded into the integrate accumulator.

    A_1 is additionally extended to consume the full (input_dim + 3) columns
    and to emit the 3 raw routing logits as rows d1_pad..d1_pad+2 (identity
    rows, zero bias), so the kernel gets them transposed to (3, tm) for free.
    """
    mods = _structured(params, input_dim)
    dims_list = _seq_dims(input_dim)

    def fo(s, layer):            # output width of branch s, layer `layer`
        return dims_list[s][layer][1]

    arrays = []
    for d in range(1, 6):
        fin_s = 5 - d                      # branch finishing at this depth
        act_s = list(range(0, 5 - d))      # branches still active afterwards

        # ---- input row offsets -------------------------------------------
        if d == 1:
            in_rows = input_dim
            per_mod_in = 0
            in_off = {s: 0 for s in range(5)}
            in_w = {s: input_dim for s in range(5)}
        else:
            prev_act = list(range(0, 6 - d))
            widths = [fo(s, d - 2) for s in prev_act]
            per_mod_in = sum(widths)
            in_rows = 3 + 3 * per_mod_in
            in_off, in_w, off = {}, {}, 0
            for s, wd in zip(prev_act, widths):
                in_off[s] = off
                in_w[s] = wd
                off += wd

        # ---- output row offsets ------------------------------------------
        out_widths = [fo(s, d - 1) for s in act_s]
        per_mod_out = sum(out_widths)
        out_rows = 3 + 3 * per_mod_out

        A = np.zeros((out_rows, in_rows), np.float32)
        Bv = np.zeros((out_rows, 1), np.float32)

        for m in range(3):
            def col(s):
                if d == 1:
                    return 0
                return 3 + m * per_mod_in + in_off[s]

            # branch finishing at this depth -> rows 0..2
            w, b = mods[m][fin_s][d - 1]
            A[m, col(fin_s):col(fin_s) + in_w[fin_s]] = np.asarray(w)[:, 0]
            Bv[m, 0] = np.asarray(b)[0, 0]

            # still-active branches (block-diagonal)
            row = 3 + m * per_mod_out
            for s, ow in zip(act_s, out_widths):
                w, b = mods[m][s][d - 1]
                A[row:row + ow, col(s):col(s) + in_w[s]] = np.asarray(w).T
                Bv[row:row + ow, 0] = np.asarray(b)[0, :]
                row += ow

        if d == 1:
            # Extend to (d1_pad + 3, input_dim + 3): identity rows that copy the
            # 3 routing-logit columns, placed at an 8-aligned sublane offset.
            rows, rows_pad = d1_row_info(input_dim)
            assert rows == out_rows
            A_ext = np.zeros((rows_pad + 3, input_dim + 3), np.float32)
            A_ext[:rows, :input_dim] = A
            B_ext = np.zeros((rows_pad + 3, 1), np.float32)
            B_ext[:rows, :] = Bv
            for j in range(3):
                A_ext[rows_pad + j, input_dim + j] = 1.0
            A, Bv = A_ext, B_ext

        arrays.append(jnp.asarray(A))
        arrays.append(jnp.asarray(Bv))

    # Integrate layers: W^T (3, 5) = [module, cat position x5..x1], bias (3, 1)
    WIT = np.zeros((3, 5), np.float32)
    BI = np.zeros((3, 1), np.float32)
    for m in range(3):
        w, b = mods[m][5][0]
        WIT[m, :] = np.asarray(w)[:, 0]
        BI[m, 0] = np.asarray(b)[0, 0]
    arrays.append(jnp.asarray(WIT))
    arrays.append(jnp.asarray(BI))
    return arrays


def _mish(x):
    # mish(x) = x * tanh(softplus(x)) = x * (e^2 + 2e) / (e^2 + 2e + 2),
    # e = exp(x); clamp for large x (ratio -> 1 there anyway).
    # Exact reciprocal keeps the 3e-5 accuracy contract (approx=True would not).
    e = jnp.exp(jnp.minimum(x, 20.0))
    n = e * (e + 2.0)
    return x * n * pl.reciprocal(n + 2.0)


def _kernel(d1_rows, d1_pad, x_ref, a1, b1, a2, b2, a3, b3, a4, b4, a5, b5,
            wit, bi, out_ref):
    x_tile = x_ref[...]                               # (tm, input_dim + 3)

    # Depth 1: (d1_pad+3, D) @ (tm, D)^T on the MXU (trans_b dot) -> (rows, tm).
    # Rows d1_pad..d1_pad+2 are the raw routing logits, already transposed.
    z1 = lax.dot_general(a1[...], x_tile,
                         dimension_numbers=(((1,), (1,)), ((), ())),
                         preferred_element_type=jnp.float32) + b1[...]
    lg = z1[d1_pad:d1_pad + 3, :]                     # (3, tm) raw logits
    h = _mish(z1[:d1_rows, :])                        # (183, tm); rows 0:3 = x1

    w_int = wit[...]                                  # (3, 5): [module, pos]
    acc = bi[...] + h[0:3, :] * w_int[:, 4:5]

    def mxu_layer(a_ref, b_ref, s):
        z = jnp.dot(a_ref[...], s, preferred_element_type=jnp.float32)
        return _mish(z + b_ref[...])

    def vpu_layer(a_ref, b_ref, s):
        # Rank-1 multiply-add updates on the VPU: avoids a nearly-empty padded
        # MXU tile pass for the tiny (15x39) / (3x15) matrices.
        a = a_ref[...]                                # (out_rows, in_rows)
        z = b_ref[...]                                # (out_rows, 1)
        for k in range(a.shape[1]):
            z = z + a[:, k:k + 1] * s[k:k + 1, :]
        return _mish(z)

    h = mxu_layer(a2, b2, h)                          # (87, tm);  rows 0:3 = x2
    acc = acc + h[0:3, :] * w_int[:, 3:4]
    h = mxu_layer(a3, b3, h)                          # (39, tm);  rows 0:3 = x3
    acc = acc + h[0:3, :] * w_int[:, 2:3]
    h = vpu_layer(a4, b4, h)                          # (15, tm);  rows 0:3 = x4
    acc = acc + h[0:3, :] * w_int[:, 1:2]
    h = vpu_layer(a5, b5, h)                          # (3, tm);   rows 0:3 = x5
    acc = acc + h * w_int[:, 0:1]
    y = _mish(acc)                                    # (3, tm) per-module output

    # torch.argmax first-max tie-break over the 3 routing logits.
    l0 = lg[0:1, :]
    l1 = lg[1:2, :]
    l2 = lg[2:3, :]
    c0 = (l0 >= l1) & (l0 >= l2)
    c1 = jnp.logical_not(c0) & (l1 >= l2)
    out_ref[...] = jnp.where(c0, y[0:1, :], jnp.where(c1, y[1:2, :], y[2:3, :]))


def _num_tensorcores_per_device():
    """2 for chips exposing two TensorCores behind one device, else 1."""
    try:
        kind = jax.devices()[0].device_kind.lower()
    except Exception:
        return 1
    for tag in ("v7", "v5p", "v4"):
        if tag in kind:
            return 2
    return 1


def _choose_tm(batch, num_cores, max_tm=MAX_TM):
    """Lane tile: multiple of 128, <= max_tm.

    Single-TC chips (v5e/v6e): as few, as large steps as possible (one step for
    small batches).  2-TC chips: an even number of steps >= 2 so both
    TensorCores get work with the "parallel" grid axis.
    """
    if num_cores <= 1:
        steps = max(1, pl.cdiv(batch, max_tm))
    else:
        steps = max(2, 2 * pl.cdiv(batch, 2 * max_tm))
    tm = 128 * pl.cdiv(pl.cdiv(batch, steps), 128)
    return int(max(128, min(max_tm, tm)))


def my_model_forward(x, packed_params, input_dim=INPUT_DIM, tm=None):
    B, D = x.shape
    assert D == input_dim + 3
    if tm is None:
        tm = _choose_tm(B, _num_tensorcores_per_device())
    B_pad = int(pl.cdiv(B, tm)) * tm

    # No transpose / full re-layout of x on the host: the kernel consumes the
    # natural (tm, D) tile directly.  Only pad the batch remainder (cheap,
    # contiguous, and a no-op when B is already a multiple of tm).
    if B_pad != B:
        x = jnp.pad(x, ((0, B_pad - B), (0, 0)))

    d1_rows, d1_pad = d1_row_info(input_dim)

    in_specs = [pl.BlockSpec((tm, D), lambda i: (i, 0))]
    for p in packed_params:
        # Constant block index -> Pallas keeps these resident (no re-fetch).
        in_specs.append(pl.BlockSpec(p.shape, lambda i: (0, 0)))
    out_spec = pl.BlockSpec((1, tm), lambda i: (0, i))   # lane-dense output

    kernel = functools.partial(_kernel, d1_rows, d1_pad)
    out = pl.pallas_call(
        kernel,
        out_shape=jax.ShapeDtypeStruct((1, B_pad), jnp.float32),
        grid_spec=pltpu.PrefetchScalarGridSpec(
            num_scalar_prefetch=0,
            grid=(B_pad // tm,),
            in_specs=in_specs,
            out_specs=out_spec,
        ),
        compiler_params=pltpu.CompilerParams(
            dimension_semantics=("parallel",),
            vmem_limit_bytes=32 * 1024 * 1024),
    )(x, *packed_params)
    return out.reshape(-1)[:B]


def reference_forward(x, params, input_dim=INPUT_DIM):
    """Pure-JAX reference with the original (unpacked) per-layer params."""
    feats = x[:, :input_dim]
    cls = jnp.argmax(x[:, input_dim:input_dim + 3], axis=-1)
    dims_list = _seq_dims(input_dim)

    idx = 0
    outs = []
    for _m in range(3):
        branch = []
        for dims in dims_list[:5]:
            h = feats
            for _ in dims:
                w, b = params[idx], params[idx + 1]
                idx += 2
                h = h @ w + b
                h = h * jnp.tanh(jax.nn.softplus(h))
            branch.append(h)
        cat = jnp.concatenate(branch, axis=-1)
        w, b = params[idx], params[idx + 1]
        idx += 2
        y = cat @ w + b
        y = y * jnp.tanh(jax.nn.softplus(y))
        outs.append(y[:, 0])
    outs = jnp.stack(outs, axis=0)              # (3, B)
    return outs[cls, jnp.arange(x.shape[0])]


if __name__ == "__main__":
    key = jax.random.PRNGKey(0)
    kp, kx, kc = jax.random.split(key, 3)

    params = init_params(kp, INPUT_DIM)
    packed = pack_params(params, INPUT_DIM)

    B = 200                                     # small batch
    feats = jax.random.normal(kx, (B, INPUT_DIM), jnp.float32)
    cls_logits = jax.random.normal(kc, (B, 3), jnp.float32)
    x = jnp.concatenate([feats, cls_logits], axis=1)   # (B, INPUT_DIM + 3)

    out = my_model_forward(x, packed)
    out = jax.block_until_ready(out)
    assert out.shape == (B,)

    ref = reference_forward(x, params)
    np.testing.assert_allclose(np.asarray(out), np.asarray(ref),
                               rtol=3e-5, atol=3e-5)
    print("KERNEL_OK")
</pallas_src>

<mosaic_0001>
module attributes {stable_mosaic.version = 11 : i64} {
  func.func @_kernel(%arg0: i32, %arg1: memref<256x19xf32, #tpu.memory_space<vmem>>, %arg2: memref<187x19xf32, #tpu.memory_space<vmem>>, %arg3: memref<187x1xf32, #tpu.memory_space<vmem>>, %arg4: memref<87x183xf32, #tpu.memory_space<vmem>>, %arg5: memref<87x1xf32, #tpu.memory_space<vmem>>, %arg6: memref<39x87xf32, #tpu.memory_space<vmem>>, %arg7: memref<39x1xf32, #tpu.memory_space<vmem>>, %arg8: memref<15x39xf32, #tpu.memory_space<vmem>>, %arg9: memref<15x1xf32, #tpu.memory_space<vmem>>, %arg10: memref<3x15xf32, #tpu.memory_space<vmem>>, %arg11: memref<3x1xf32, #tpu.memory_space<vmem>>, %arg12: memref<3x5xf32, #tpu.memory_space<vmem>>, %arg13: memref<3x1xf32, #tpu.memory_space<vmem>>, %arg14: memref<1x256xf32, #tpu.memory_space<vmem>>) attributes {dimension_semantics = [#tpu.dimension_semantics<parallel>], iteration_bounds = array<i64: 1>, scalar_prefetch = 0 : i64, scratch_operands = 0 : i64, tpu.core_type = #tpu.core_type<tc>, window_params = [{transform_indices = @transform_0, window_bounds = array<i64: 256, 19>}, {pipeline_mode = #tpu.pipeline_mode<synchronous>, transform_indices = @transform_1, window_bounds = array<i64: 187, 19>}, {pipeline_mode = #tpu.pipeline_mode<synchronous>, transform_indices = @transform_2, window_bounds = array<i64: 187, 1>}, {pipeline_mode = #tpu.pipeline_mode<synchronous>, transform_indices = @transform_3, window_bounds = array<i64: 87, 183>}, {pipeline_mode = #tpu.pipeline_mode<synchronous>, transform_indices = @transform_4, window_bounds = array<i64: 87, 1>}, {pipeline_mode = #tpu.pipeline_mode<synchronous>, transform_indices = @transform_5, window_bounds = array<i64: 39, 87>}, {pipeline_mode = #tpu.pipeline_mode<synchronous>, transform_indices = @transform_6, window_bounds = array<i64: 39, 1>}, {pipeline_mode = #tpu.pipeline_mode<synchronous>, transform_indices = @transform_7, window_bounds = array<i64: 15, 39>}, {pipeline_mode = #tpu.pipeline_mode<synchronous>, transform_indices = @transform_8, window_bounds = array<i64: 15, 1>}, {pipeline_mode = #tpu.pipeline_mode<synchronous>, transform_indices = @transform_9, window_bounds = array<i64: 3, 15>}, {pipeline_mode = #tpu.pipeline_mode<synchronous>, transform_indices = @transform_10, window_bounds = array<i64: 3, 1>}, {pipeline_mode = #tpu.pipeline_mode<synchronous>, transform_indices = @transform_11, window_bounds = array<i64: 3, 5>}, {pipeline_mode = #tpu.pipeline_mode<synchronous>, transform_indices = @transform_12, window_bounds = array<i64: 3, 1>}, {transform_indices = @transform_13, window_bounds = array<i64: 1, 256>}]} {
    %c0 = arith.constant 0 : index
    %c0_0 = arith.constant 0 : index
    %0 = vector.load %arg1[%c0, %c0_0] : memref<256x19xf32, #tpu.memory_space<vmem>>, vector<256x19xf32>
    %c0_1 = arith.constant 0 : index
    %c0_2 = arith.constant 0 : index
    %1 = vector.load %arg2[%c0_1, %c0_2] : memref<187x19xf32, #tpu.memory_space<vmem>>, vector<187x19xf32>
    %cst = arith.constant dense<0.000000e+00> : vector<187x256xf32>
    %2 = tpu.matmul %1, %0, %cst {dimension_numbers = #tpu.dot_dimension_numbers<[1], [1], [0], [0], [0, 0, 1, 0], [], []>} : vector<187x19xf32>, vector<256x19xf32>, vector<187x256xf32> -> vector<187x256xf32>
    %c0_3 = arith.constant 0 : index
    %c0_4 = arith.constant 0 : index
    %3 = vector.load %arg3[%c0_3, %c0_4] : memref<187x1xf32, #tpu.memory_space<vmem>>, vector<187x1xf32>
    %4 = vector.broadcast %3 : vector<187x1xf32> to vector<187x256xf32>
    %5 = arith.addf %2, %4 : vector<187x256xf32>
    %6 = vector.extract_strided_slice %5 {offsets = [184, 0], sizes = [3, 256], strides = [1, 1]} : vector<187x256xf32> to vector<3x256xf32>
    %7 = vector.extract_strided_slice %5 {offsets = [0, 0], sizes = [183, 256], strides = [1, 1]} : vector<187x256xf32> to vector<183x256xf32>
    %cst_5 = arith.constant 2.000000e+01 : f32
    %8 = vector.broadcast %cst_5 : f32 to vector<183x256xf32>
    %9 = arith.minimumf %7, %8 : vector<183x256xf32>
    %10 = math.exp %9 : vector<183x256xf32>
    %cst_6 = arith.constant 2.000000e+00 : f32
    %11 = vector.broadcast %cst_6 : f32 to vector<183x256xf32>
    %12 = arith.addf %10, %11 : vector<183x256xf32>
    %13 = arith.mulf %10, %12 : vector<183x256xf32>
    %14 = arith.mulf %7, %13 : vector<183x256xf32>
    %cst_7 = arith.constant 2.000000e+00 : f32
    %15 = vector.broadcast %cst_7 : f32 to vector<183x256xf32>
    %16 = arith.addf %13, %15 : vector<183x256xf32>
    %17 = tpu.reciprocal %16 : vector<183x256xf32> -> vector<183x256xf32>
    %18 = arith.mulf %14, %17 : vector<183x256xf32>
    %c0_8 = arith.constant 0 : index
    %c0_9 = arith.constant 0 : index
    %19 = vector.load %arg12[%c0_8, %c0_9] : memref<3x5xf32, #tpu.memory_space<vmem>>, vector<3x5xf32>
    %c0_10 = arith.constant 0 : index
    %c0_11 = arith.constant 0 : index
    %20 = vector.load %arg13[%c0_10, %c0_11] : memref<3x1xf32, #tpu.memory_space<vmem>>, vector<3x1xf32>
    %21 = vector.extract_strided_slice %18 {offsets = [0, 0], sizes = [3, 256], strides = [1, 1]} : vector<183x256xf32> to vector<3x256xf32>
    %22 = vector.extract_strided_slice %19 {offsets = [0, 4], sizes = [3, 1], strides = [1, 1]} : vector<3x5xf32> to vector<3x1xf32>
    %23 = vector.broadcast %22 : vector<3x1xf32> to vector<3x256xf32>
    %24 = arith.mulf %21, %23 : vector<3x256xf32>
    %25 = vector.broadcast %20 : vector<3x1xf32> to vector<3x256xf32>
    %26 = arith.addf %25, %24 : vector<3x256xf32>
    %c0_12 = arith.constant 0 : index
    %c0_13 = arith.constant 0 : index
    %27 = vector.load %arg4[%c0_12, %c0_13] : memref<87x183xf32, #tpu.memory_space<vmem>>, vector<87x183xf32>
    %cst_14 = arith.constant dense<0.000000e+00> : vector<87x256xf32>
    %28 = tpu.matmul %27, %18, %cst_14 {dimension_numbers = #tpu.dot_dimension_numbers<[1], [0], [0], [1], [0, 0, 1, 1], [], []>} : vector<87x183xf32>, vector<183x256xf32>, vector<87x256xf32> -> vector<87x256xf32>
    %c0_15 = arith.constant 0 : index
    %c0_16 = arith.constant 0 : index
    %29 = vector.load %arg5[%c0_15, %c0_16] : memref<87x1xf32, #tpu.memory_space<vmem>>, vector<87x1xf32>
    %30 = vector.broadcast %29 : vector<87x1xf32> to vector<87x256xf32>
    %31 = arith.addf %28, %30 : vector<87x256xf32>
    %cst_17 = arith.constant 2.000000e+01 : f32
    %32 = vector.broadcast %cst_17 : f32 to vector<87x256xf32>
    %33 = arith.minimumf %31, %32 : vector<87x256xf32>
    %34 = math.exp %33 : vector<87x256xf32>
    %cst_18 = arith.constant 2.000000e+00 : f32
    %35 = vector.broadcast %cst_18 : f32 to vector<87x256xf32>
    %36 = arith.addf %34, %35 : vector<87x256xf32>
    %37 = arith.mulf %34, %36 : vector<87x256xf32>
    %38 = arith.mulf %31, %37 : vector<87x256xf32>
    %cst_19 = arith.constant 2.000000e+00 : f32
    %39 = vector.broadcast %cst_19 : f32 to vector<87x256xf32>
    %40 = arith.addf %37, %39 : vector<87x256xf32>
    %41 = tpu.reciprocal %40 : vector<87x256xf32> -> vector<87x256xf32>
    %42 = arith.mulf %38, %41 : vector<87x256xf32>
    %43 = vector.extract_strided_slice %42 {offsets = [0, 0], sizes = [3, 256], strides = [1, 1]} : vector<87x256xf32> to vector<3x256xf32>
    %44 = vector.extract_strided_slice %19 {offsets = [0, 3], sizes = [3, 1], strides = [1, 1]} : vector<3x5xf32> to vector<3x1xf32>
    %45 = vector.broadcast %44 : vector<3x1xf32> to vector<3x256xf32>
    %46 = arith.mulf %43, %45 : vector<3x256xf32>
    %47 = arith.addf %26, %46 : vector<3x256xf32>
    %c0_20 = arith.constant 0 : index
    %c0_21 = arith.constant 0 : index
    %48 = vector.load %arg6[%c0_20, %c0_21] : memref<39x87xf32, #tpu.memory_space<vmem>>, vector<39x87xf32>
    %cst_22 = arith.constant dense<0.000000e+00> : vector<39x256xf32>
    %49 = tpu.matmul %48, %42, %cst_22 {dimension_numbers = #tpu.dot_dimension_numbers<[1], [0], [0], [1], [0, 0, 1, 1], [], []>} : vector<39x87xf32>, vector<87x256xf32>, vector<39x256xf32> -> vector<39x256xf32>
    %c0_23 = arith.constant 0 : index
    %c0_24 = arith.constant 0 : index
    %50 = vector.load %arg7[%c0_23, %c0_24] : memref<39x1xf32, #tpu.memory_space<vmem>>, vector<39x1xf32>
    %51 = vector.broadcast %50 : vector<39x1xf32> to vector<39x256xf32>
    %52 = arith.addf %49, %51 : vector<39x256xf32>
    %cst_25 = arith.constant 2.000000e+01 : f32
    %53 = vector.broadcast %cst_25 : f32 to vector<39x256xf32>
    %54 = arith.minimumf %52, %53 : vector<39x256xf32>
    %55 = math.exp %54 : vector<39x256xf32>
    %cst_26 = arith.constant 2.000000e+00 : f32
    %56 = vector.broadcast %cst_26 : f32 to vector<39x256xf32>
    %57 = arith.addf %55, %56 : vector<39x256xf32>
    %58 = arith.mulf %55, %57 : vector<39x256xf32>
    %59 = arith.mulf %52, %58 : vector<39x256xf32>
    %cst_27 = arith.constant 2.000000e+00 : f32
    %60 = vector.broadcast %cst_27 : f32 to vector<39x256xf32>
    %61 = arith.addf %58, %60 : vector<39x256xf32>
    %62 = tpu.reciprocal %61 : vector<39x256xf32> -> vector<39x256xf32>
    %63 = arith.mulf %59, %62 : vector<39x256xf32>
    %64 = vector.extract_strided_slice %63 {offsets = [0, 0], sizes = [3, 256], strides = [1, 1]} : vector<39x256xf32> to vector<3x256xf32>
    %65 = vector.extract_strided_slice %19 {offsets = [0, 2], sizes = [3, 1], strides = [1, 1]} : vector<3x5xf32> to vector<3x1xf32>
    %66 = vector.broadcast %65 : vector<3x1xf32> to vector<3x256xf32>
    %67 = arith.mulf %64, %66 : vector<3x256xf32>
    %68 = arith.addf %47, %67 : vector<3x256xf32>
    %c0_28 = arith.constant 0 : index
    %c0_29 = arith.constant 0 : index
    %69 = vector.load %arg8[%c0_28, %c0_29] : memref<15x39xf32, #tpu.memory_space<vmem>>, vector<15x39xf32>
    %c0_30 = arith.constant 0 : index
    %c0_31 = arith.constant 0 : index
    %70 = vector.load %arg9[%c0_30, %c0_31] : memref<15x1xf32, #tpu.memory_space<vmem>>, vector<15x1xf32>
    %71 = vector.extract_strided_slice %69 {offsets = [0, 0], sizes = [15, 1], strides = [1, 1]} : vector<15x39xf32> to vector<15x1xf32>
    %72 = vector.extract_strided_slice %63 {offsets = [0, 0], sizes = [1, 256], strides = [1, 1]} : vector<39x256xf32> to vector<1x256xf32>
    %73 = vector.broadcast %71 : vector<15x1xf32> to vector<15x256xf32>
    %74 = vector.broadcast %72 : vector<1x256xf32> to vector<15x256xf32>
    %75 = arith.mulf %73, %74 : vector<15x256xf32>
    %76 = vector.broadcast %70 : vector<15x1xf32> to vector<15x256xf32>
    %77 = arith.addf %76, %75 : vector<15x256xf32>
    %78 = vector.extract_strided_slice %69 {offsets = [0, 1], sizes = [15, 1], strides = [1, 1]} : vector<15x39xf32> to vector<15x1xf32>
    %79 = vector.extract_strided_slice %63 {offsets = [1, 0], sizes = [1, 256], strides = [1, 1]} : vector<39x256xf32> to vector<1x256xf32>
    %80 = vector.broadcast %78 : vector<15x1xf32> to vector<15x256xf32>
    %81 = vector.broadcast %79 : vector<1x256xf32> to vector<15x256xf32>
    %82 = arith.mulf %80, %81 : vector<15x256xf32>
    %83 = arith.addf %77, %82 : vector<15x256xf32>
    %84 = vector.extract_strided_slice %69 {offsets = [0, 2], sizes = [15, 1], strides = [1, 1]} : vector<15x39xf32> to vector<15x1xf32>
    %85 = vector.extract_strided_slice %63 {offsets = [2, 0], sizes = [1, 256], strides = [1, 1]} : vector<39x256xf32> to vector<1x256xf32>
    %86 = vector.broadcast %84 : vector<15x1xf32> to vector<15x256xf32>
    %87 = vector.broadcast %85 : vector<1x256xf32> to vector<15x256xf32>
    %88 = arith.mulf %86, %87 : vector<15x256xf32>
    %89 = arith.addf %83, %88 : vector<15x256xf32>
    %90 = vector.extract_strided_slice %69 {offsets = [0, 3], sizes = [15, 1], strides = [1, 1]} : vector<15x39xf32> to vector<15x1xf32>
    %91 = vector.extract_strided_slice %63 {offsets = [3, 0], sizes = [1, 256], strides = [1, 1]} : vector<39x256xf32> to vector<1x256xf32>
    %92 = vector.broadcast %90 : vector<15x1xf32> to vector<15x256xf32>
    %93 = vector.broadcast %91 : vector<1x256xf32> to vector<15x256xf32>
    %94 = arith.mulf %92, %93 : vector<15x256xf32>
    %95 = arith.addf %89, %94 : vector<15x256xf32>
    %96 = vector.extract_strided_slice %69 {offsets = [0, 4], sizes = [15, 1], strides = [1, 1]} : vector<15x39xf32> to vector<15x1xf32>
    %97 = vector.extract_strided_slice %63 {offsets = [4, 0], sizes = [1, 256], strides = [1, 1]} : vector<39x256xf32> to vector<1x256xf32>
    %98 = vector.broadcast %96 : vector<15x1xf32> to vector<15x256xf32>
    %99 = vector.broadcast %97 : vector<1x256xf32> to vector<15x256xf32>
    %100 = arith.mulf %98, %99 : vector<15x256xf32>
    %101 = arith.addf %95, %100 : vector<15x256xf32>
    %102 = vector.extract_strided_slice %69 {offsets = [0, 5], sizes = [15, 1], strides = [1, 1]} : vector<15x39xf32> to vector<15x1xf32>
    %103 = vector.extract_strided_slice %63 {offsets = [5, 0], sizes = [1, 256], strides = [1, 1]} : vector<39x256xf32> to vector<1x256xf32>
    %104 = vector.broadcast %102 : vector<15x1xf32> to vector<15x256xf32>
    %105 = vector.broadcast %103 : vector<1x256xf32> to vector<15x256xf32>
    %106 = arith.mulf %104, %105 : vector<15x256xf32>
    %107 = arith.addf %101, %106 : vector<15x256xf32>
    %108 = vector.extract_strided_slice %69 {offsets = [0, 6], sizes = [15, 1], strides = [1, 1]} : vector<15x39xf32> to vector<15x1xf32>
    %109 = vector.extract_strided_slice %63 {offsets = [6, 0], sizes = [1, 256], strides = [1, 1]} : vector<39x256xf32> to vector<1x256xf32>
    %110 = vector.broadcast %108 : vector<15x1xf32> to vector<15x256xf32>
    %111 = vector.broadcast %109 : vector<1x256xf32> to vector<15x256xf32>
    %112 = arith.mulf %110, %111 : vector<15x256xf32>
    %113 = arith.addf %107, %112 : vector<15x256xf32>
    %114 = vector.extract_strided_slice %69 {offsets = [0, 7], sizes = [15, 1], strides = [1, 1]} : vector<15x39xf32> to vector<15x1xf32>
    %115 = vector.extract_strided_slice %63 {offsets = [7, 0], sizes = [1, 256], strides = [1, 1]} : vector<39x256xf32> to vector<1x256xf32>
    %116 = vector.broadcast %114 : vector<15x1xf32> to vector<15x256xf32>
    %117 = vector.broadcast %115 : vector<1x256xf32> to vector<15x256xf32>
    %118 = arith.mulf %116, %117 : vector<15x256xf32>
    %119 = arith.addf %113, %118 : vector<15x256xf32>
    %120 = vector.extract_strided_slice %69 {offsets = [0, 8], sizes = [15, 1], strides = [1, 1]} : vector<15x39xf32> to vector<15x1xf32>
    %121 = vector.extract_strided_slice %63 {offsets = [8, 0], sizes = [1, 256], strides = [1, 1]} : vector<39x256xf32> to vector<1x256xf32>
    %122 = vector.broadcast %120 : vector<15x1xf32> to vector<15x256xf32>
    %123 = vector.broadcast %121 : vector<1x256xf32> to vector<15x256xf32>
    %124 = arith.mulf %122, %123 : vector<15x256xf32>
    %125 = arith.addf %119, %124 : vector<15x256xf32>
    %126 = vector.extract_strided_slice %69 {offsets = [0, 9], sizes = [15, 1], strides = [1, 1]} : vector<15x39xf32> to vector<15x1xf32>
    %127 = vector.extract_strided_slice %63 {offsets = [9, 0], sizes = [1, 256], strides = [1, 1]} : vector<39x256xf32> to vector<1x256xf32>
    %128 = vector.broadcast %126 : vector<15x1xf32> to vector<15x256xf32>
    %129 = vector.broadcast %127 : vector<1x256xf32> to vector<15x256xf32>
    %130 = arith.mulf %128, %129 : vector<15x256xf32>
    %131 = arith.addf %125, %130 : vector<15x256xf32>
    %132 = vector.extract_strided_slice %69 {offsets = [0, 10], sizes = [15, 1], strides = [1, 1]} : vector<15x39xf32> to vector<15x1xf32>
    %133 = vector.extract_strided_slice %63 {offsets = [10, 0], sizes = [1, 256], strides = [1, 1]} : vector<39x256xf32> to vector<1x256xf32>
    %134 = vector.broadcast %132 : vector<15x1xf32> to vector<15x256xf32>
    %135 = vector.broadcast %133 : vector<1x256xf32> to vector<15x256xf32>
    %136 = arith.mulf %134, %135 : vector<15x256xf32>
    %137 = arith.addf %131, %136 : vector<15x256xf32>
    %138 = vector.extract_strided_slice %69 {offsets = [0, 11], sizes = [15, 1], strides = [1, 1]} : vector<15x39xf32> to vector<15x1xf32>
    %139 = vector.extract_strided_slice %63 {offsets = [11, 0], sizes = [1, 256], strides = [1, 1]} : vector<39x256xf32> to vector<1x256xf32>
    %140 = vector.broadcast %138 : vector<15x1xf32> to vector<15x256xf32>
    %141 = vector.broadcast %139 : vector<1x256xf32> to vector<15x256xf32>
    %142 = arith.mulf %140, %141 : vector<15x256xf32>
    %143 = arith.addf %137, %142 : vector<15x256xf32>
    %144 = vector.extract_strided_slice %69 {offsets = [0, 12], sizes = [15, 1], strides = [1, 1]} : vector<15x39xf32> to vector<15x1xf32>
    %145 = vector.extract_strided_slice %63 {offsets = [12, 0], sizes = [1, 256], strides = [1, 1]} : vector<39x256xf32> to vector<1x256xf32>
    %146 = vector.broadcast %144 : vector<15x1xf32> to vector<15x256xf32>
    %147 = vector.broadcast %145 : vector<1x256xf32> to vector<15x256xf32>
    %148 = arith.mulf %146, %147 : vector<15x256xf32>
    %149 = arith.addf %143, %148 : vector<15x256xf32>
    %150 = vector.extract_strided_slice %69 {offsets = [0, 13], sizes = [15, 1], strides = [1, 1]} : vector<15x39xf32> to vector<15x1xf32>
    %151 = vector.extract_strided_slice %63 {offsets = [13, 0], sizes = [1, 256], strides = [1, 1]} : vector<39x256xf32> to vector<1x256xf32>
    %152 = vector.broadcast %150 : vector<15x1xf32> to vector<15x256xf32>
    %153 = vector.broadcast %151 : vector<1x256xf32> to vector<15x256xf32>
    %154 = arith.mulf %152, %153 : vector<15x256xf32>
    %155 = arith.addf %149, %154 : vector<15x256xf32>
    %156 = vector.extract_strided_slice %69 {offsets = [0, 14], sizes = [15, 1], strides = [1, 1]} : vector<15x39xf32> to vector<15x1xf32>
    %157 = vector.extract_strided_slice %63 {offsets = [14, 0], sizes = [1, 256], strides = [1, 1]} : vector<39x256xf32> to vector<1x256xf32>
    %158 = vector.broadcast %156 : vector<15x1xf32> to vector<15x256xf32>
    %159 = vector.broadcast %157 : vector<1x256xf32> to vector<15x256xf32>
    %160 = arith.mulf %158, %159 : vector<15x256xf32>
    %161 = arith.addf %155, %160 : vector<15x256xf32>
    %162 = vector.extract_strided_slice %69 {offsets = [0, 15], sizes = [15, 1], strides = [1, 1]} : vector<15x39xf32> to vector<15x1xf32>
    %163 = vector.extract_strided_slice %63 {offsets = [15, 0], sizes = [1, 256], strides = [1, 1]} : vector<39x256xf32> to vector<1x256xf32>
    %164 = vector.broadcast %162 : vector<15x1xf32> to vector<15x256xf32>
    %165 = vector.broadcast %163 : vector<1x256xf32> to vector<15x256xf32>
    %166 = arith.mulf %164, %165 : vector<15x256xf32>
    %167 = arith.addf %161, %166 : vector<15x256xf32>
    %168 = vector.extract_strided_slice %69 {offsets = [0, 16], sizes = [15, 1], strides = [1, 1]} : vector<15x39xf32> to vector<15x1xf32>
    %169 = vector.extract_strided_slice %63 {offsets = [16, 0], sizes = [1, 256], strides = [1, 1]} : vector<39x256xf32> to vector<1x256xf32>
    %170 = vector.broadcast %168 : vector<15x1xf32> to vector<15x256xf32>
    %171 = vector.broadcast %169 : vector<1x256xf32> to vector<15x256xf32>
    %172 = arith.mulf %170, %171 : vector<15x256xf32>
    %173 = arith.addf %167, %172 : vector<15x256xf32>
    %174 = vector.extract_strided_slice %69 {offsets = [0, 17], sizes = [15, 1], strides = [1, 1]} : vector<15x39xf32> to vector<15x1xf32>
    %175 = vector.extract_strided_slice %63 {offsets = [17, 0], sizes = [1, 256], strides = [1, 1]} : vector<39x256xf32> to vector<1x256xf32>
    %176 = vector.broadcast %174 : vector<15x1xf32> to vector<15x256xf32>
    %177 = vector.broadcast %175 : vector<1x256xf32> to vector<15x256xf32>
    %178 = arith.mulf %176, %177 : vector<15x256xf32>
    %179 = arith.addf %173, %178 : vector<15x256xf32>
    %180 = vector.extract_strided_slice %69 {offsets = [0, 18], sizes = [15, 1], strides = [1, 1]} : vector<15x39xf32> to vector<15x1xf32>
    %181 = vector.extract_strided_slice %63 {offsets = [18, 0], sizes = [1, 256], strides = [1, 1]} : vector<39x256xf32> to vector<1x256xf32>
    %182 = vector.broadcast %180 : vector<15x1xf32> to vector<15x256xf32>
    %183 = vector.broadcast %181 : vector<1x256xf32> to vector<15x256xf32>
    %184 = arith.mulf %182, %183 : vector<15x256xf32>
    %185 = arith.addf %179, %184 : vector<15x256xf32>
    %186 = vector.extract_strided_slice %69 {offsets = [0, 19], sizes = [15, 1], strides = [1, 1]} : vector<15x39xf32> to vector<15x1xf32>
    %187 = vector.extract_strided_slice %63 {offsets = [19, 0], sizes = [1, 256], strides = [1, 1]} : vector<39x256xf32> to vector<1x256xf32>
    %188 = vector.broadcast %186 : vector<15x1xf32> to vector<15x256xf32>
    %189 = vector.broadcast %187 : vector<1x256xf32> to vector<15x256xf32>
    %190 = arith.mulf %188, %189 : vector<15x256xf32>
    %191 = arith.addf %185, %190 : vector<15x256xf32>
    %192 = vector.extract_strided_slice %69 {offsets = [0, 20], sizes = [15, 1], strides = [1, 1]} : vector<15x39xf32> to vector<15x1xf32>
    %193 = vector.extract_strided_slice %63 {offsets = [20, 0], sizes = [1, 256], strides = [1, 1]} : vector<39x256xf32> to vector<1x256xf32>
    %194 = vector.broadcast %192 : vector<15x1xf32> to vector<15x256xf32>
    %195 = vector.broadcast %193 : vector<1x256xf32> to vector<15x256xf32>
    %196 = arith.mulf %194, %195 : vector<15x256xf32>
    %197 = arith.addf %191, %196 : vector<15x256xf32>
    %198 = vector.extract_strided_slice %69 {offsets = [0, 21], sizes = [15, 1], strides = [1, 1]} : vector<15x39xf32> to vector<15x1xf32>
    %199 = vector.extract_strided_slice %63 {offsets = [21, 0], sizes = [1, 256], strides = [1, 1]} : vector<39x256xf32> to vector<1x256xf32>
    %200 = vector.broadcast %198 : vector<15x1xf32> to vector<15x256xf32>
    %201 = vector.broadcast %199 : vector<1x256xf32> to vector<15x256xf32>
    %202 = arith.mulf %200, %201 : vector<15x256xf32>
    %203 = arith.addf %197, %202 : vector<15x256xf32>
    %204 = vector.extract_strided_slice %69 {offsets = [0, 22], sizes = [15, 1], strides = [1, 1]} : vector<15x39xf32> to vector<15x1xf32>
    %205 = vector.extract_strided_slice %63 {offsets = [22, 0], sizes = [1, 256], strides = [1, 1]} : vector<39x256xf32> to vector<1x256xf32>
    %206 = vector.broadcast %204 : vector<15x1xf32> to vector<15x256xf32>
    %207 = vector.broadcast %205 : vector<1x256xf32> to vector<15x256xf32>
    %208 = arith.mulf %206, %207 : vector<15x256xf32>
    %209 = arith.addf %203, %208 : vector<15x256xf32>
    %210 = vector.extract_strided_slice %69 {offsets = [0, 23], sizes = [15, 1], strides = [1, 1]} : vector<15x39xf32> to vector<15x1xf32>
    %211 = vector.extract_strided_slice %63 {offsets = [23, 0], sizes = [1, 256], strides = [1, 1]} : vector<39x256xf32> to vector<1x256xf32>
    %212 = vector.broadcast %210 : vector<15x1xf32> to vector<15x256xf32>
    %213 = vector.broadcast %211 : vector<1x256xf32> to vector<15x256xf32>
    %214 = arith.mulf %212, %213 : vector<15x256xf32>
    %215 = arith.addf %209, %214 : vector<15x256xf32>
    %216 = vector.extract_strided_slice %69 {offsets = [0, 24], sizes = [15, 1], strides = [1, 1]} : vector<15x39xf32> to vector<15x1xf32>
    %217 = vector.extract_strided_slice %63 {offsets = [24, 0], sizes = [1, 256], strides = [1, 1]} : vector<39x256xf32> to vector<1x256xf32>
    %218 = vector.broadcast %216 : vector<15x1xf32> to vector<15x256xf32>
    %219 = vector.broadcast %217 : vector<1x256xf32> to vector<15x256xf32>
    %220 = arith.mulf %218, %219 : vector<15x256xf32>
    %221 = arith.addf %215, %220 : vector<15x256xf32>
    %222 = vector.extract_strided_slice %69 {offsets = [0, 25], sizes = [15, 1], strides = [1, 1]} : vector<15x39xf32> to vector<15x1xf32>
    %223 = vector.extract_strided_slice %63 {offsets = [25, 0], sizes = [1, 256], strides = [1, 1]} : vector<39x256xf32> to vector<1x256xf32>
    %224 = vector.broadcast %222 : vector<15x1xf32> to vector<15x256xf32>
    %225 = vector.broadcast %223 : vector<1x256xf32> to vector<15x256xf32>
    %226 = arith.mulf %224, %225 : vector<15x256xf32>
    %227 = arith.addf %221, %226 : vector<15x256xf32>
    %228 = vector.extract_strided_slice %69 {offsets = [0, 26], sizes = [15, 1], strides = [1, 1]} : vector<15x39xf32> to vector<15x1xf32>
    %229 = vector.extract_strided_slice %63 {offsets = [26, 0], sizes = [1, 256], strides = [1, 1]} : vector<39x256xf32> to vector<1x256xf32>
    %230 = vector.broadcast %228 : vector<15x1xf32> to vector<15x256xf32>
    %231 = vector.broadcast %229 : vector<1x256xf32> to vector<15x256xf32>
    %232 = arith.mulf %230, %231 : vector<15x256xf32>
    %233 = arith.addf %227, %232 : vector<15x256xf32>
    %234 = vector.extract_strided_slice %69 {offsets = [0, 27], sizes = [15, 1], strides = [1, 1]} : vector<15x39xf32> to vector<15x1xf32>
    %235 = vector.extract_strided_slice %63 {offsets = [27, 0], sizes = [1, 256], strides = [1, 1]} : vector<39x256xf32> to vector<1x256xf32>
    %236 = vector.broadcast %234 : vector<15x1xf32> to vector<15x256xf32>
    %237 = vector.broadcast %235 : vector<1x256xf32> to vector<15x256xf32>
    %238 = arith.mulf %236, %237 : vector<15x256xf32>
    %239 = arith.addf %233, %238 : vector<15x256xf32>
    %240 = vector.extract_strided_slice %69 {offsets = [0, 28], sizes = [15, 1], strides = [1, 1]} : vector<15x39xf32> to vector<15x1xf32>
    %241 = vector.extract_strided_slice %63 {offsets = [28, 0], sizes = [1, 256], strides = [1, 1]} : vector<39x256xf32> to vector<1x256xf32>
    %242 = vector.broadcast %240 : vector<15x1xf32> to vector<15x256xf32>
    %243 = vector.broadcast %241 : vector<1x256xf32> to vector<15x256xf32>
    %244 = arith.mulf %242, %243 : vector<15x256xf32>
    %245 = arith.addf %239, %244 : vector<15x256xf32>
    %246 = vector.extract_strided_slice %69 {offsets = [0, 29], sizes = [15, 1], strides = [1, 1]} : vector<15x39xf32> to vector<15x1xf32>
    %247 = vector.extract_strided_slice %63 {offsets = [29, 0], sizes = [1, 256], strides = [1, 1]} : vector<39x256xf32> to vector<1x256xf32>
    %248 = vector.broadcast %246 : vector<15x1xf32> to vector<15x256xf32>
    %249 = vector.broadcast %247 : vector<1x256xf32> to vector<15x256xf32>
    %250 = arith.mulf %248, %249 : vector<15x256xf32>
    %251 = arith.addf %245, %250 : vector<15x256xf32>
    %252 = vector.extract_strided_slice %69 {offsets = [0, 30], sizes = [15, 1], strides = [1, 1]} : vector<15x39xf32> to vector<15x1xf32>
    %253 = vector.extract_strided_slice %63 {offsets = [30, 0], sizes = [1, 256], strides = [1, 1]} : vector<39x256xf32> to vector<1x256xf32>
    %254 = vector.broadcast %252 : vector<15x1xf32> to vector<15x256xf32>
    %255 = vector.broadcast %253 : vector<1x256xf32> to vector<15x256xf32>
    %256 = arith.mulf %254, %255 : vector<15x256xf32>
    %257 = arith.addf %251, %256 : vector<15x256xf32>
    %258 = vector.extract_strided_slice %69 {offsets = [0, 31], sizes = [15, 1], strides = [1, 1]} : vector<15x39xf32> to vector<15x1xf32>
    %259 = vector.extract_strided_slice %63 {offsets = [31, 0], sizes = [1, 256], strides = [1, 1]} : vector<39x256xf32> to vector<1x256xf32>
    %260 = vector.broadcast %258 : vector<15x1xf32> to vector<15x256xf32>
    %261 = vector.broadcast %259 : vector<1x256xf32> to vector<15x256xf32>
    %262 = arith.mulf %260, %261 : vector<15x256xf32>
    %263 = arith.addf %257, %262 : vector<15x256xf32>
    %264 = vector.extract_strided_slice %69 {offsets = [0, 32], sizes = [15, 1], strides = [1, 1]} : vector<15x39xf32> to vector<15x1xf32>
    %265 = vector.extract_strided_slice %63 {offsets = [32, 0], sizes = [1, 256], strides = [1, 1]} : vector<39x256xf32> to vector<1x256xf32>
    %266 = vector.broadcast %264 : vector<15x1xf32> to vector<15x256xf32>
    %267 = vector.broadcast %265 : vector<1x256xf32> to vector<15x256xf32>
    %268 = arith.mulf %266, %267 : vector<15x256xf32>
    %269 = arith.addf %263, %268 : vector<15x256xf32>
    %270 = vector.extract_strided_slice %69 {offsets = [0, 33], sizes = [15, 1], strides = [1, 1]} : vector<15x39xf32> to vector<15x1xf32>
    %271 = vector.extract_strided_slice %63 {offsets = [33, 0], sizes = [1, 256], strides = [1, 1]} : vector<39x256xf32> to vector<1x256xf32>
    %272 = vector.broadcast %270 : vector<15x1xf32> to vector<15x256xf32>
    %273 = vector.broadcast %271 : vector<1x256xf32> to vector<15x256xf32>
    %274 = arith.mulf %272, %273 : vector<15x256xf32>
    %275 = arith.addf %269, %274 : vector<15x256xf32>
    %276 = vector.extract_strided_slice %69 {offsets = [0, 34], sizes = [15, 1], strides = [1, 1]} : vector<15x39xf32> to vector<15x1xf32>
    %277 = vector.extract_strided_slice %63 {offsets = [34, 0], sizes = [1, 256], strides = [1, 1]} : vector<39x256xf32> to vector<1x256xf32>
    %278 = vector.broadcast %276 : vector<15x1xf32> to vector<15x256xf32>
    %279 = vector.broadcast %277 : vector<1x256xf32> to vector<15x256xf32>
    %280 = arith.mulf %278, %279 : vector<15x256xf32>
    %281 = arith.addf %275, %280 : vector<15x256xf32>
    %282 = vector.extract_strided_slice %69 {offsets = [0, 35], sizes = [15, 1], strides = [1, 1]} : vector<15x39xf32> to vector<15x1xf32>
    %283 = vector.extract_strided_slice %63 {offsets = [35, 0], sizes = [1, 256], strides = [1, 1]} : vector<39x256xf32> to vector<1x256xf32>
    %284 = vector.broadcast %282 : vector<15x1xf32> to vector<15x256xf32>
    %285 = vector.broadcast %283 : vector<1x256xf32> to vector<15x256xf32>
    %286 = arith.mulf %284, %285 : vector<15x256xf32>
    %287 = arith.addf %281, %286 : vector<15x256xf32>
    %288 = vector.extract_strided_slice %69 {offsets = [0, 36], sizes = [15, 1], strides = [1, 1]} : vector<15x39xf32> to vector<15x1xf32>
    %289 = vector.extract_strided_slice %63 {offsets = [36, 0], sizes = [1, 256], strides = [1, 1]} : vector<39x256xf32> to vector<1x256xf32>
    %290 = vector.broadcast %288 : vector<15x1xf32> to vector<15x256xf32>
    %291 = vector.broadcast %289 : vector<1x256xf32> to vector<15x256xf32>
    %292 = arith.mulf %290, %291 : vector<15x256xf32>
    %293 = arith.addf %287, %292 : vector<15x256xf32>
    %294 = vector.extract_strided_slice %69 {offsets = [0, 37], sizes = [15, 1], strides = [1, 1]} : vector<15x39xf32> to vector<15x1xf32>
    %295 = vector.extract_strided_slice %63 {offsets = [37, 0], sizes = [1, 256], strides = [1, 1]} : vector<39x256xf32> to vector<1x256xf32>
    %296 = vector.broadcast %294 : vector<15x1xf32> to vector<15x256xf32>
    %297 = vector.broadcast %295 : vector<1x256xf32> to vector<15x256xf32>
    %298 = arith.mulf %296, %297 : vector<15x256xf32>
    %299 = arith.addf %293, %298 : vector<15x256xf32>
    %300 = vector.extract_strided_slice %69 {offsets = [0, 38], sizes = [15, 1], strides = [1, 1]} : vector<15x39xf32> to vector<15x1xf32>
    %301 = vector.extract_strided_slice %63 {offsets = [38, 0], sizes = [1, 256], strides = [1, 1]} : vector<39x256xf32> to vector<1x256xf32>
    %302 = vector.broadcast %300 : vector<15x1xf32> to vector<15x256xf32>
    %303 = vector.broadcast %301 : vector<1x256xf32> to vector<15x256xf32>
    %304 = arith.mulf %302, %303 : vector<15x256xf32>
    %305 = arith.addf %299, %304 : vector<15x256xf32>
    %cst_32 = arith.constant 2.000000e+01 : f32
    %306 = vector.broadcast %cst_32 : f32 to vector<15x256xf32>
    %307 = arith.minimumf %305, %306 : vector<15x256xf32>
    %308 = math.exp %307 : vector<15x256xf32>
    %cst_33 = arith.constant 2.000000e+00 : f32
    %309 = vector.broadcast %cst_33 : f32 to vector<15x256xf32>
    %310 = arith.addf %308, %309 : vector<15x256xf32>
    %311 = arith.mulf %308, %310 : vector<15x256xf32>
    %312 = arith.mulf %305, %311 : vector<15x256xf32>
    %cst_34 = arith.constant 2.000000e+00 : f32
    %313 = vector.broadcast %cst_34 : f32 to vector<15x256xf32>
    %314 = arith.addf %311, %313 : vector<15x256xf32>
    %315 = tpu.reciprocal %314 : vector<15x256xf32> -> vector<15x256xf32>
    %316 = arith.mulf %312, %315 : vector<15x256xf32>
    %317 = vector.extract_strided_slice %316 {offsets = [0, 0], sizes = [3, 256], strides = [1, 1]} : vector<15x256xf32> to vector<3x256xf32>
    %318 = vector.extract_strided_slice %19 {offsets = [0, 1], sizes = [3, 1], strides = [1, 1]} : vector<3x5xf32> to vector<3x1xf32>
    %319 = vector.broadcast %318 : vector<3x1xf32> to vector<3x256xf32>
    %320 = arith.mulf %317, %319 : vector<3x256xf32>
    %321 = arith.addf %68, %320 : vector<3x256xf32>
    %c0_35 = arith.constant 0 : index
    %c0_36 = arith.constant 0 : index
    %322 = vector.load %arg10[%c0_35, %c0_36] : memref<3x15xf32, #tpu.memory_space<vmem>>, vector<3x15xf32>
    %c0_37 = arith.constant 0 : index
    %c0_38 = arith.constant 0 : index
    %323 = vector.load %arg11[%c0_37, %c0_38] : memref<3x1xf32, #tpu.memory_space<vmem>>, vector<3x1xf32>
    %324 = vector.extract_strided_slice %322 {offsets = [0, 0], sizes = [3, 1], strides = [1, 1]} : vector<3x15xf32> to vector<3x1xf32>
    %325 = vector.extract_strided_slice %316 {offsets = [0, 0], sizes = [1, 256], strides = [1, 1]} : vector<15x256xf32> to vector<1x256xf32>
    %326 = vector.broadcast %324 : vector<3x1xf32> to vector<3x256xf32>
    %327 = vector.broadcast %325 : vector<1x256xf32> to vector<3x256xf32>
    %328 = arith.mulf %326, %327 : vector<3x256xf32>
    %329 = vector.broadcast %323 : vector<3x1xf32> to vector<3x256xf32>
    %330 = arith.addf %329, %328 : vector<3x256xf32>
    %331 = vector.extract_strided_slice %322 {offsets = [0, 1], sizes = [3, 1], strides = [1, 1]} : vector<3x15xf32> to vector<3x1xf32>
    %332 = vector.extract_strided_slice %316 {offsets = [1, 0], sizes = [1, 256], strides = [1, 1]} : vector<15x256xf32> to vector<1x256xf32>
    %333 = vector.broadcast %331 : vector<3x1xf32> to vector<3x256xf32>
    %334 = vector.broadcast %332 : vector<1x256xf32> to vector<3x256xf32>
    %335 = arith.mulf %333, %334 : vector<3x256xf32>
    %336 = arith.addf %330, %335 : vector<3x256xf32>
    %337 = vector.extract_strided_slice %322 {offsets = [0, 2], sizes = [3, 1], strides = [1, 1]} : vector<3x15xf32> to vector<3x1xf32>
    %338 = vector.extract_strided_slice %316 {offsets = [2, 0], sizes = [1, 256], strides = [1, 1]} : vector<15x256xf32> to vector<1x256xf32>
    %339 = vector.broadcast %337 : vector<3x1xf32> to vector<3x256xf32>
    %340 = vector.broadcast %338 : vector<1x256xf32> to vector<3x256xf32>
    %341 = arith.mulf %339, %340 : vector<3x256xf32>
    %342 = arith.addf %336, %341 : vector<3x256xf32>
    %343 = vector.extract_strided_slice %322 {offsets = [0, 3], sizes = [3, 1], strides = [1, 1]} : vector<3x15xf32> to vector<3x1xf32>
    %344 = vector.extract_strided_slice %316 {offsets = [3, 0], sizes = [1, 256], strides = [1, 1]} : vector<15x256xf32> to vector<1x256xf32>
    %345 = vector.broadcast %343 : vector<3x1xf32> to vector<3x256xf32>
    %346 = vector.broadcast %344 : vector<1x256xf32> to vector<3x256xf32>
    %347 = arith.mulf %345, %346 : vector<3x256xf32>
    %348 = arith.addf %342, %347 : vector<3x256xf32>
    %349 = vector.extract_strided_slice %322 {offsets = [0, 4], sizes = [3, 1], strides = [1, 1]} : vector<3x15xf32> to vector<3x1xf32>
    %350 = vector.extract_strided_slice %316 {offsets = [4, 0], sizes = [1, 256], strides = [1, 1]} : vector<15x256xf32> to vector<1x256xf32>
    %351 = vector.broadcast %349 : vector<3x1xf32> to vector<3x256xf32>
    %352 = vector.broadcast %350 : vector<1x256xf32> to vector<3x256xf32>
    %353 = arith.mulf %351, %352 : vector<3x256xf32>
    %354 = arith.addf %348, %353 : vector<3x256xf32>
    %355 = vector.extract_strided_slice %322 {offsets = [0, 5], sizes = [3, 1], strides = [1, 1]} : vector<3x15xf32> to vector<3x1xf32>
    %356 = vector.extract_strided_slice %316 {offsets = [5, 0], sizes = [1, 256], strides = [1, 1]} : vector<15x256xf32> to vector<1x256xf32>
    %357 = vector.broadcast %355 : vector<3x1xf32> to vector<3x256xf32>
    %358 = vector.broadcast %356 : vector<1x256xf32> to vector<3x256xf32>
    %359 = arith.mulf %357, %358 : vector<3x256xf32>
    %360 = arith.addf %354, %359 : vector<3x256xf32>
    %361 = vector.extract_strided_slice %322 {offsets = [0, 6], sizes = [3, 1], strides = [1, 1]} : vector<3x15xf32> to vector<3x1xf32>
    %362 = vector.extract_strided_slice %316 {offsets = [6, 0], sizes = [1, 256], strides = [1, 1]} : vector<15x256xf32> to vector<1x256xf32>
    %363 = vector.broadcast %361 : vector<3x1xf32> to vector<3x256xf32>
    %364 = vector.broadcast %362 : vector<1x256xf32> to vector<3x256xf32>
    %365 = arith.mulf %363, %364 : vector<3x256xf32>
    %366 = arith.addf %360, %365 : vector<3x256xf32>
    %367 = vector.extract_strided_slice %322 {offsets = [0, 7], sizes = [3, 1], strides = [1, 1]} : vector<3x15xf32> to vector<3x1xf32>
    %368 = vector.extract_strided_slice %316 {offsets = [7, 0], sizes = [1, 256], strides = [1, 1]} : vector<15x256xf32> to vector<1x256xf32>
    %369 = vector.broadcast %367 : vector<3x1xf32> to vector<3x256xf32>
    %370 = vector.broadcast %368 : vector<1x256xf32> to vector<3x256xf32>
    %371 = arith.mulf %369, %370 : vector<3x256xf32>
    %372 = arith.addf %366, %371 : vector<3x256xf32>
    %373 = vector.extract_strided_slice %322 {offsets = [0, 8], sizes = [3, 1], strides = [1, 1]} : vector<3x15xf32> to vector<3x1xf32>
    %374 = vector.extract_strided_slice %316 {offsets = [8, 0], sizes = [1, 256], strides = [1, 1]} : vector<15x256xf32> to vector<1x256xf32>
    %375 = vector.broadcast %373 : vector<3x1xf32> to vector<3x256xf32>
    %376 = vector.broadcast %374 : vector<1x256xf32> to vector<3x256xf32>
    %377 = arith.mulf %375, %376 : vector<3x256xf32>
    %378 = arith.addf %372, %377 : vector<3x256xf32>
    %379 = vector.extract_strided_slice %322 {offsets = [0, 9], sizes = [3, 1], strides = [1, 1]} : vector<3x15xf32> to vector<3x1xf32>
    %380 = vector.extract_strided_slice %316 {offsets = [9, 0], sizes = [1, 256], strides = [1, 1]} : vector<15x256xf32> to vector<1x256xf32>
    %381 = vector.broadcast %379 : vector<3x1xf32> to vector<3x256xf32>
    %382 = vector.broadcast %380 : vector<1x256xf32> to vector<3x256xf32>
    %383 = arith.mulf %381, %382 : vector<3x256xf32>
    %384 = arith.addf %378, %383 : vector<3x256xf32>
    %385 = vector.extract_strided_slice %322 {offsets = [0, 10], sizes = [3, 1], strides = [1, 1]} : vector<3x15xf32> to vector<3x1xf32>
    %386 = vector.extract_strided_slice %316 {offsets = [10, 0], sizes = [1, 256], strides = [1, 1]} : vector<15x256xf32> to vector<1x256xf32>
    %387 = vector.broadcast %385 : vector<3x1xf32> to vector<3x256xf32>
    %388 = vector.broadcast %386 : vector<1x256xf32> to vector<3x256xf32>
    %389 = arith.mulf %387, %388 : vector<3x256xf32>
    %390 = arith.addf %384, %389 : vector<3x256xf32>
    %391 = vector.extract_strided_slice %322 {offsets = [0, 11], sizes = [3, 1], strides = [1, 1]} : vector<3x15xf32> to vector<3x1xf32>
    %392 = vector.extract_strided_slice %316 {offsets = [11, 0], sizes = [1, 256], strides = [1, 1]} : vector<15x256xf32> to vector<1x256xf32>
    %393 = vector.broadcast %391 : vector<3x1xf32> to vector<3x256xf32>
    %394 = vector.broadcast %392 : vector<1x256xf32> to vector<3x256xf32>
    %395 = arith.mulf %393, %394 : vector<3x256xf32>
    %396 = arith.addf %390, %395 : vector<3x256xf32>
    %397 = vector.extract_strided_slice %322 {offsets = [0, 12], sizes = [3, 1], strides = [1, 1]} : vector<3x15xf32> to vector<3x1xf32>
    %398 = vector.extract_strided_slice %316 {offsets = [12, 0], sizes = [1, 256], strides = [1, 1]} : vector<15x256xf32> to vector<1x256xf32>
    %399 = vector.broadcast %397 : vector<3x1xf32> to vector<3x256xf32>
    %400 = vector.broadcast %398 : vector<1x256xf32> to vector<3x256xf32>
    %401 = arith.mulf %399, %400 : vector<3x256xf32>
    %402 = arith.addf %396, %401 : vector<3x256xf32>
    %403 = vector.extract_strided_slice %322 {offsets = [0, 13], sizes = [3, 1], strides = [1, 1]} : vector<3x15xf32> to vector<3x1xf32>
    %404 = vector.extract_strided_slice %316 {offsets = [13, 0], sizes = [1, 256], strides = [1, 1]} : vector<15x256xf32> to vector<1x256xf32>
    %405 = vector.broadcast %403 : vector<3x1xf32> to vector<3x256xf32>
    %406 = vector.broadcast %404 : vector<1x256xf32> to vector<3x256xf32>
    %407 = arith.mulf %405, %406 : vector<3x256xf32>
    %408 = arith.addf %402, %407 : vector<3x256xf32>
    %409 = vector.extract_strided_slice %322 {offsets = [0, 14], sizes = [3, 1], strides = [1, 1]} : vector<3x15xf32> to vector<3x1xf32>
    %410 = vector.extract_strided_slice %316 {offsets = [14, 0], sizes = [1, 256], strides = [1, 1]} : vector<15x256xf32> to vector<1x256xf32>
    %411 = vector.broadcast %409 : vector<3x1xf32> to vector<3x256xf32>
    %412 = vector.broadcast %410 : vector<1x256xf32> to vector<3x256xf32>
    %413 = arith.mulf %411, %412 : vector<3x256xf32>
    %414 = arith.addf %408, %413 : vector<3x256xf32>
    %cst_39 = arith.constant 2.000000e+01 : f32
    %415 = vector.broadcast %cst_39 : f32 to vector<3x256xf32>
    %416 = arith.minimumf %414, %415 : vector<3x256xf32>
    %417 = math.exp %416 : vector<3x256xf32>
    %cst_40 = arith.constant 2.000000e+00 : f32
    %418 = vector.broadcast %cst_40 : f32 to vector<3x256xf32>
    %419 = arith.addf %417, %418 : vector<3x256xf32>
    %420 = arith.mulf %417, %419 : vector<3x256xf32>
    %421 = arith.mulf %414, %420 : vector<3x256xf32>
    %cst_41 = arith.constant 2.000000e+00 : f32
    %422 = vector.broadcast %cst_41 : f32 to vector<3x256xf32>
    %423 = arith.addf %420, %422 : vector<3x256xf32>
    %424 = tpu.reciprocal %423 : vector<3x256xf32> -> vector<3x256xf32>
    %425 = arith.mulf %421, %424 : vector<3x256xf32>
    %426 = vector.extract_strided_slice %19 {offsets = [0, 0], sizes = [3, 1], strides = [1, 1]} : vector<3x5xf32> to vector<3x1xf32>
    %427 = vector.broadcast %426 : vector<3x1xf32> to vector<3x256xf32>
    %428 = arith.mulf %425, %427 : vector<3x256xf32>
    %429 = arith.addf %321, %428 : vector<3x256xf32>
    %cst_42 = arith.constant 2.000000e+01 : f32
    %430 = vector.broadcast %cst_42 : f32 to vector<3x256xf32>
    %431 = arith.minimumf %429, %430 : vector<3x256xf32>
    %432 = math.exp %431 : vector<3x256xf32>
    %cst_43 = arith.constant 2.000000e+00 : f32
    %433 = vector.broadcast %cst_43 : f32 to vector<3x256xf32>
    %434 = arith.addf %432, %433 : vector<3x256xf32>
    %435 = arith.mulf %432, %434 : vector<3x256xf32>
    %436 = arith.mulf %429, %435 : vector<3x256xf32>
    %cst_44 = arith.constant 2.000000e+00 : f32
    %437 = vector.broadcast %cst_44 : f32 to vector<3x256xf32>
    %438 = arith.addf %435, %437 : vector<3x256xf32>
    %439 = tpu.reciprocal %438 : vector<3x256xf32> -> vector<3x256xf32>
    %440 = arith.mulf %436, %439 : vector<3x256xf32>
    %441 = vector.extract_strided_slice %6 {offsets = [0, 0], sizes = [1, 256], strides = [1, 1]} : vector<3x256xf32> to vector<1x256xf32>
    %442 = vector.extract_strided_slice %6 {offsets = [1, 0], sizes = [1, 256], strides = [1, 1]} : vector<3x256xf32> to vector<1x256xf32>
    %443 = vector.extract_strided_slice %6 {offsets = [2, 0], sizes = [1, 256], strides = [1, 1]} : vector<3x256xf32> to vector<1x256xf32>
    %444 = arith.cmpf oge, %441, %442 : vector<1x256xf32>
    %445 = arith.cmpf oge, %441, %443 : vector<1x256xf32>
    %446 = arith.andi %444, %445 : vector<1x256xi1>
    %cst_45 = arith.constant dense<true> : vector<1x256xi1>
    %447 = arith.xori %446, %cst_45 : vector<1x256xi1>
    %448 = arith.cmpf oge, %442, %443 : vector<1x256xf32>
    %449 = arith.andi %447, %448 : vector<1x256xi1>
    %450 = vector.extract_strided_slice %440 {offsets = [0, 0], sizes = [1, 256], strides = [1, 1]} : vector<3x256xf32> to vector<1x256xf32>
    %451 = vector.extract_strided_slice %440 {offsets = [1, 0], sizes = [1, 256], strides = [1, 1]} : vector<3x256xf32> to vector<1x256xf32>
    %452 = vector.extract_strided_slice %440 {offsets = [2, 0], sizes = [1, 256], strides = [1, 1]} : vector<3x256xf32> to vector<1x256xf32>
    %453 = arith.select %449, %451, %452 : vector<1x256xi1>, vector<1x256xf32>
    %454 = arith.select %446, %450, %453 : vector<1x256xi1>, vector<1x256xf32>
    %c0_46 = arith.constant 0 : index
    %c0_47 = arith.constant 0 : index
    %455 = vector.load %arg14[%c0_46, %c0_47] : memref<1x256xf32, #tpu.memory_space<vmem>>, vector<1x256xf32>
    tpu.vector_store %arg14[%c0_46, %c0_47], %454 {strides = array<i32>} : memref<1x256xf32, #tpu.memory_space<vmem>>, vector<1x256xf32>,
    return
  }
  func.func @transform_0(%arg0: i32) -> (i32, i32) {
    %c0_i32 = arith.constant 0 : i32
    %c0_i32_0 = arith.constant 0 : i32
    return %arg0, %c0_i32 : i32, i32
  }
  func.func @transform_1(%arg0: i32) -> (i32, i32) {
    %c0_i32 = arith.constant 0 : i32
    %c0_i32_0 = arith.constant 0 : i32
    %c0_i32_1 = arith.constant 0 : i32
    return %c0_i32, %c0_i32_0 : i32, i32
  }
  func.func @transform_2(%arg0: i32) -> (i32, i32) {
    %c0_i32 = arith.constant 0 : i32
    %c0_i32_0 = arith.constant 0 : i32
    %c0_i32_1 = arith.constant 0 : i32
    return %c0_i32, %c0_i32_0 : i32, i32
  }
  func.func @transform_3(%arg0: i32) -> (i32, i32) {
    %c0_i32 = arith.constant 0 : i32
    %c0_i32_0 = arith.constant 0 : i32
    %c0_i32_1 = arith.constant 0 : i32
    return %c0_i32, %c0_i32_0 : i32, i32
  }
  func.func @transform_4(%arg0: i32) -> (i32, i32) {
    %c0_i32 = arith.constant 0 : i32
    %c0_i32_0 = arith.constant 0 : i32
    %c0_i32_1 = arith.constant 0 : i32
    return %c0_i32, %c0_i32_0 : i32, i32
  }
  func.func @transform_5(%arg0: i32) -> (i32, i32) {
    %c0_i32 = arith.constant 0 : i32
    %c0_i32_0 = arith.constant 0 : i32
    %c0_i32_1 = arith.constant 0 : i32
    return %c0_i32, %c0_i32_0 : i32, i32
  }
  func.func @transform_6(%arg0: i32) -> (i32, i32) {
    %c0_i32 = arith.constant 0 : i32
    %c0_i32_0 = arith.constant 0 : i32
    %c0_i32_1 = arith.constant 0 : i32
    return %c0_i32, %c0_i32_0 : i32, i32
  }
  func.func @transform_7(%arg0: i32) -> (i32, i32) {
    %c0_i32 = arith.constant 0 : i32
    %c0_i32_0 = arith.constant 0 : i32
    %c0_i32_1 = arith.constant 0 : i32
    return %c0_i32, %c0_i32_0 : i32, i32
  }
  func.func @transform_8(%arg0: i32) -> (i32, i32) {
    %c0_i32 = arith.constant 0 : i32
    %c0_i32_0 = arith.constant 0 : i32
    %c0_i32_1 = arith.constant 0 : i32
    return %c0_i32, %c0_i32_0 : i32, i32
  }
  func.func @transform_9(%arg0: i32) -> (i32, i32) {
    %c0_i32 = arith.constant 0 : i32
    %c0_i32_0 = arith.constant 0 : i32
    %c0_i32_1 = arith.constant 0 : i32
    return %c0_i32, %c0_i32_0 : i32, i32
  }
  func.func @transform_10(%arg0: i32) -> (i32, i32) {
    %c0_i32 = arith.constant 0 : i32
    %c0_i32_0 = arith.constant 0 : i32
    %c0_i32_1 = arith.constant 0 : i32
    return %c0_i32, %c0_i32_0 : i32, i32
  }
  func.func @transform_11(%arg0: i32) -> (i32, i32) {
    %c0_i32 = arith.constant 0 : i32
    %c0_i32_0 = arith.constant 0 : i32
    %c0_i32_1 = arith.constant 0 : i32
    return %c0_i32, %c0_i32_0 : i32, i32
  }
  func.func @transform_12(%arg0: i32) -> (i32, i32) {
    %c0_i32 = arith.constant 0 : i32
    %c0_i32_0 = arith.constant 0 : i32
    %c0_i32_1 = arith.constant 0 : i32
    return %c0_i32, %c0_i32_0 : i32, i32
  }
  func.func @transform_13(%arg0: i32) -> (i32, i32) {
    %c0_i32 = arith.constant 0 : i32
    %c0_i32_0 = arith.constant 0 : i32
    return %c0_i32, %arg0 : i32, i32
  }
}

</mosaic_0001>

<llo_original>
// kernel: tpu_custom_call.1
$region0: #{tpu_custom_call.1}
  #allocation0 [shape = 'u32[]', space=smem, size = 0x4, offset = 0x4, fixed_abs, tag = 'smem constant byte address 0x4 - core index']
  #allocation1 [shape = 'u32[72,128]{1,0:T(1,128)}', space=vmem, size = 0x9000, scoped, tag = 'internal scratch']
  %s0 = inlined_call_operand.vmem [shape: f32[256,19], index: 0, kind: input, shape index: {}]
  %s1 = inlined_call_operand.vmem [shape: f32[187,19], index: 1, kind: input, shape index: {}]
  %s2 = inlined_call_operand.vmem [shape: f32[187,1], index: 2, kind: input, shape index: {}]
  %s3 = inlined_call_operand.vmem [shape: f32[87,183], index: 3, kind: input, shape index: {}]
  %s4 = inlined_call_operand.vmem [shape: f32[87,1], index: 4, kind: input, shape index: {}]
  %s5 = inlined_call_operand.vmem [shape: f32[39,87], index: 5, kind: input, shape index: {}]
  %s6 = inlined_call_operand.vmem [shape: f32[39,1], index: 6, kind: input, shape index: {}]
  %s7 = inlined_call_operand.vmem [shape: f32[15,39], index: 7, kind: input, shape index: {}]
  %s8 = inlined_call_operand.vmem [shape: f32[15,1], index: 8, kind: input, shape index: {}]
  %s9 = inlined_call_operand.vmem [shape: f32[3,15], index: 9, kind: input, shape index: {}]
  %s10 = inlined_call_operand.vmem [shape: f32[3,1], index: 10, kind: input, shape index: {}]
  %s11 = inlined_call_operand.vmem [shape: f32[3,5], index: 11, kind: input, shape index: {}]
  %s12 = inlined_call_operand.vmem [shape: f32[3,1], index: 12, kind: input, shape index: {}]
  %s13 = inlined_call_operand.hbm [shape: f32[1,256], index: 13, kind: output, shape index: {}]
  %s14 = sld [smem:[#allocation0]]
  $region62: #{tpu_custom_call.1} parent=0
    _
  %s16 = ssub.s32 1, %s14
  %s17 = scalar_select 0, %s16, %s14
  $region1: #{tpu_custom_call.1} parent=0
    #allocation2 [shape = 'u8[1024]{0}', space=vmem, size = 0x400, scoped, tag = 'output window, operand 0, single buffered']
    #allocation3 [shape = 's32[1]{0}', space=sflag, size = 0x4, scoped, tag = 'scoped memory for tpu_custom_call.1']
    %18 = vsyncpa [#allocation3], 0
    // Predicated region
    $region2: #{tpu_custom_call.1} parent=1 // pred_check
      _
    $region3: #{tpu_custom_call.1} parent=1 // pred_check_branch
      %20 = sbr.rel (0) target = $region5
    $region4: #{tpu_custom_call.1} parent=1 // pred_region
      _
    $region5: #{tpu_custom_call.1} parent=1 // pred_fallthru
      _
    // Predicated region
    $region6: #{tpu_custom_call.1} parent=1 // pred_check
      _
    $region7: #{tpu_custom_call.1} parent=1 // pred_check_branch
      %22 = sbr.rel (0) target = $region9
    $region8: #{tpu_custom_call.1} parent=1 // pred_region
      _
    $region9: #{tpu_custom_call.1} parent=1 // pred_fallthru
      _
    // Predicated region
    $region10: #{tpu_custom_call.1} parent=1 // pred_check
      _
    $region11: #{tpu_custom_call.1} parent=1 // pred_check_branch
      %24 = sbr.rel (0) target = $region13
    $region12: #{tpu_custom_call.1} parent=1 // pred_region
      _
    $region13: #{tpu_custom_call.1} parent=1 // pred_fallthru
      _
    // Predicated region
    $region14: #{tpu_custom_call.1} parent=1 // pred_check
      _
    $region15: #{tpu_custom_call.1} parent=1 // pred_check_branch
      %26 = sbr.rel (0) target = $region17
    $region16: #{tpu_custom_call.1} parent=1 // pred_region
      _
    $region17: #{tpu_custom_call.1} parent=1 // pred_fallthru
      _
    // Predicated region
    $region18: #{tpu_custom_call.1} parent=1 // pred_check
      _
    $region19: #{tpu_custom_call.1} parent=1 // pred_check_branch
      %28 = sbr.rel (0) target = $region21
    $region20: #{tpu_custom_call.1} parent=1 // pred_region
      _
    $region21: #{tpu_custom_call.1} parent=1 // pred_fallthru
      _
    // Predicated region
    $region22: #{tpu_custom_call.1} parent=1 // pred_check
      _
    $region23: #{tpu_custom_call.1} parent=1 // pred_check_branch
      %30 = sbr.rel (0) target = $region25
    $region24: #{tpu_custom_call.1} parent=1 // pred_region
      _
    $region25: #{tpu_custom_call.1} parent=1 // pred_fallthru
      _
    // Predicated region
    $region26: #{tpu_custom_call.1} parent=1 // pred_check
      _
    $region27: #{tpu_custom_call.1} parent=1 // pred_check_branch
      %32 = sbr.rel (0) target = $region29
    $region28: #{tpu_custom_call.1} parent=1 // pred_region
      _
    $region29: #{tpu_custom_call.1} parent=1 // pred_fallthru
      _
    // Predicated region
    $region30: #{tpu_custom_call.1} parent=1 // pred_check
      _
    $region31: #{tpu_custom_call.1} parent=1 // pred_check_branch
      %34 = sbr.rel (0) target = $region33
    $region32: #{tpu_custom_call.1} parent=1 // pred_region
      _
    $region33: #{tpu_custom_call.1} parent=1 // pred_fallthru
      _
    // Predicated region
    $region34: #{tpu_custom_call.1} parent=1 // pred_check
      _
    $region35: #{tpu_custom_call.1} parent=1 // pred_check_branch
      %36 = sbr.rel (0) target = $region37
    $region36: #{tpu_custom_call.1} parent=1 // pred_region
      _
    $region37: #{tpu_custom_call.1} parent=1 // pred_fallthru
      _
    // Predicated region
    $region38: #{tpu_custom_call.1} parent=1 // pred_check
      _
    $region39: #{tpu_custom_call.1} parent=1 // pred_check_branch
      %38 = sbr.rel (0) target = $region41
    $region40: #{tpu_custom_call.1} parent=1 // pred_region
      _
    $region41: #{tpu_custom_call.1} parent=1 // pred_fallthru
      _
    // Predicated region
    $region42: #{tpu_custom_call.1} parent=1 // pred_check
      _
    $region43: #{tpu_custom_call.1} parent=1 // pred_check_branch
      %40 = sbr.rel (0) target = $region45
    $region44: #{tpu_custom_call.1} parent=1 // pred_region
      _
    $region45: #{tpu_custom_call.1} parent=1 // pred_fallthru
      _
    // Predicated region
    $region46: #{tpu_custom_call.1} parent=1 // pred_check
      _
    $region47: #{tpu_custom_call.1} parent=1 // pred_check_branch
      %42 = sbr.rel (0) target = $region49
    $region48: #{tpu_custom_call.1} parent=1 // pred_region
      _
    $region49: #{tpu_custom_call.1} parent=1 // pred_fallthru
      _
    // Predicated region
    $region50: #{tpu_custom_call.1} parent=1 // pred_check
      _
    $region51: #{tpu_custom_call.1} parent=1 // pred_check_branch
      %44 = sbr.rel (0) target = $region53
    $region52: #{tpu_custom_call.1} parent=1 // pred_region
      _
    $region53: #{tpu_custom_call.1} parent=1 // pred_fallthru
      _
    %v45 = vld [vmem:[%s0] sm:$0xff]
    %v46 = vld [vmem:[%s0 + $0x8] sm:$0xff]
    %v47 = vld [vmem:[%s0 + $0x10] sm:$0xff]
    %v48 = vld [vmem:[%s0 + $0x18] sm:$0xff]
    %v49 = vld [vmem:[%s0 + $0x20] sm:$0xff]
    %v50 = vld [vmem:[%s0 + $0x28] sm:$0xff]
    %v51 = vld [vmem:[%s0 + $0x30] sm:$0xff]
    %v52 = vld [vmem:[%s0 + $0x38] sm:$0xff]
    %v53 = vld [vmem:[%s0 + $0x40] sm:$0xff]
    %v54 = vld [vmem:[%s0 + $0x48] sm:$0xff]
    %v55 = vld [vmem:[%s0 + $0x50] sm:$0xff]
    %v56 = vld [vmem:[%s0 + $0x58] sm:$0xff]
    %v57 = vld [vmem:[%s0 + $0x60] sm:$0xff]
    %v58 = vld [vmem:[%s0 + $0x68] sm:$0xff]
    %v59 = vld [vmem:[%s0 + $0x70] sm:$0xff]
    %v60 = vld [vmem:[%s0 + $0x78] sm:$0xff]
    %v61 = vld [vmem:[%s0 + $0x80] sm:$0xff]
    %v62 = vld [vmem:[%s0 + $0x88] sm:$0xff]
    %v63 = vld [vmem:[%s0 + $0x90] sm:$0xff]
    %v64 = vld [vmem:[%s0 + $0x98] sm:$0xff]
    %v65 = vld [vmem:[%s0 + $0xa0] sm:$0xff]
    %v66 = vld [vmem:[%s0 + $0xa8] sm:$0xff]
    %v67 = vld [vmem:[%s0 + $0xb0] sm:$0xff]
    %v68 = vld [vmem:[%s0 + $0xb8] sm:$0xff]
    %v69 = vld [vmem:[%s0 + $0xc0] sm:$0xff]
    %v70 = vld [vmem:[%s0 + $0xc8] sm:$0xff]
    %v71 = vld [vmem:[%s0 + $0xd0] sm:$0xff]
    %v72 = vld [vmem:[%s0 + $0xd8] sm:$0xff]
    %v73 = vld [vmem:[%s0 + $0xe0] sm:$0xff]
    %v74 = vld [vmem:[%s0 + $0xe8] sm:$0xff]
    %v75 = vld [vmem:[%s0 + $0xf0] sm:$0xff]
    %v76 = vld [vmem:[%s0 + $0xf8] sm:$0xff]
    %v77 = vld [vmem:[%s1] sm:$0xff]
    %v78 = vld [vmem:[%s1 + $0x8] sm:$0xff]
    %v79 = vld [vmem:[%s1 + $0x10] sm:$0xff]
    %v80 = vld [vmem:[%s1 + $0x18] sm:$0xff]
    %v81 = vld [vmem:[%s1 + $0x20] sm:$0xff]
    %v82 = vld [vmem:[%s1 + $0x28] sm:$0xff]
    %v83 = vld [vmem:[%s1 + $0x30] sm:$0xff]
    %v84 = vld [vmem:[%s1 + $0x38] sm:$0xff]
    %v85 = vld [vmem:[%s1 + $0x40] sm:$0xff]
    %v86 = vld [vmem:[%s1 + $0x48] sm:$0xff]
    %v87 = vld [vmem:[%s1 + $0x50] sm:$0xff]
    %v88 = vld [vmem:[%s1 + $0x58] sm:$0xff]
    %v89 = vld [vmem:[%s1 + $0x60] sm:$0xff]
    %v90 = vld [vmem:[%s1 + $0x68] sm:$0xff]
    %v91 = vld [vmem:[%s1 + $0x70] sm:$0xff]
    %v92 = vld [vmem:[%s1 + $0x78] sm:$0xff]
    %v93 = vld [vmem:[%s1 + $0x80] sm:$0xff]
    %v94 = vld [vmem:[%s1 + $0x88] sm:$0xff]
    %v95 = vld [vmem:[%s1 + $0x90] sm:$0xff]
    %v96 = vld [vmem:[%s1 + $0x98] sm:$0xff]
    %v97 = vld [vmem:[%s1 + $0xa0] sm:$0xff]
    %v98 = vld [vmem:[%s1 + $0xa8] sm:$0xff]
    %v99 = vld [vmem:[%s1 + $0xb0] sm:$0xff]
    %v100 = vld [vmem:[%s1 + $0xb8] sm:$0x7]
    %v101 = vld [vmem:[%s2] sm:$0xff]
    %v102 = vld [vmem:[%s2 + $0x8] sm:$0xff]
    %v103 = vld [vmem:[%s2 + $0x10] sm:$0xff]
    %v104 = vld [vmem:[%s2 + $0x18] sm:$0xff]
    %v105 = vld [vmem:[%s2 + $0x20] sm:$0xff]
    %v106 = vld [vmem:[%s2 + $0x28] sm:$0xff]
    %v107 = vld [vmem:[%s2 + $0x30] sm:$0xff]
    %v108 = vld [vmem:[%s2 + $0x38] sm:$0xff]
    %v109 = vld [vmem:[%s2 + $0x40] sm:$0xff]
    %v110 = vld [vmem:[%s2 + $0x48] sm:$0xff]
    %v111 = vld [vmem:[%s2 + $0x50] sm:$0xff]
    %v112 = vld [vmem:[%s2 + $0x58] sm:$0xff]
    %v113 = vld [vmem:[%s2 + $0x60] sm:$0xff]
    %v114 = vld [vmem:[%s2 + $0x68] sm:$0xff]
    %v115 = vld [vmem:[%s2 + $0x70] sm:$0xff]
    %v116 = vld [vmem:[%s2 + $0x78] sm:$0xff]
    %v117 = vld [vmem:[%s2 + $0x80] sm:$0xff]
    %v118 = vld [vmem:[%s2 + $0x88] sm:$0xff]
    %v119 = vld [vmem:[%s2 + $0x90] sm:$0xff]
    %v120 = vld [vmem:[%s2 + $0x98] sm:$0xff]
    %v121 = vld [vmem:[%s2 + $0xa0] sm:$0xff]
    %v122 = vld [vmem:[%s2 + $0xa8] sm:$0xff]
    %v123 = vld [vmem:[%s2 + $0xb0] sm:$0xff]
    %v124 = vld [vmem:[%s2 + $0xb8] sm:$0x7]
    %126 = vset.pattern.permute.xlu0 0
    %127 = vperm.xlu0 %126, %v101
    %v128 = vpop.permute.xlu0 %127
    %131 = vset.pattern.permute.xlu0 0
    %132 = vperm.xlu0 %131, %v102
    %v133 = vpop.permute.xlu0 %132
    %136 = vset.pattern.permute.xlu0 0
    %137 = vperm.xlu0 %136, %v103
    %v138 = vpop.permute.xlu0 %137
    %141 = vset.pattern.permute.xlu0 0
    %142 = vperm.xlu0 %141, %v104
    %v143 = vpop.permute.xlu0 %142
    %146 = vset.pattern.permute.xlu0 0
    %147 = vperm.xlu0 %146, %v105
    %v148 = vpop.permute.xlu0 %147
    %151 = vset.pattern.permute.xlu0 0
    %152 = vperm.xlu0 %151, %v106
    %v153 = vpop.permute.xlu0 %152
    %156 = vset.pattern.permute.xlu0 0
    %157 = vperm.xlu0 %156, %v107
    %v158 = vpop.permute.xlu0 %157
    %161 = vset.pattern.permute.xlu0 0
    %162 = vperm.xlu0 %161, %v108
    %v163 = vpop.permute.xlu0 %162
    %166 = vset.pattern.permute.xlu0 0
    %167 = vperm.xlu0 %166, %v109
    %v168 = vpop.permute.xlu0 %167
    %171 = vset.pattern.permute.xlu0 0
    %172 = vperm.xlu0 %171, %v110
    %v173 = vpop.permute.xlu0 %172
    %176 = vset.pattern.permute.xlu0 0
    %177 = vperm.xlu0 %176, %v111
    %v178 = vpop.permute.xlu0 %177
    %181 = vset.pattern.permute.xlu0 0
    %182 = vperm.xlu0 %181, %v112
    %v183 = vpop.permute.xlu0 %182
    %186 = vset.pattern.permute.xlu0 0
    %187 = vperm.xlu0 %186, %v113
    %v188 = vpop.permute.xlu0 %187
    %191 = vset.pattern.permute.xlu0 0
    %192 = vperm.xlu0 %191, %v114
    %v193 = vpop.permute.xlu0 %192
    %196 = vset.pattern.permute.xlu0 0
    %197 = vperm.xlu0 %196, %v115
    %v198 = vpop.permute.xlu0 %197
    %201 = vset.pattern.permute.xlu0 0
    %202 = vperm.xlu0 %201, %v116
    %v203 = vpop.permute.xlu0 %202
    %206 = vset.pattern.permute.xlu0 0
    %207 = vperm.xlu0 %206, %v117
    %v208 = vpop.permute.xlu0 %207
    %211 = vset.pattern.permute.xlu0 0
    %212 = vperm.xlu0 %211, %v118
    %v213 = vpop.permute.xlu0 %212
    %216 = vset.pattern.permute.xlu0 0
    %217 = vperm.xlu0 %216, %v119
    %v218 = vpop.permute.xlu0 %217
    %221 = vset.pattern.permute.xlu0 0
    %222 = vperm.xlu0 %221, %v120
    %v223 = vpop.permute.xlu0 %222
    %226 = vset.pattern.permute.xlu0 0
    %227 = vperm.xlu0 %226, %v121
    %v228 = vpop.permute.xlu0 %227
    %231 = vset.pattern.permute.xlu0 0
    %232 = vperm.xlu0 %231, %v122
    %v233 = vpop.permute.xlu0 %232
    %236 = vset.pattern.permute.xlu0 0
    %237 = vperm.xlu0 %236, %v123
    %v238 = vpop.permute.xlu0 %237
    %241 = vset.pattern.permute.xlu0 0
    %242 = vperm.xlu0 %241, %v124
    %v243 = vpop.permute.xlu0 %242
    %vm245 = vcmask 154624
    %v247 = vsel %vm245, %v77, 0
    %v250 = vsel %vm245, %v78, 0
    %v253 = vsel %vm245, %v79, 0
    %v256 = vsel %vm245, %v80, 0
    %v259 = vsel %vm245, %v81, 0
    %v262 = vsel %vm245, %v82, 0
    %v265 = vsel %vm245, %v83, 0
    %v268 = vsel %vm245, %v84, 0
    %v271 = vsel %vm245, %v85, 0
    %v274 = vsel %vm245, %v86, 0
    %v277 = vsel %vm245, %v87, 0
    %v280 = vsel %vm245, %v88, 0
    %v283 = vsel %vm245, %v89, 0
    %v286 = vsel %vm245, %v90, 0
    %v289 = vsel %vm245, %v91, 0
    %v292 = vsel %vm245, %v92, 0
    %v295 = vsel %vm245, %v93, 0
    %v298 = vsel %vm245, %v94, 0
    %v301 = vsel %vm245, %v95, 0
    %v304 = vsel %vm245, %v96, 0
    %v307 = vsel %vm245, %v97, 0
    %v310 = vsel %vm245, %v98, 0
    %v313 = vsel %vm245, %v99, 0
    %v316 = vsel %vm245, %v100, 0
    %v319 = vsel %vm245, %v45, 0
    %v322 = vsel %vm245, %v46, 0
    %v325 = vsel %vm245, %v47, 0
    %v328 = vsel %vm245, %v48, 0
    %v331 = vsel %vm245, %v49, 0
    %v334 = vsel %vm245, %v50, 0
    %v337 = vsel %vm245, %v51, 0
    %v340 = vsel %vm245, %v52, 0
    %v343 = vsel %vm245, %v53, 0
    %v346 = vsel %vm245, %v54, 0
    %v349 = vsel %vm245, %v55, 0
    %v352 = vsel %vm245, %v56, 0
    %v355 = vsel %vm245, %v57, 0
    %v358 = vsel %vm245, %v58, 0
    %v361 = vsel %vm245, %v59, 0
    %v364 = vsel %vm245, %v60, 0
    %v367 = vsel %vm245, %v61, 0
    %v370 = vsel %vm245, %v62, 0
    %v373 = vsel %vm245, %v63, 0
    %v376 = vsel %vm245, %v64, 0
    %v379 = vsel %vm245, %v65, 0
    %v382 = vsel %vm245, %v66, 0
    %v385 = vsel %vm245, %v67, 0
    %v388 = vsel %vm245, %v68, 0
    %v391 = vsel %vm245, %v69, 0
    %v394 = vsel %vm245, %v70, 0
    %v397 = vsel %vm245, %v71, 0
    %v400 = vsel %vm245, %v72, 0
    %v403 = vsel %vm245, %v73, 0
    %v406 = vsel %vm245, %v74, 0
    %v409 = vsel %vm245, %v75, 0
    %v412 = vsel %vm245, %v76, 0
    %414 = vmatpush.xpose.msra.mxu0 %v364
    %415 = vmatpush.xpose.msra.mxu0 %v361
    %416 = vmatpush.xpose.msra.mxu0 %v358
    %417 = vmatpush.xpose.msra.mxu0 %v355
    %418 = vmatpush.xpose.msra.mxu0 %v352
    %419 = vmatpush.xpose.msra.mxu0 %v349
    %420 = vmatpush.xpose.msra.mxu0 %v346
    %421 = vmatpush.xpose.msra.mxu0 %v343
    %422 = vmatpush.xpose.msra.mxu0 %v340
    %423 = vmatpush.xpose.msra.mxu0 %v337
    %424 = vmatpush.xpose.msra.mxu0 %v334
    %425 = vmatpush.xpose.msra.mxu0 %v331
    %426 = vmatpush.xpose.msra.mxu0 %v328
    %427 = vmatpush.xpose.msra.mxu0 %v325
    %428 = vmatpush.xpose.msra.mxu0 %v322
    %429 = vmatpush.xpose.msra.mxu0 %v319
    %430 = vmatmul.f32.gmra.mxu0 %v247
    %v431 = vpop.f32.mrf.mxu0
    %v432 = vadd.f32 %v128, %v431
    %433 = vmatmul.f32.gmra.mxu0 %v250
    %v434 = vpop.f32.mrf.mxu0
    %v435 = vadd.f32 %v133, %v434
    %436 = vmatmul.f32.gmra.mxu0 %v253
    %v437 = vpop.f32.mrf.mxu0
    %v438 = vadd.f32 %v138, %v437
    %439 = vmatmul.f32.gmra.mxu0 %v256
    %v440 = vpop.f32.mrf.mxu0
    %v441 = vadd.f32 %v143, %v440
    %442 = vmatmul.f32.gmra.mxu0 %v259
    %v443 = vpop.f32.mrf.mxu0
    %v444 = vadd.f32 %v148, %v443
    %445 = vmatmul.f32.gmra.mxu0 %v262
    %v446 = vpop.f32.mrf.mxu0
    %v447 = vadd.f32 %v153, %v446
    %448 = vmatmul.f32.gmra.mxu0 %v265
    %v449 = vpop.f32.mrf.mxu0
    %v450 = vadd.f32 %v158, %v449
    %451 = vmatmul.f32.gmra.mxu0 %v268
    %v452 = vpop.f32.mrf.mxu0
    %v453 = vadd.f32 %v163, %v452
    %454 = vmatmul.f32.gmra.mxu0 %v271
    %v455 = vpop.f32.mrf.mxu0
    %v456 = vadd.f32 %v168, %v455
    %457 = vmatmul.f32.gmra.mxu0 %v274
    %v458 = vpop.f32.mrf.mxu0
    %v459 = vadd.f32 %v173, %v458
    %460 = vmatmul.f32.gmra.mxu0 %v277
    %v461 = vpop.f32.mrf.mxu0
    %v462 = vadd.f32 %v178, %v461
    %463 = vmatmul.f32.gmra.mxu0 %v280
    %v464 = vpop.f32.mrf.mxu0
    %v465 = vadd.f32 %v183, %v464
    %466 = vmatmul.f32.gmra.mxu0 %v283
    %v467 = vpop.f32.mrf.mxu0
    %v468 = vadd.f32 %v188, %v467
    %469 = vmatmul.f32.gmra.mxu0 %v286
    %v470 = vpop.f32.mrf.mxu0
    %v471 = vadd.f32 %v193, %v470
    %472 = vmatmul.f32.gmra.mxu0 %v289
    %v473 = vpop.f32.mrf.mxu0
    %v474 = vadd.f32 %v198, %v473
    %475 = vmatmul.f32.gmra.mxu0 %v292
    %v476 = vpop.f32.mrf.mxu0
    %v477 = vadd.f32 %v203, %v476
    %478 = vmatmul.f32.gmra.mxu0 %v295
    %v479 = vpop.f32.mrf.mxu0
    %v480 = vadd.f32 %v208, %v479
    %481 = vmatmul.f32.gmra.mxu0 %v298
    %v482 = vpop.f32.mrf.mxu0
    %v483 = vadd.f32 %v213, %v482
    %484 = vmatmul.f32.gmra.mxu0 %v301
    %v485 = vpop.f32.mrf.mxu0
    %v486 = vadd.f32 %v218, %v485
    %487 = vmatmul.f32.gmra.mxu0 %v304
    %v488 = vpop.f32.mrf.mxu0
    %v489 = vadd.f32 %v223, %v488
    %490 = vmatmul.f32.gmra.mxu0 %v307
    %v491 = vpop.f32.mrf.mxu0
    %v492 = vadd.f32 %v228, %v491
    %493 = vmatmul.f32.gmra.mxu0 %v310
    %v494 = vpop.f32.mrf.mxu0
    %v495 = vadd.f32 %v233, %v494
    %496 = vmatmul.f32.gmra.mxu0 %v313
    %v497 = vpop.f32.mrf.mxu0
    %v498 = vadd.f32 %v238, %v497
    %499 = vmatmul.f32.gmra.mxu0 %v316
    %v500 = vpop.f32.mrf.mxu0
    %v501 = vadd.f32 %v243, %v500
    %502 = vdwg.mxu0
    %503 = vmatpush.xpose.msra.mxu0 %v412
    %504 = vmatpush.xpose.msra.mxu0 %v409
    %505 = vmatpush.xpose.msra.mxu0 %v406
    %506 = vmatpush.xpose.msra.mxu0 %v403
    %507 = vmatpush.xpose.msra.mxu0 %v400
    %508 = vmatpush.xpose.msra.mxu0 %v397
    %509 = vmatpush.xpose.msra.mxu0 %v394
    %510 = vmatpush.xpose.msra.mxu0 %v391
    %511 = vmatpush.xpose.msra.mxu0 %v388
    %512 = vmatpush.xpose.msra.mxu0 %v385
    %513 = vmatpush.xpose.msra.mxu0 %v382
    %514 = vmatpush.xpose.msra.mxu0 %v379
    %515 = vmatpush.xpose.msra.mxu0 %v376
    %516 = vmatpush.xpose.msra.mxu0 %v373
    %517 = vmatpush.xpose.msra.mxu0 %v370
    %518 = vmatpush.xpose.msra.mxu0 %v367
    %519 = vmatmul.f32.gmra.mxu0 %v247
    %v520 = vpop.f32.mrf.mxu0
    %v521 = vadd.f32 %v128, %v520
    %522 = vmatmul.f32.gmra.mxu0 %v250
    %v523 = vpop.f32.mrf.mxu0
    %v524 = vadd.f32 %v133, %v523
    %525 = vmatmul.f32.gmra.mxu0 %v253
    %v526 = vpop.f32.mrf.mxu0
    %v527 = vadd.f32 %v138, %v526
    %528 = vmatmul.f32.gmra.mxu0 %v256
    %v529 = vpop.f32.mrf.mxu0
    %v530 = vadd.f32 %v143, %v529
    %531 = vmatmul.f32.gmra.mxu0 %v259
    %v532 = vpop.f32.mrf.mxu0
    %v533 = vadd.f32 %v148, %v532
    %534 = vmatmul.f32.gmra.mxu0 %v262
    %v535 = vpop.f32.mrf.mxu0
    %v536 = vadd.f32 %v153, %v535
    %537 = vmatmul.f32.gmra.mxu0 %v265
    %v538 = vpop.f32.mrf.mxu0
    %v539 = vadd.f32 %v158, %v538
    %540 = vmatmul.f32.gmra.mxu0 %v268
    %v541 = vpop.f32.mrf.mxu0
    %v542 = vadd.f32 %v163, %v541
    %543 = vmatmul.f32.gmra.mxu0 %v271
    %v544 = vpop.f32.mrf.mxu0
    %v545 = vadd.f32 %v168, %v544
    %546 = vmatmul.f32.gmra.mxu0 %v274
    %v547 = vpop.f32.mrf.mxu0
    %v548 = vadd.f32 %v173, %v547
    %549 = vmatmul.f32.gmra.mxu0 %v277
    %v550 = vpop.f32.mrf.mxu0
    %v551 = vadd.f32 %v178, %v550
    %552 = vmatmul.f32.gmra.mxu0 %v280
    %v553 = vpop.f32.mrf.mxu0
    %v554 = vadd.f32 %v183, %v553
    %555 = vmatmul.f32.gmra.mxu0 %v283
    %v556 = vpop.f32.mrf.mxu0
    %v557 = vadd.f32 %v188, %v556
    %558 = vmatmul.f32.gmra.mxu0 %v286
    %v559 = vpop.f32.mrf.mxu0
    %v560 = vadd.f32 %v193, %v559
    %561 = vmatmul.f32.gmra.mxu0 %v289
    %v562 = vpop.f32.mrf.mxu0
    %v563 = vadd.f32 %v198, %v562
    %564 = vmatmul.f32.gmra.mxu0 %v292
    %v565 = vpop.f32.mrf.mxu0
    %v566 = vadd.f32 %v203, %v565
    %567 = vmatmul.f32.gmra.mxu0 %v295
    %v568 = vpop.f32.mrf.mxu0
    %v569 = vadd.f32 %v208, %v568
    %570 = vmatmul.f32.gmra.mxu0 %v298
    %v571 = vpop.f32.mrf.mxu0
    %v572 = vadd.f32 %v213, %v571
    %573 = vmatmul.f32.gmra.mxu0 %v301
    %v574 = vpop.f32.mrf.mxu0
    %v575 = vadd.f32 %v218, %v574
    %576 = vmatmul.f32.gmra.mxu0 %v304
    %v577 = vpop.f32.mrf.mxu0
    %v578 = vadd.f32 %v223, %v577
    %579 = vmatmul.f32.gmra.mxu0 %v307
    %v580 = vpop.f32.mrf.mxu0
    %v581 = vadd.f32 %v228, %v580
    %582 = vmatmul.f32.gmra.mxu0 %v310
    %v583 = vpop.f32.mrf.mxu0
    %v584 = vadd.f32 %v233, %v583
    %585 = vmatmul.f32.gmra.mxu0 %v313
    %v586 = vpop.f32.mrf.mxu0
    %v587 = vadd.f32 %v238, %v586
    %588 = vmatmul.f32.gmra.mxu0 %v316
    %v589 = vpop.f32.mrf.mxu0
    %v590 = vadd.f32 %v243, %v589
    %591 = vdwg.mxu0
    %v592 = vmin.f32 %v432, 20.0
    %v593 = vmin.f32 %v521, 20.0
    %v594 = vmin.f32 %v435, 20.0
    %v595 = vmin.f32 %v524, 20.0
    %v596 = vmin.f32 %v438, 20.0
    %v597 = vmin.f32 %v527, 20.0
    %v598 = vmin.f32 %v441, 20.0
    %v599 = vmin.f32 %v530, 20.0
    %v600 = vmin.f32 %v444, 20.0
    %v601 = vmin.f32 %v533, 20.0
    %v602 = vmin.f32 %v447, 20.0
    %v603 = vmin.f32 %v536, 20.0
    %v604 = vmin.f32 %v450, 20.0
    %v605 = vmin.f32 %v539, 20.0
    %v606 = vmin.f32 %v453, 20.0
    %v607 = vmin.f32 %v542, 20.0
    %v608 = vmin.f32 %v456, 20.0
    %v609 = vmin.f32 %v545, 20.0
    %v610 = vmin.f32 %v459, 20.0
    %v611 = vmin.f32 %v548, 20.0
    %v612 = vmin.f32 %v462, 20.0
    %v613 = vmin.f32 %v551, 20.0
    %v614 = vmin.f32 %v465, 20.0
    %v615 = vmin.f32 %v554, 20.0
    %v616 = vmin.f32 %v468, 20.0
    %v617 = vmin.f32 %v557, 20.0
    %v618 = vmin.f32 %v471, 20.0
    %v619 = vmin.f32 %v560, 20.0
    %v620 = vmin.f32 %v474, 20.0
    %v621 = vmin.f32 %v563, 20.0
    %v622 = vmin.f32 %v477, 20.0
    %v623 = vmin.f32 %v566, 20.0
    %v624 = vmin.f32 %v480, 20.0
    %v625 = vmin.f32 %v569, 20.0
    %v626 = vmin.f32 %v483, 20.0
    %v627 = vmin.f32 %v572, 20.0
    %v628 = vmin.f32 %v486, 20.0
    %v629 = vmin.f32 %v575, 20.0
    %v630 = vmin.f32 %v489, 20.0
    %v631 = vmin.f32 %v578, 20.0
    %v632 = vmin.f32 %v492, 20.0
    %v633 = vmin.f32 %v581, 20.0
    %v634 = vmin.f32 %v495, 20.0
    %v635 = vmin.f32 %v584, 20.0
    %v636 = vmin.f32 %v498, 20.0
    %v637 = vmin.f32 %v587, 20.0
    %v638 = vmul.f32 %v592, 1.442695
    %v639 = vpow.pop %v638
    %v640 = vmul.f32 %v593, 1.442695
    %v641 = vpow.pop %v640
    %v642 = vmul.f32 %v594, 1.442695
    %v643 = vpow.pop %v642
    %v644 = vmul.f32 %v595, 1.442695
    %v645 = vpow.pop %v644
    %v646 = vmul.f32 %v596, 1.442695
    %v647 = vpow.pop %v646
    %v648 = vmul.f32 %v597, 1.442695
    %v649 = vpow.pop %v648
    %v650 = vmul.f32 %v598, 1.442695
    %v651 = vpow.pop %v650
    %v652 = vmul.f32 %v599, 1.442695
    %v653 = vpow.pop %v652
    %v654 = vmul.f32 %v600, 1.442695
    %v655 = vpow.pop %v654
    %v656 = vmul.f32 %v601, 1.442695
    %v657 = vpow.pop %v656
    %v658 = vmul.f32 %v602, 1.442695
    %v659 = vpow.pop %v658
    %v660 = vmul.f32 %v603, 1.442695
    %v661 = vpow.pop %v660
    %v662 = vmul.f32 %v604, 1.442695
    %v663 = vpow.pop %v662
    %v664 = vmul.f32 %v605, 1.442695
    %v665 = vpow.pop %v664
    %v666 = vmul.f32 %v606, 1.442695
    %v667 = vpow.pop %v666
    %v668 = vmul.f32 %v607, 1.442695
    %v669 = vpow.pop %v668
    %v670 = vmul.f32 %v608, 1.442695
    %v671 = vpow.pop %v670
    %v672 = vmul.f32 %v609, 1.442695
    %v673 = vpow.pop %v672
    %v674 = vmul.f32 %v610, 1.442695
    %v675 = vpow.pop %v674
    %v676 = vmul.f32 %v611, 1.442695
    %v677 = vpow.pop %v676
    %v678 = vmul.f32 %v612, 1.442695
    %v679 = vpow.pop %v678
    %v680 = vmul.f32 %v613, 1.442695
    %v681 = vpow.pop %v680
    %v682 = vmul.f32 %v614, 1.442695
    %v683 = vpow.pop %v682
    %v684 = vmul.f32 %v615, 1.442695
    %v685 = vpow.pop %v684
    %v686 = vmul.f32 %v616, 1.442695
    %v687 = vpow.pop %v686
    %v688 = vmul.f32 %v617, 1.442695
    %v689 = vpow.pop %v688
    %v690 = vmul.f32 %v618, 1.442695
    %v691 = vpow.pop %v690
    %v692 = vmul.f32 %v619, 1.442695
    %v693 = vpow.pop %v692
    %v694 = vmul.f32 %v620, 1.442695
    %v695 = vpow.pop %v694
    %v696 = vmul.f32 %v621, 1.442695
    %v697 = vpow.pop %v696
    %v698 = vmul.f32 %v622, 1.442695
    %v699 = vpow.pop %v698
    %v700 = vmul.f32 %v623, 1.442695
    %v701 = vpow.pop %v700
    %v702 = vmul.f32 %v624, 1.442695
    %v703 = vpow.pop %v702
    %v704 = vmul.f32 %v625, 1.442695
    %v705 = vpow.pop %v704
    %v706 = vmul.f32 %v626, 1.442695
    %v707 = vpow.pop %v706
    %v708 = vmul.f32 %v627, 1.442695
    %v709 = vpow.pop %v708
    %v710 = vmul.f32 %v628, 1.442695
    %v711 = vpow.pop %v710
    %v712 = vmul.f32 %v629, 1.442695
    %v713 = vpow.pop %v712
    %v714 = vmul.f32 %v630, 1.442695
    %v715 = vpow.pop %v714
    %v716 = vmul.f32 %v631, 1.442695
    %v717 = vpow.pop %v716
    %v718 = vmul.f32 %v632, 1.442695
    %v719 = vpow.pop %v718
    %v720 = vmul.f32 %v633, 1.442695
    %v721 = vpow.pop %v720
    %v722 = vmul.f32 %v634, 1.442695
    %v723 = vpow.pop %v722
    %v724 = vmul.f32 %v635, 1.442695
    %v725 = vpow.pop %v724
    %v726 = vmul.f32 %v636, 1.442695
    %v727 = vpow.pop %v726
    %v728 = vmul.f32 %v637, 1.442695
    %v729 = vpow.pop %v728
    %v730 = vadd.f32 %v639, 2.0
    %v731 = vadd.f32 %v641, 2.0
    %v732 = vadd.f32 %v643, 2.0
    %v733 = vadd.f32 %v645, 2.0
    %v734 = vadd.f32 %v647, 2.0
    %v735 = vadd.f32 %v649, 2.0
    %v736 = vadd.f32 %v651, 2.0
    %v737 = vadd.f32 %v653, 2.0
    %v738 = vadd.f32 %v655, 2.0
    %v739 = vadd.f32 %v657, 2.0
    %v740 = vadd.f32 %v659, 2.0
    %v741 = vadd.f32 %v661, 2.0
    %v742 = vadd.f32 %v663, 2.0
    %v743 = vadd.f32 %v665, 2.0
    %v744 = vadd.f32 %v667, 2.0
    %v745 = vadd.f32 %v669, 2.0
    %v746 = vadd.f32 %v671, 2.0
    %v747 = vadd.f32 %v673, 2.0
    %v748 = vadd.f32 %v675, 2.0
    %v749 = vadd.f32 %v677, 2.0
    %v750 = vadd.f32 %v679, 2.0
    %v751 = vadd.f32 %v681, 2.0
    %v752 = vadd.f32 %v683, 2.0
    %v753 = vadd.f32 %v685, 2.0
    %v754 = vadd.f32 %v687, 2.0
    %v755 = vadd.f32 %v689, 2.0
    %v756 = vadd.f32 %v691, 2.0
    %v757 = vadd.f32 %v693, 2.0
    %v758 = vadd.f32 %v695, 2.0
    %v759 = vadd.f32 %v697, 2.0
    %v760 = vadd.f32 %v699, 2.0
    %v761 = vadd.f32 %v701, 2.0
    %v762 = vadd.f32 %v703, 2.0
    %v763 = vadd.f32 %v705, 2.0
    %v764 = vadd.f32 %v707, 2.0
    %v765 = vadd.f32 %v709, 2.0
    %v766 = vadd.f32 %v711, 2.0
    %v767 = vadd.f32 %v713, 2.0
    %v768 = vadd.f32 %v715, 2.0
    %v769 = vadd.f32 %v717, 2.0
    %v770 = vadd.f32 %v719, 2.0
    %v771 = vadd.f32 %v721, 2.0
    %v772 = vadd.f32 %v723, 2.0
    %v773 = vadd.f32 %v725, 2.0
    %v774 = vadd.f32 %v727, 2.0
    %v775 = vadd.f32 %v729, 2.0
    %v776 = vmul.f32 %v639, %v730
    %v777 = vmul.f32 %v641, %v731
    %v778 = vmul.f32 %v643, %v732
    %v779 = vmul.f32 %v645, %v733
    %v780 = vmul.f32 %v647, %v734
    %v781 = vmul.f32 %v649, %v735
    %v782 = vmul.f32 %v651, %v736
    %v783 = vmul.f32 %v653, %v737
    %v784 = vmul.f32 %v655, %v738
    %v785 = vmul.f32 %v657, %v739
    %v786 = vmul.f32 %v659, %v740
    %v787 = vmul.f32 %v661, %v741
    %v788 = vmul.f32 %v663, %v742
    %v789 = vmul.f32 %v665, %v743
    %v790 = vmul.f32 %v667, %v744
    %v791 = vmul.f32 %v669, %v745
    %v792 = vmul.f32 %v671, %v746
    %v793 = vmul.f32 %v673, %v747
    %v794 = vmul.f32 %v675, %v748
    %v795 = vmul.f32 %v677, %v749
    %v796 = vmul.f32 %v679, %v750
    %v797 = vmul.f32 %v681, %v751
    %v798 = vmul.f32 %v683, %v752
    %v799 = vmul.f32 %v685, %v753
    %v800 = vmul.f32 %v687, %v754
    %v801 = vmul.f32 %v689, %v755
    %v802 = vmul.f32 %v691, %v756
    %v803 = vmul.f32 %v693, %v757
    %v804 = vmul.f32 %v695, %v758
    %v805 = vmul.f32 %v697, %v759
    %v806 = vmul.f32 %v699, %v760
    %v807 = vmul.f32 %v701, %v761
    %v808 = vmul.f32 %v703, %v762
    %v809 = vmul.f32 %v705, %v763
    %v810 = vmul.f32 %v707, %v764
    %v811 = vmul.f32 %v709, %v765
    %v812 = vmul.f32 %v711, %v766
    %v813 = vmul.f32 %v713, %v767
    %v814 = vmul.f32 %v715, %v768
    %v815 = vmul.f32 %v717, %v769
    %v816 = vmul.f32 %v719, %v770
    %v817 = vmul.f32 %v721, %v771
    %v818 = vmul.f32 %v723, %v772
    %v819 = vmul.f32 %v725, %v773
    %v820 = vmul.f32 %v727, %v774
    %v821 = vmul.f32 %v729, %v775
    %v822 = vmul.f32 %v432, %v776
    %v823 = vmul.f32 %v521, %v777
    %v824 = vmul.f32 %v435, %v778
    %v825 = vmul.f32 %v524, %v779
    %v826 = vmul.f32 %v438, %v780
    %v827 = vmul.f32 %v527, %v781
    %v828 = vmul.f32 %v441, %v782
    %v829 = vmul.f32 %v530, %v783
    %v830 = vmul.f32 %v444, %v784
    %v831 = vmul.f32 %v533, %v785
    %v832 = vmul.f32 %v447, %v786
    %v833 = vmul.f32 %v536, %v787
    %v834 = vmul.f32 %v450, %v788
    %v835 = vmul.f32 %v539, %v789
    %v836 = vmul.f32 %v453, %v790
    %v837 = vmul.f32 %v542, %v791
    %v838 = vmul.f32 %v456, %v792
    %v839 = vmul.f32 %v545, %v793
    %v840 = vmul.f32 %v459, %v794
    %v841 = vmul.f32 %v548, %v795
    %v842 = vmul.f32 %v462, %v796
    %v843 = vmul.f32 %v551, %v797
    %v844 = vmul.f32 %v465, %v798
    %v845 = vmul.f32 %v554, %v799
    %v846 = vmul.f32 %v468, %v800
    %v847 = vmul.f32 %v557, %v801
    %v848 = vmul.f32 %v471, %v802
    %v849 = vmul.f32 %v560, %v803
    %v850 = vmul.f32 %v474, %v804
    %v851 = vmul.f32 %v563, %v805
    %v852 = vmul.f32 %v477, %v806
    %v853 = vmul.f32 %v566, %v807
    %v854 = vmul.f32 %v480, %v808
    %v855 = vmul.f32 %v569, %v809
    %v856 = vmul.f32 %v483, %v810
    %v857 = vmul.f32 %v572, %v811
    %v858 = vmul.f32 %v486, %v812
    %v859 = vmul.f32 %v575, %v813
    %v860 = vmul.f32 %v489, %v814
    %v861 = vmul.f32 %v578, %v815
    %v862 = vmul.f32 %v492, %v816
    %v863 = vmul.f32 %v581, %v817
    %v864 = vmul.f32 %v495, %v818
    %v865 = vmul.f32 %v584, %v819
    %v866 = vmul.f32 %v498, %v820
    %v867 = vmul.f32 %v587, %v821
    %v868 = vadd.f32 %v776, 2.0
    %v869 = vadd.f32 %v777, 2.0
    %v870 = vadd.f32 %v778, 2.0
    %v871 = vadd.f32 %v779, 2.0
    %v872 = vadd.f32 %v780, 2.0
    %v873 = vadd.f32 %v781, 2.0
    %v874 = vadd.f32 %v782, 2.0
    %v875 = vadd.f32 %v783, 2.0
    %v876 = vadd.f32 %v784, 2.0
    %v877 = vadd.f32 %v785, 2.0
    %v878 = vadd.f32 %v786, 2.0
    %v879 = vadd.f32 %v787, 2.0
    %v880 = vadd.f32 %v788, 2.0
    %v881 = vadd.f32 %v789, 2.0
    %v882 = vadd.f32 %v790, 2.0
    %v883 = vadd.f32 %v791, 2.0
    %v884 = vadd.f32 %v792, 2.0
    %v885 = vadd.f32 %v793, 2.0
    %v886 = vadd.f32 %v794, 2.0
    %v887 = vadd.f32 %v795, 2.0
    %v888 = vadd.f32 %v796, 2.0
    %v889 = vadd.f32 %v797, 2.0
    %v890 = vadd.f32 %v798, 2.0
    %v891 = vadd.f32 %v799, 2.0
    %v892 = vadd.f32 %v800, 2.0
    %v893 = vadd.f32 %v801, 2.0
    %v894 = vadd.f32 %v802, 2.0
    %v895 = vadd.f32 %v803, 2.0
    %v896 = vadd.f32 %v804, 2.0
    %v897 = vadd.f32 %v805, 2.0
    %v898 = vadd.f32 %v806, 2.0
    %v899 = vadd.f32 %v807, 2.0
    %v900 = vadd.f32 %v808, 2.0
    %v901 = vadd.f32 %v809, 2.0
    %v902 = vadd.f32 %v810, 2.0
    %v903 = vadd.f32 %v811, 2.0
    %v904 = vadd.f32 %v812, 2.0
    %v905 = vadd.f32 %v813, 2.0
    %v906 = vadd.f32 %v814, 2.0
    %v907 = vadd.f32 %v815, 2.0
    %v908 = vadd.f32 %v816, 2.0
    %v909 = vadd.f32 %v817, 2.0
    %v910 = vadd.f32 %v818, 2.0
    %v911 = vadd.f32 %v819, 2.0
    %v912 = vadd.f32 %v820, 2.0
    %v913 = vadd.f32 %v821, 2.0
    %v914 = vrcp.pop %v868
    %v915 = vmul.f32 %v868, %v914
    %v916 = vsub.f32 1.0, %v915
    %v917 = vmul.f32 %v914, %v916
    %v918 = vadd.f32 %v914, %v917
    %vm919 = vweird.f32 %v868
    %vm920 = vweird.f32 %v914
    %vm921 = vmor %vm919, %vm920
    %v922 = vsel %vm921, %v914, %v918
    %v923 = vand.u32 2147483647, %v868
    %vm924 = vcmp.eq.f32.partialorder %v923, 8.507059e+37
    %v925 = vand.u32 %v868, 2147483648
    %v926 = vor.u32 1.1754944e-38, %v925
    %v927 = vsel %vm924, %v926, %v922
    %v928 = vrcp.pop %v869
    %v929 = vmul.f32 %v869, %v928
    %v930 = vsub.f32 1.0, %v929
    %v931 = vmul.f32 %v928, %v930
    %v932 = vadd.f32 %v928, %v931
    %vm933 = vweird.f32 %v869
    %vm934 = vweird.f32 %v928
    %vm935 = vmor %vm933, %vm934
    %v936 = vsel %vm935, %v928, %v932
    %v937 = vand.u32 2147483647, %v869
    %vm938 = vcmp.eq.f32.partialorder %v937, 8.507059e+37
    %v939 = vand.u32 %v869, 2147483648
    %v940 = vor.u32 1.1754944e-38, %v939
    %v941 = vsel %vm938, %v940, %v936
    %v942 = vrcp.pop %v870
    %v943 = vmul.f32 %v870, %v942
    %v944 = vsub.f32 1.0, %v943
    %v945 = vmul.f32 %v942, %v944
    %v946 = vadd.f32 %v942, %v945
    %vm947 = vweird.f32 %v870
    %vm948 = vweird.f32 %v942
    %vm949 = vmor %vm947, %vm948
    %v950 = vsel %vm949, %v942, %v946
    %v951 = vand.u32 2147483647, %v870
    %vm952 = vcmp.eq.f32.partialorder %v951, 8.507059e+37
    %v953 = vand.u32 %v870, 2147483648
    %v954 = vor.u32 1.1754944e-38, %v953
    %v955 = vsel %vm952, %v954, %v950
    %v956 = vrcp.pop %v871
    %v957 = vmul.f32 %v871, %v956
    %v958 = vsub.f32 1.0, %v957
    %v959 = vmul.f32 %v956, %v958
    %v960 = vadd.f32 %v956, %v959
    %vm961 = vweird.f32 %v871
    %vm962 = vweird.f32 %v956
    %vm963 = vmor %vm961, %vm962
    %v964 = vsel %vm963, %v956, %v960
    %v965 = vand.u32 2147483647, %v871
    %vm966 = vcmp.eq.f32.partialorder %v965, 8.507059e+37
    %v967 = vand.u32 %v871, 2147483648
    %v968 = vor.u32 1.1754944e-38, %v967
    %v969 = vsel %vm966, %v968, %v964
    %v970 = vrcp.pop %v872
    %v971 = vmul.f32 %v872, %v970
    %v972 = vsub.f32 1.0, %v971
    %v973 = vmul.f32 %v970, %v972
    %v974 = vadd.f32 %v970, %v973
    %vm975 = vweird.f32 %v872
    %vm976 = vweird.f32 %v970
    %vm977 = vmor %vm975, %vm976
    %v978 = vsel %vm977, %v970, %v974
    %v979 = vand.u32 2147483647, %v872
    %vm980 = vcmp.eq.f32.partialorder %v979, 8.507059e+37
    %v981 = vand.u32 %v872, 2147483648
    %v982 = vor.u32 1.1754944e-38, %v981
    %v983 = vsel %vm980, %v982, %v978
    %v984 = vrcp.pop %v873
    %v985 = vmul.f32 %v873, %v984
    %v986 = vsub.f32 1.0, %v985
    %v987 = vmul.f32 %v984, %v986
    %v988 = vadd.f32 %v984, %v987
    %vm989 = vweird.f32 %v873
    %vm990 = vweird.f32 %v984
    %vm991 = vmor %vm989, %vm990
    %v992 = vsel %vm991, %v984, %v988
    %v993 = vand.u32 2147483647, %v873
    %vm994 = vcmp.eq.f32.partialorder %v993, 8.507059e+37
    %v995 = vand.u32 %v873, 2147483648
    %v996 = vor.u32 1.1754944e-38, %v995
    %v997 = vsel %vm994, %v996, %v992
    %v998 = vrcp.pop %v874
    %v999 = vmul.f32 %v874, %v998
    %v1000 = vsub.f32 1.0, %v999
    %v1001 = vmul.f32 %v998, %v1000
    %v1002 = vadd.f32 %v998, %v1001
    %vm1003 = vweird.f32 %v874
    %vm1004 = vweird.f32 %v998
    %vm1005 = vmor %vm1003, %vm1004
    %v1006 = vsel %vm1005, %v998, %v1002
    %v1007 = vand.u32 2147483647, %v874
    %vm1008 = vcmp.eq.f32.partialorder %v1007, 8.507059e+37
    %v1009 = vand.u32 %v874, 2147483648
    %v1010 = vor.u32 1.1754944e-38, %v1009
    %v1011 = vsel %vm1008, %v1010, %v1006
    %v1012 = vrcp.pop %v875
    %v1013 = vmul.f32 %v875, %v1012
    %v1014 = vsub.f32 1.0, %v1013
    %v1015 = vmul.f32 %v1012, %v1014
    %v1016 = vadd.f32 %v1012, %v1015
    %vm1017 = vweird.f32 %v875
    %vm1018 = vweird.f32 %v1012
    %vm1019 = vmor %vm1017, %vm1018
    %v1020 = vsel %vm1019, %v1012, %v1016
    %v1021 = vand.u32 2147483647, %v875
    %vm1022 = vcmp.eq.f32.partialorder %v1021, 8.507059e+37
    %v1023 = vand.u32 %v875, 2147483648
    %v1024 = vor.u32 1.1754944e-38, %v1023
    %v1025 = vsel %vm1022, %v1024, %v1020
    %v1026 = vrcp.pop %v876
    %v1027 = vmul.f32 %v876, %v1026
    %v1028 = vsub.f32 1.0, %v1027
    %v1029 = vmul.f32 %v1026, %v1028
    %v1030 = vadd.f32 %v1026, %v1029
    %vm1031 = vweird.f32 %v876
    %vm1032 = vweird.f32 %v1026
    %vm1033 = vmor %vm1031, %vm1032
    %v1034 = vsel %vm1033, %v1026, %v1030
    %v1035 = vand.u32 2147483647, %v876
    %vm1036 = vcmp.eq.f32.partialorder %v1035, 8.507059e+37
    %v1037 = vand.u32 %v876, 2147483648
    %v1038 = vor.u32 1.1754944e-38, %v1037
    %v1039 = vsel %vm1036, %v1038, %v1034
    %v1040 = vrcp.pop %v877
    %v1041 = vmul.f32 %v877, %v1040
    %v1042 = vsub.f32 1.0, %v1041
    %v1043 = vmul.f32 %v1040, %v1042
    %v1044 = vadd.f32 %v1040, %v1043
    %vm1045 = vweird.f32 %v877
    %vm1046 = vweird.f32 %v1040
    %vm1047 = vmor %vm1045, %vm1046
    %v1048 = vsel %vm1047, %v1040, %v1044
    %v1049 = vand.u32 2147483647, %v877
    %vm1050 = vcmp.eq.f32.partialorder %v1049, 8.507059e+37
    %v1051 = vand.u32 %v877, 2147483648
    %v1052 = vor.u32 1.1754944e-38, %v1051
    %v1053 = vsel %vm1050, %v1052, %v1048
    %v1054 = vrcp.pop %v878
    %v1055 = vmul.f32 %v878, %v1054
    %v1056 = vsub.f32 1.0, %v1055
    %v1057 = vmul.f32 %v1054, %v1056
    %v1058 = vadd.f32 %v1054, %v1057
    %vm1059 = vweird.f32 %v878
    %vm1060 = vweird.f32 %v1054
    %vm1061 = vmor %vm1059, %vm1060
    %v1062 = vsel %vm1061, %v1054, %v1058
    %v1063 = vand.u32 2147483647, %v878
    %vm1064 = vcmp.eq.f32.partialorder %v1063, 8.507059e+37
    %v1065 = vand.u32 %v878, 2147483648
    %v1066 = vor.u32 1.1754944e-38, %v1065
    %v1067 = vsel %vm1064, %v1066, %v1062
    %v1068 = vrcp.pop %v879
    %v1069 = vmul.f32 %v879, %v1068
    %v1070 = vsub.f32 1.0, %v1069
    %v1071 = vmul.f32 %v1068, %v1070
    %v1072 = vadd.f32 %v1068, %v1071
    %vm1073 = vweird.f32 %v879
    %vm1074 = vweird.f32 %v1068
    %vm1075 = vmor %vm1073, %vm1074
    %v1076 = vsel %vm1075, %v1068, %v1072
    %v1077 = vand.u32 2147483647, %v879
    %vm1078 = vcmp.eq.f32.partialorder %v1077, 8.507059e+37
    %v1079 = vand.u32 %v879, 2147483648
    %v1080 = vor.u32 1.1754944e-38, %v1079
    %v1081 = vsel %vm1078, %v1080, %v1076
    %v1082 = vrcp.pop %v880
    %v1083 = vmul.f32 %v880, %v1082
    %v1084 = vsub.f32 1.0, %v1083
    %v1085 = vmul.f32 %v1082, %v1084
    %v1086 = vadd.f32 %v1082, %v1085
    %vm1087 = vweird.f32 %v880
    %vm1088 = vweird.f32 %v1082
    %vm1089 = vmor %vm1087, %vm1088
    %v1090 = vsel %vm1089, %v1082, %v1086
    %v1091 = vand.u32 2147483647, %v880
    %vm1092 = vcmp.eq.f32.partialorder %v1091, 8.507059e+37
    %v1093 = vand.u32 %v880, 2147483648
    %v1094 = vor.u32 1.1754944e-38, %v1093
    %v1095 = vsel %vm1092, %v1094, %v1090
    %v1096 = vrcp.pop %v881
    %v1097 = vmul.f32 %v881, %v1096
    %v1098 = vsub.f32 1.0, %v1097
    %v1099 = vmul.f32 %v1096, %v1098
    %v1100 = vadd.f32 %v1096, %v1099
    %vm1101 = vweird.f32 %v881
    %vm1102 = vweird.f32 %v1096
    %vm1103 = vmor %vm1101, %vm1102
    %v1104 = vsel %vm1103, %v1096, %v1100
    %v1105 = vand.u32 2147483647, %v881
    %vm1106 = vcmp.eq.f32.partialorder %v1105, 8.507059e+37
    %v1107 = vand.u32 %v881, 2147483648
    %v1108 = vor.u32 1.1754944e-38, %v1107
    %v1109 = vsel %vm1106, %v1108, %v1104
    %v1110 = vrcp.pop %v882
    %v1111 = vmul.f32 %v882, %v1110
    %v1112 = vsub.f32 1.0, %v1111
    %v1113 = vmul.f32 %v1110, %v1112
    %v1114 = vadd.f32 %v1110, %v1113
    %vm1115 = vweird.f32 %v882
    %vm1116 = vweird.f32 %v1110
    %vm1117 = vmor %vm1115, %vm1116
    %v1118 = vsel %vm1117, %v1110, %v1114
    %v1119 = vand.u32 2147483647, %v882
    %vm1120 = vcmp.eq.f32.partialorder %v1119, 8.507059e+37
    %v1121 = vand.u32 %v882, 2147483648
    %v1122 = vor.u32 1.1754944e-38, %v1121
    %v1123 = vsel %vm1120, %v1122, %v1118
    %v1124 = vrcp.pop %v883
    %v1125 = vmul.f32 %v883, %v1124
    %v1126 = vsub.f32 1.0, %v1125
    %v1127 = vmul.f32 %v1124, %v1126
    %v1128 = vadd.f32 %v1124, %v1127
    %vm1129 = vweird.f32 %v883
    %vm1130 = vweird.f32 %v1124
    %vm1131 = vmor %vm1129, %vm1130
    %v1132 = vsel %vm1131, %v1124, %v1128
    %v1133 = vand.u32 2147483647, %v883
    %vm1134 = vcmp.eq.f32.partialorder %v1133, 8.507059e+37
    %v1135 = vand.u32 %v883, 2147483648
    %v1136 = vor.u32 1.1754944e-38, %v1135
    %v1137 = vsel %vm1134, %v1136, %v1132
    %v1138 = vrcp.pop %v884
    %v1139 = vmul.f32 %v884, %v1138
    %v1140 = vsub.f32 1.0, %v1139
    %v1141 = vmul.f32 %v1138, %v1140
    %v1142 = vadd.f32 %v1138, %v1141
    %vm1143 = vweird.f32 %v884
    %vm1144 = vweird.f32 %v1138
    %vm1145 = vmor %vm1143, %vm1144
    %v1146 = vsel %vm1145, %v1138, %v1142
    %v1147 = vand.u32 2147483647, %v884
    %vm1148 = vcmp.eq.f32.partialorder %v1147, 8.507059e+37
    %v1149 = vand.u32 %v884, 2147483648
    %v1150 = vor.u32 1.1754944e-38, %v1149
    %v1151 = vsel %vm1148, %v1150, %v1146
    %v1152 = vrcp.pop %v885
    %v1153 = vmul.f32 %v885, %v1152
    %v1154 = vsub.f32 1.0, %v1153
    %v1155 = vmul.f32 %v1152, %v1154
    %v1156 = vadd.f32 %v1152, %v1155
    %vm1157 = vweird.f32 %v885
    %vm1158 = vweird.f32 %v1152
    %vm1159 = vmor %vm1157, %vm1158
    %v1160 = vsel %vm1159, %v1152, %v1156
    %v1161 = vand.u32 2147483647, %v885
    %vm1162 = vcmp.eq.f32.partialorder %v1161, 8.507059e+37
    %v1163 = vand.u32 %v885, 2147483648
    %v1164 = vor.u32 1.1754944e-38, %v1163
    %v1165 = vsel %vm1162, %v1164, %v1160
    %v1166 = vrcp.pop %v886
    %v1167 = vmul.f32 %v886, %v1166
    %v1168 = vsub.f32 1.0, %v1167
    %v1169 = vmul.f32 %v1166, %v1168
    %v1170 = vadd.f32 %v1166, %v1169
    %vm1171 = vweird.f32 %v886
    %vm1172 = vweird.f32 %v1166
    %vm1173 = vmor %vm1171, %vm1172
    %v1174 = vsel %vm1173, %v1166, %v1170
    %v1175 = vand.u32 2147483647, %v886
    %vm1176 = vcmp.eq.f32.partialorder %v1175, 8.507059e+37
    %v1177 = vand.u32 %v886, 2147483648
    %v1178 = vor.u32 1.1754944e-38, %v1177
    %v1179 = vsel %vm1176, %v1178, %v1174
    %v1180 = vrcp.pop %v887
    %v1181 = vmul.f32 %v887, %v1180
    %v1182 = vsub.f32 1.0, %v1181
    %v1183 = vmul.f32 %v1180, %v1182
    %v1184 = vadd.f32 %v1180, %v1183
    %vm1185 = vweird.f32 %v887
    %vm1186 = vweird.f32 %v1180
    %vm1187 = vmor %vm1185, %vm1186
    %v1188 = vsel %vm1187, %v1180, %v1184
    %v1189 = vand.u32 2147483647, %v887
    %vm1190 = vcmp.eq.f32.partialorder %v1189, 8.507059e+37
    %v1191 = vand.u32 %v887, 2147483648
    %v1192 = vor.u32 1.1754944e-38, %v1191
    %v1193 = vsel %vm1190, %v1192, %v1188
    %v1194 = vrcp.pop %v888
    %v1195 = vmul.f32 %v888, %v1194
    %v1196 = vsub.f32 1.0, %v1195
    %v1197 = vmul.f32 %v1194, %v1196
    %v1198 = vadd.f32 %v1194, %v1197
    %vm1199 = vweird.f32 %v888
    %vm1200 = vweird.f32 %v1194
    %vm1201 = vmor %vm1199, %vm1200
    %v1202 = vsel %vm1201, %v1194, %v1198
    %v1203 = vand.u32 2147483647, %v888
    %vm1204 = vcmp.eq.f32.partialorder %v1203, 8.507059e+37
    %v1205 = vand.u32 %v888, 2147483648
    %v1206 = vor.u32 1.1754944e-38, %v1205
    %v1207 = vsel %vm1204, %v1206, %v1202
    %v1208 = vrcp.pop %v889
    %v1209 = vmul.f32 %v889, %v1208
    %v1210 = vsub.f32 1.0, %v1209
    %v1211 = vmul.f32 %v1208, %v1210
    %v1212 = vadd.f32 %v1208, %v1211
    %vm1213 = vweird.f32 %v889
    %vm1214 = vweird.f32 %v1208
    %vm1215 = vmor %vm1213, %vm1214
    %v1216 = vsel %vm1215, %v1208, %v1212
    %v1217 = vand.u32 2147483647, %v889
    %vm1218 = vcmp.eq.f32.partialorder %v1217, 8.507059e+37
    %v1219 = vand.u32 %v889, 2147483648
    %v1220 = vor.u32 1.1754944e-38, %v1219
    %v1221 = vsel %vm1218, %v1220, %v1216
    %v1222 = vrcp.pop %v890
    %v1223 = vmul.f32 %v890, %v1222
    %v1224 = vsub.f32 1.0, %v1223
    %v1225 = vmul.f32 %v1222, %v1224
    %v1226 = vadd.f32 %v1222, %v1225
    %vm1227 = vweird.f32 %v890
    %vm1228 = vweird.f32 %v1222
    %vm1229 = vmor %vm1227, %vm1228
    %v1230 = vsel %vm1229, %v1222, %v1226
    %v1231 = vand.u32 2147483647, %v890
    %vm1232 = vcmp.eq.f32.partialorder %v1231, 8.507059e+37
    %v1233 = vand.u32 %v890, 2147483648
    %v1234 = vor.u32 1.1754944e-38, %v1233
    %v1235 = vsel %vm1232, %v1234, %v1230
    %v1236 = vrcp.pop %v891
    %v1237 = vmul.f32 %v891, %v1236
    %v1238 = vsub.f32 1.0, %v1237
    %v1239 = vmul.f32 %v1236, %v1238
    %v1240 = vadd.f32 %v1236, %v1239
    %vm1241 = vweird.f32 %v891
    %vm1242 = vweird.f32 %v1236
    %vm1243 = vmor %vm1241, %vm1242
    %v1244 = vsel %vm1243, %v1236, %v1240
    %v1245 = vand.u32 2147483647, %v891
    %vm1246 = vcmp.eq.f32.partialorder %v1245, 8.507059e+37
    %v1247 = vand.u32 %v891, 2147483648
    %v1248 = vor.u32 1.1754944e-38, %v1247
    %v1249 = vsel %vm1246, %v1248, %v1244
    %v1250 = vrcp.pop %v892
    %v1251 = vmul.f32 %v892, %v1250
    %v1252 = vsub.f32 1.0, %v1251
    %v1253 = vmul.f32 %v1250, %v1252
    %v1254 = vadd.f32 %v1250, %v1253
    %vm1255 = vweird.f32 %v892
    %vm1256 = vweird.f32 %v1250
    %vm1257 = vmor %vm1255, %vm1256
    %v1258 = vsel %vm1257, %v1250, %v1254
    %v1259 = vand.u32 2147483647, %v892
    %vm1260 = vcmp.eq.f32.partialorder %v1259, 8.507059e+37
    %v1261 = vand.u32 %v892, 2147483648
    %v1262 = vor.u32 1.1754944e-38, %v1261
    %v1263 = vsel %vm1260, %v1262, %v1258
    %v1264 = vrcp.pop %v893
    %v1265 = vmul.f32 %v893, %v1264
    %v1266 = vsub.f32 1.0, %v1265
    %v1267 = vmul.f32 %v1264, %v1266
    %v1268 = vadd.f32 %v1264, %v1267
    %vm1269 = vweird.f32 %v893
    %vm1270 = vweird.f32 %v1264
    %vm1271 = vmor %vm1269, %vm1270
    %v1272 = vsel %vm1271, %v1264, %v1268
    %v1273 = vand.u32 2147483647, %v893
    %vm1274 = vcmp.eq.f32.partialorder %v1273, 8.507059e+37
    %v1275 = vand.u32 %v893, 2147483648
    %v1276 = vor.u32 1.1754944e-38, %v1275
    %v1277 = vsel %vm1274, %v1276, %v1272
    %v1278 = vrcp.pop %v894
    %v1279 = vmul.f32 %v894, %v1278
    %v1280 = vsub.f32 1.0, %v1279
    %v1281 = vmul.f32 %v1278, %v1280
    %v1282 = vadd.f32 %v1278, %v1281
    %vm1283 = vweird.f32 %v894
    %vm1284 = vweird.f32 %v1278
    %vm1285 = vmor %vm1283, %vm1284
    %v1286 = vsel %vm1285, %v1278, %v1282
    %v1287 = vand.u32 2147483647, %v894
    %vm1288 = vcmp.eq.f32.partialorder %v1287, 8.507059e+37
    %v1289 = vand.u32 %v894, 2147483648
    %v1290 = vor.u32 1.1754944e-38, %v1289
    %v1291 = vsel %vm1288, %v1290, %v1286
    %v1292 = vrcp.pop %v895
    %v1293 = vmul.f32 %v895, %v1292
    %v1294 = vsub.f32 1.0, %v1293
    %v1295 = vmul.f32 %v1292, %v1294
    %v1296 = vadd.f32 %v1292, %v1295
    %vm1297 = vweird.f32 %v895
    %vm1298 = vweird.f32 %v1292
    %vm1299 = vmor %vm1297, %vm1298
    %v1300 = vsel %vm1299, %v1292, %v1296
    %v1301 = vand.u32 2147483647, %v895
    %vm1302 = vcmp.eq.f32.partialorder %v1301, 8.507059e+37
    %v1303 = vand.u32 %v895, 2147483648
    %v1304 = vor.u32 1.1754944e-38, %v1303
    %v1305 = vsel %vm1302, %v1304, %v1300
    %v1306 = vrcp.pop %v896
    %v1307 = vmul.f32 %v896, %v1306
    %v1308 = vsub.f32 1.0, %v1307
    %v1309 = vmul.f32 %v1306, %v1308
    %v1310 = vadd.f32 %v1306, %v1309
    %vm1311 = vweird.f32 %v896
    %vm1312 = vweird.f32 %v1306
    %vm1313 = vmor %vm1311, %vm1312
    %v1314 = vsel %vm1313, %v1306, %v1310
    %v1315 = vand.u32 2147483647, %v896
    %vm1316 = vcmp.eq.f32.partialorder %v1315, 8.507059e+37
    %v1317 = vand.u32 %v896, 2147483648
    %v1318 = vor.u32 1.1754944e-38, %v1317
    %v1319 = vsel %vm1316, %v1318, %v1314
    %v1320 = vrcp.pop %v897
    %v1321 = vmul.f32 %v897, %v1320
    %v1322 = vsub.f32 1.0, %v1321
    %v1323 = vmul.f32 %v1320, %v1322
    %v1324 = vadd.f32 %v1320, %v1323
    %vm1325 = vweird.f32 %v897
    %vm1326 = vweird.f32 %v1320
    %vm1327 = vmor %vm1325, %vm1326
    %v1328 = vsel %vm1327, %v1320, %v1324
    %v1329 = vand.u32 2147483647, %v897
    %vm1330 = vcmp.eq.f32.partialorder %v1329, 8.507059e+37
    %v1331 = vand.u32 %v897, 2147483648
    %v1332 = vor.u32 1.1754944e-38, %v1331
    %v1333 = vsel %vm1330, %v1332, %v1328
    %v1334 = vrcp.pop %v898
    %v1335 = vmul.f32 %v898, %v1334
    %v1336 = vsub.f32 1.0, %v1335
    %v1337 = vmul.f32 %v1334, %v1336
    %v1338 = vadd.f32 %v1334, %v1337
    %vm1339 = vweird.f32 %v898
    %vm1340 = vweird.f32 %v1334
    %vm1341 = vmor %vm1339, %vm1340
    %v1342 = vsel %vm1341, %v1334, %v1338
    %v1343 = vand.u32 2147483647, %v898
    %vm1344 = vcmp.eq.f32.partialorder %v1343, 8.507059e+37
    %v1345 = vand.u32 %v898, 2147483648
    %v1346 = vor.u32 1.1754944e-38, %v1345
    %v1347 = vsel %vm1344, %v1346, %v1342
    %v1348 = vrcp.pop %v899
    %v1349 = vmul.f32 %v899, %v1348
    %v1350 = vsub.f32 1.0, %v1349
    %v1351 = vmul.f32 %v1348, %v1350
    %v1352 = vadd.f32 %v1348, %v1351
    %vm1353 = vweird.f32 %v899
    %vm1354 = vweird.f32 %v1348
    %vm1355 = vmor %vm1353, %vm1354
    %v1356 = vsel %vm1355, %v1348, %v1352
    %v1357 = vand.u32 2147483647, %v899
    %vm1358 = vcmp.eq.f32.partialorder %v1357, 8.507059e+37
    %v1359 = vand.u32 %v899, 2147483648
    %v1360 = vor.u32 1.1754944e-38, %v1359
    %v1361 = vsel %vm1358, %v1360, %v1356
    %v1362 = vrcp.pop %v900
    %v1363 = vmul.f32 %v900, %v1362
    %v1364 = vsub.f32 1.0, %v1363
    %v1365 = vmul.f32 %v1362, %v1364
    %v1366 = vadd.f32 %v1362, %v1365
    %vm1367 = vweird.f32 %v900
    %vm1368 = vweird.f32 %v1362
    %vm1369 = vmor %vm1367, %vm1368
    %v1370 = vsel %vm1369, %v1362, %v1366
    %v1371 = vand.u32 2147483647, %v900
    %vm1372 = vcmp.eq.f32.partialorder %v1371, 8.507059e+37
    %v1373 = vand.u32 %v900, 2147483648
    %v1374 = vor.u32 1.1754944e-38, %v1373
    %v1375 = vsel %vm1372, %v1374, %v1370
    %v1376 = vrcp.pop %v901
    %v1377 = vmul.f32 %v901, %v1376
    %v1378 = vsub.f32 1.0, %v1377
    %v1379 = vmul.f32 %v1376, %v1378
    %v1380 = vadd.f32 %v1376, %v1379
    %vm1381 = vweird.f32 %v901
    %vm1382 = vweird.f32 %v1376
    %vm1383 = vmor %vm1381, %vm1382
    %v1384 = vsel %vm1383, %v1376, %v1380
    %v1385 = vand.u32 2147483647, %v901
    %vm1386 = vcmp.eq.f32.partialorder %v1385, 8.507059e+37
    %v1387 = vand.u32 %v901, 2147483648
    %v1388 = vor.u32 1.1754944e-38, %v1387
    %v1389 = vsel %vm1386, %v1388, %v1384
    %v1390 = vrcp.pop %v902
    %v1391 = vmul.f32 %v902, %v1390
    %v1392 = vsub.f32 1.0, %v1391
    %v1393 = vmul.f32 %v1390, %v1392
    %v1394 = vadd.f32 %v1390, %v1393
    %vm1395 = vweird.f32 %v902
    %vm1396 = vweird.f32 %v1390
    %vm1397 = vmor %vm1395, %vm1396
    %v1398 = vsel %vm1397, %v1390, %v1394
    %v1399 = vand.u32 2147483647, %v902
    %vm1400 = vcmp.eq.f32.partialorder %v1399, 8.507059e+37
    %v1401 = vand.u32 %v902, 2147483648
    %v1402 = vor.u32 1.1754944e-38, %v1401
    %v1403 = vsel %vm1400, %v1402, %v1398
    %v1404 = vrcp.pop %v903
    %v1405 = vmul.f32 %v903, %v1404
    %v1406 = vsub.f32 1.0, %v1405
    %v1407 = vmul.f32 %v1404, %v1406
    %v1408 = vadd.f32 %v1404, %v1407
    %vm1409 = vweird.f32 %v903
    %vm1410 = vweird.f32 %v1404
    %vm1411 = vmor %vm1409, %vm1410
    %v1412 = vsel %vm1411, %v1404, %v1408
    %v1413 = vand.u32 2147483647, %v903
    %vm1414 = vcmp.eq.f32.partialorder %v1413, 8.507059e+37
    %v1415 = vand.u32 %v903, 2147483648
    %v1416 = vor.u32 1.1754944e-38, %v1415
    %v1417 = vsel %vm1414, %v1416, %v1412
    %v1418 = vrcp.pop %v904
    %v1419 = vmul.f32 %v904, %v1418
    %v1420 = vsub.f32 1.0, %v1419
    %v1421 = vmul.f32 %v1418, %v1420
    %v1422 = vadd.f32 %v1418, %v1421
    %vm1423 = vweird.f32 %v904
    %vm1424 = vweird.f32 %v1418
    %vm1425 = vmor %vm1423, %vm1424
    %v1426 = vsel %vm1425, %v1418, %v1422
    %v1427 = vand.u32 2147483647, %v904
    %vm1428 = vcmp.eq.f32.partialorder %v1427, 8.507059e+37
    %v1429 = vand.u32 %v904, 2147483648
    %v1430 = vor.u32 1.1754944e-38, %v1429
    %v1431 = vsel %vm1428, %v1430, %v1426
    %v1432 = vrcp.pop %v905
    %v1433 = vmul.f32 %v905, %v1432
    %v1434 = vsub.f32 1.0, %v1433
    %v1435 = vmul.f32 %v1432, %v1434
    %v1436 = vadd.f32 %v1432, %v1435
    %vm1437 = vweird.f32 %v905
    %vm1438 = vweird.f32 %v1432
    %vm1439 = vmor %vm1437, %vm1438
    %v1440 = vsel %vm1439, %v1432, %v1436
    %v1441 = vand.u32 2147483647, %v905
    %vm1442 = vcmp.eq.f32.partialorder %v1441, 8.507059e+37
    %v1443 = vand.u32 %v905, 2147483648
    %v1444 = vor.u32 1.1754944e-38, %v1443
    %v1445 = vsel %vm1442, %v1444, %v1440
    %v1446 = vrcp.pop %v906
    %v1447 = vmul.f32 %v906, %v1446
    %v1448 = vsub.f32 1.0, %v1447
    %v1449 = vmul.f32 %v1446, %v1448
    %v1450 = vadd.f32 %v1446, %v1449
    %vm1451 = vweird.f32 %v906
    %vm1452 = vweird.f32 %v1446
    %vm1453 = vmor %vm1451, %vm1452
    %v1454 = vsel %vm1453, %v1446, %v1450
    %v1455 = vand.u32 2147483647, %v906
    %vm1456 = vcmp.eq.f32.partialorder %v1455, 8.507059e+37
    %v1457 = vand.u32 %v906, 2147483648
    %v1458 = vor.u32 1.1754944e-38, %v1457
    %v1459 = vsel %vm1456, %v1458, %v1454
    %v1460 = vrcp.pop %v907
    %v1461 = vmul.f32 %v907, %v1460
    %v1462 = vsub.f32 1.0, %v1461
    %v1463 = vmul.f32 %v1460, %v1462
    %v1464 = vadd.f32 %v1460, %v1463
    %vm1465 = vweird.f32 %v907
    %vm1466 = vweird.f32 %v1460
    %vm1467 = vmor %vm1465, %vm1466
    %v1468 = vsel %vm1467, %v1460, %v1464
    %v1469 = vand.u32 2147483647, %v907
    %vm1470 = vcmp.eq.f32.partialorder %v1469, 8.507059e+37
    %v1471 = vand.u32 %v907, 2147483648
    %v1472 = vor.u32 1.1754944e-38, %v1471
    %v1473 = vsel %vm1470, %v1472, %v1468
    %v1474 = vrcp.pop %v908
    %v1475 = vmul.f32 %v908, %v1474
    %v1476 = vsub.f32 1.0, %v1475
    %v1477 = vmul.f32 %v1474, %v1476
    %v1478 = vadd.f32 %v1474, %v1477
    %vm1479 = vweird.f32 %v908
    %vm1480 = vweird.f32 %v1474
    %vm1481 = vmor %vm1479, %vm1480
    %v1482 = vsel %vm1481, %v1474, %v1478
    %v1483 = vand.u32 2147483647, %v908
    %vm1484 = vcmp.eq.f32.partialorder %v1483, 8.507059e+37
    %v1485 = vand.u32 %v908, 2147483648
    %v1486 = vor.u32 1.1754944e-38, %v1485
    %v1487 = vsel %vm1484, %v1486, %v1482
    %v1488 = vrcp.pop %v909
    %v1489 = vmul.f32 %v909, %v1488
    %v1490 = vsub.f32 1.0, %v1489
    %v1491 = vmul.f32 %v1488, %v1490
    %v1492 = vadd.f32 %v1488, %v1491
    %vm1493 = vweird.f32 %v909
    %vm1494 = vweird.f32 %v1488
    %vm1495 = vmor %vm1493, %vm1494
    %v1496 = vsel %vm1495, %v1488, %v1492
    %v1497 = vand.u32 2147483647, %v909
    %vm1498 = vcmp.eq.f32.partialorder %v1497, 8.507059e+37
    %v1499 = vand.u32 %v909, 2147483648
    %v1500 = vor.u32 1.1754944e-38, %v1499
    %v1501 = vsel %vm1498, %v1500, %v1496
    %v1502 = vrcp.pop %v910
    %v1503 = vmul.f32 %v910, %v1502
    %v1504 = vsub.f32 1.0, %v1503
    %v1505 = vmul.f32 %v1502, %v1504
    %v1506 = vadd.f32 %v1502, %v1505
    %vm1507 = vweird.f32 %v910
    %vm1508 = vweird.f32 %v1502
    %vm1509 = vmor %vm1507, %vm1508
    %v1510 = vsel %vm1509, %v1502, %v1506
    %v1511 = vand.u32 2147483647, %v910
    %vm1512 = vcmp.eq.f32.partialorder %v1511, 8.507059e+37
    %v1513 = vand.u32 %v910, 2147483648
    %v1514 = vor.u32 1.1754944e-38, %v1513
    %v1515 = vsel %vm1512, %v1514, %v1510
    %v1516 = vrcp.pop %v911
    %v1517 = vmul.f32 %v911, %v1516
    %v1518 = vsub.f32 1.0, %v1517
    %v1519 = vmul.f32 %v1516, %v1518
    %v1520 = vadd.f32 %v1516, %v1519
    %vm1521 = vweird.f32 %v911
    %vm1522 = vweird.f32 %v1516
    %vm1523 = vmor %vm1521, %vm1522
    %v1524 = vsel %vm1523, %v1516, %v1520
    %v1525 = vand.u32 2147483647, %v911
    %vm1526 = vcmp.eq.f32.partialorder %v1525, 8.507059e+37
    %v1527 = vand.u32 %v911, 2147483648
    %v1528 = vor.u32 1.1754944e-38, %v1527
    %v1529 = vsel %vm1526, %v1528, %v1524
    %v1530 = vrcp.pop %v912
    %v1531 = vmul.f32 %v912, %v1530
    %v1532 = vsub.f32 1.0, %v1531
    %v1533 = vmul.f32 %v1530, %v1532
    %v1534 = vadd.f32 %v1530, %v1533
    %vm1535 = vweird.f32 %v912
    %vm1536 = vweird.f32 %v1530
    %vm1537 = vmor %vm1535, %vm1536
    %v1538 = vsel %vm1537, %v1530, %v1534
    %v1539 = vand.u32 2147483647, %v912
    %vm1540 = vcmp.eq.f32.partialorder %v1539, 8.507059e+37
    %v1541 = vand.u32 %v912, 2147483648
    %v1542 = vor.u32 1.1754944e-38, %v1541
    %v1543 = vsel %vm1540, %v1542, %v1538
    %v1544 = vrcp.pop %v913
    %v1545 = vmul.f32 %v913, %v1544
    %v1546 = vsub.f32 1.0, %v1545
    %v1547 = vmul.f32 %v1544, %v1546
    %v1548 = vadd.f32 %v1544, %v1547
    %vm1549 = vweird.f32 %v913
    %vm1550 = vweird.f32 %v1544
    %vm1551 = vmor %vm1549, %vm1550
    %v1552 = vsel %vm1551, %v1544, %v1548
    %v1553 = vand.u32 2147483647, %v913
    %vm1554 = vcmp.eq.f32.partialorder %v1553, 8.507059e+37
    %v1555 = vand.u32 %v913, 2147483648
    %v1556 = vor.u32 1.1754944e-38, %v1555
    %v1557 = vsel %vm1554, %v1556, %v1552
    %v1558 = vmul.f32 %v822, %v927
    %v1559 = vmul.f32 %v823, %v941
    %v1560 = vmul.f32 %v824, %v955
    %v1561 = vmul.f32 %v825, %v969
    %v1562 = vmul.f32 %v826, %v983
    %v1563 = vmul.f32 %v827, %v997
    %v1564 = vmul.f32 %v828, %v1011
    %v1565 = vmul.f32 %v829, %v1025
    %v1566 = vmul.f32 %v830, %v1039
    %v1567 = vmul.f32 %v831, %v1053
    %v1568 = vmul.f32 %v832, %v1067
    %v1569 = vmul.f32 %v833, %v1081
    %v1570 = vmul.f32 %v834, %v1095
    %v1571 = vmul.f32 %v835, %v1109
    %v1572 = vmul.f32 %v836, %v1123
    %v1573 = vmul.f32 %v837, %v1137
    %v1574 = vmul.f32 %v838, %v1151
    %v1575 = vmul.f32 %v839, %v1165
    %v1576 = vmul.f32 %v840, %v1179
    %v1577 = vmul.f32 %v841, %v1193
    %v1578 = vmul.f32 %v842, %v1207
    %v1579 = vmul.f32 %v843, %v1221
    %v1580 = vmul.f32 %v844, %v1235
    %v1581 = vmul.f32 %v845, %v1249
    %v1582 = vmul.f32 %v846, %v1263
    %v1583 = vmul.f32 %v847, %v1277
    %v1584 = vmul.f32 %v848, %v1291
    %v1585 = vmul.f32 %v849, %v1305
    %v1586 = vmul.f32 %v850, %v1319
    %v1587 = vmul.f32 %v851, %v1333
    %v1588 = vmul.f32 %v852, %v1347
    %v1589 = vmul.f32 %v853, %v1361
    %v1590 = vmul.f32 %v854, %v1375
    %v1591 = vmul.f32 %v855, %v1389
    %v1592 = vmul.f32 %v856, %v1403
    %v1593 = vmul.f32 %v857, %v1417
    %v1594 = vmul.f32 %v858, %v1431
    %v1595 = vmul.f32 %v859, %v1445
    %v1596 = vmul.f32 %v860, %v1459
    %v1597 = vmul.f32 %v861, %v1473
    %v1598 = vmul.f32 %v862, %v1487
    %v1599 = vmul.f32 %v863, %v1501
    %v1600 = vmul.f32 %v864, %v1515
    %v1601 = vmul.f32 %v865, %v1529
    %v1602 = vmul.f32 %v866, %v1543
    %v1603 = vmul.f32 %v867, %v1557
    %v1604 = vld [vmem:[%s11] sm:$0x7]
    %v1605 = vld [vmem:[%s12] sm:$0x7]
    %1607 = vset.pattern.permute.xlu0 4
    %1608 = vperm.xlu0 %1607, %v1604
    %v1609 = vpop.permute.xlu0 %1608
    %v1611 = vmul.f32 %v1558, %v1609
    %v1612 = vmul.f32 %v1559, %v1609
    %1614 = vset.pattern.permute.xlu0 0
    %1615 = vperm.xlu0 %1614, %v1605
    %v1616 = vpop.permute.xlu0 %1615
    %v1618 = vadd.f32 %v1616, %v1611
    %v1619 = vadd.f32 %v1616, %v1612
    %v1620 = vld [vmem:[%s3] sm:$0xff]
    %v1621 = vld [vmem:[%s3 + $0x8] sm:$0xff]
    %v1622 = vld [vmem:[%s3 + $0x10] sm:$0xff]
    %v1623 = vld [vmem:[%s3 + $0x18] sm:$0xff]
    %v1624 = vld [vmem:[%s3 + $0x20] sm:$0xff]
    %v1625 = vld [vmem:[%s3 + $0x28] sm:$0xff]
    %v1626 = vld [vmem:[%s3 + $0x30] sm:$0xff]
    %v1627 = vld [vmem:[%s3 + $0x38] sm:$0xff]
    %v1628 = vld [vmem:[%s3 + $0x40] sm:$0xff]
    %v1629 = vld [vmem:[%s3 + $0x48] sm:$0xff]
    %v1630 = vld [vmem:[%s3 + $0x50] sm:$0xff]
    %v1631 = vld [vmem:[%s3 + $0x58] sm:$0xff]
    %v1632 = vld [vmem:[%s3 + $0x60] sm:$0xff]
    %v1633 = vld [vmem:[%s3 + $0x68] sm:$0xff]
    %v1634 = vld [vmem:[%s3 + $0x70] sm:$0xff]
    %v1635 = vld [vmem:[%s3 + $0x78] sm:$0xff]
    %v1636 = vld [vmem:[%s3 + $0x80] sm:$0xff]
    %v1637 = vld [vmem:[%s3 + $0x88] sm:$0xff]
    %v1638 = vld [vmem:[%s3 + $0x90] sm:$0xff]
    %v1639 = vld [vmem:[%s3 + $0x98] sm:$0xff]
    %v1640 = vld [vmem:[%s3 + $0xa0] sm:$0x7f]
    %v1641 = vld [vmem:[%s3 + $0xa8] sm:$0x7f]
    %v1642 = vld [vmem:[%s4] sm:$0xff]
    %v1643 = vld [vmem:[%s4 + $0x8] sm:$0xff]
    %v1644 = vld [vmem:[%s4 + $0x10] sm:$0xff]
    %v1645 = vld [vmem:[%s4 + $0x18] sm:$0xff]
    %v1646 = vld [vmem:[%s4 + $0x20] sm:$0xff]
    %v1647 = vld [vmem:[%s4 + $0x28] sm:$0xff]
    %v1648 = vld [vmem:[%s4 + $0x30] sm:$0xff]
    %v1649 = vld [vmem:[%s4 + $0x38] sm:$0xff]
    %v1650 = vld [vmem:[%s4 + $0x40] sm:$0xff]
    %v1651 = vld [vmem:[%s4 + $0x48] sm:$0xff]
    %v1652 = vld [vmem:[%s4 + $0x50] sm:$0x7f]
    %1654 = vset.pattern.permute.xlu0 0
    %1655 = vperm.xlu0 %1654, %v1642
    %v1656 = vpop.permute.xlu0 %1655
    %1659 = vset.pattern.permute.xlu0 0
    %1660 = vperm.xlu0 %1659, %v1643
    %v1661 = vpop.permute.xlu0 %1660
    %1664 = vset.pattern.permute.xlu0 0
    %1665 = vperm.xlu0 %1664, %v1644
    %v1666 = vpop.permute.xlu0 %1665
    %1669 = vset.pattern.permute.xlu0 0
    %1670 = vperm.xlu0 %1669, %v1645
    %v1671 = vpop.permute.xlu0 %1670
    %1674 = vset.pattern.permute.xlu0 0
    %1675 = vperm.xlu0 %1674, %v1646
    %v1676 = vpop.permute.xlu0 %1675
    %1679 = vset.pattern.permute.xlu0 0
    %1680 = vperm.xlu0 %1679, %v1647
    %v1681 = vpop.permute.xlu0 %1680
    %1684 = vset.pattern.permute.xlu0 0
    %1685 = vperm.xlu0 %1684, %v1648
    %v1686 = vpop.permute.xlu0 %1685
    %1689 = vset.pattern.permute.xlu0 0
    %1690 = vperm.xlu0 %1689, %v1649
    %v1691 = vpop.permute.xlu0 %1690
    %1694 = vset.pattern.permute.xlu0 0
    %1695 = vperm.xlu0 %1694, %v1650
    %v1696 = vpop.permute.xlu0 %1695
    %1699 = vset.pattern.permute.xlu0 0
    %1700 = vperm.xlu0 %1699, %v1651
    %v1701 = vpop.permute.xlu0 %1700
    %1704 = vset.pattern.permute.xlu0 0
    %1705 = vperm.xlu0 %1704, %v1652
    %v1706 = vpop.permute.xlu0 %1705
    %vm1708 = vcmask 449536
    %v1710 = vsel %vm1708, %v1621, 0
    %v1713 = vsel %vm1708, %v1623, 0
    %v1716 = vsel %vm1708, %v1625, 0
    %v1719 = vsel %vm1708, %v1627, 0
    %v1722 = vsel %vm1708, %v1629, 0
    %v1725 = vsel %vm1708, %v1631, 0
    %v1728 = vsel %vm1708, %v1633, 0
    %v1731 = vsel %vm1708, %v1635, 0
    %v1734 = vsel %vm1708, %v1637, 0
    %v1737 = vsel %vm1708, %v1639, 0
    %v1740 = vsel %vm1708, %v1641, 0
    %vm1742 = vcmask 1046528
    %v1744 = vsel %vm1742, %v1602, 0
    %v1747 = vsel %vm1742, %v1603, 0
    %1749 = vmatpush.msra.mxu0 %v1588
    %1750 = vmatpush.msra.mxu0 %v1586
    %1751 = vmatpush.msra.mxu0 %v1584
    %1752 = vmatpush.msra.mxu0 %v1582
    %1753 = vmatpush.msra.mxu0 %v1580
    %1754 = vmatpush.msra.mxu0 %v1578
    %1755 = vmatpush.msra.mxu0 %v1576
    %1756 = vmatpush.msra.mxu0 %v1574
    %1757 = vmatpush.msra.mxu0 %v1572
    %1758 = vmatpush.msra.mxu0 %v1570
    %1759 = vmatpush.msra.mxu0 %v1568
    %1760 = vmatpush.msra.mxu0 %v1566
    %1761 = vmatpush.msra.mxu0 %v1564
    %1762 = vmatpush.msra.mxu0 %v1562
    %1763 = vmatpush.msra.mxu0 %v1560
    %1764 = vmatpush.msra.mxu0 %v1558
    %1765 = vmatmul.f32.gmra.mxu0 %v1620
    %v1766 = vpop.f32.mrf.mxu0
    %v1767 = vadd.f32 %v1656, %v1766
    %1768 = vmatmul.f32.gmra.mxu0 %v1622
    %v1769 = vpop.f32.mrf.mxu0
    %v1770 = vadd.f32 %v1661, %v1769
    %1771 = vmatmul.f32.gmra.mxu0 %v1624
    %v1772 = vpop.f32.mrf.mxu0
    %v1773 = vadd.f32 %v1666, %v1772
    %1774 = vmatmul.f32.gmra.mxu0 %v1626
    %v1775 = vpop.f32.mrf.mxu0
    %v1776 = vadd.f32 %v1671, %v1775
    %1777 = vmatmul.f32.gmra.mxu0 %v1628
    %v1778 = vpop.f32.mrf.mxu0
    %v1779 = vadd.f32 %v1676, %v1778
    %1780 = vmatmul.f32.gmra.mxu0 %v1630
    %v1781 = vpop.f32.mrf.mxu0
    %v1782 = vadd.f32 %v1681, %v1781
    %1783 = vmatmul.f32.gmra.mxu0 %v1632
    %v1784 = vpop.f32.mrf.mxu0
    %v1785 = vadd.f32 %v1686, %v1784
    %1786 = vmatmul.f32.gmra.mxu0 %v1634
    %v1787 = vpop.f32.mrf.mxu0
    %v1788 = vadd.f32 %v1691, %v1787
    %1789 = vmatmul.f32.gmra.mxu0 %v1636
    %v1790 = vpop.f32.mrf.mxu0
    %v1791 = vadd.f32 %v1696, %v1790
    %1792 = vmatmul.f32.gmra.mxu0 %v1638
    %v1793 = vpop.f32.mrf.mxu0
    %v1794 = vadd.f32 %v1701, %v1793
    %1795 = vmatmul.f32.gmra.mxu0 %v1640
    %v1796 = vpop.f32.mrf.mxu0
    %v1797 = vadd.f32 %v1706, %v1796
    %1798 = vdwg.mxu0
    %1799 = vmatpush.msra.mxu0 0.0
    %1800 = vmatpush.msra.mxu0 0.0
    %1801 = vmatpush.msra.mxu0 0.0
    %1802 = vmatpush.msra.mxu0 0.0
    %1803 = vmatpush.msra.mxu0 0.0
    %1804 = vmatpush.msra.mxu0 0.0
    %1805 = vmatpush.msra.mxu0 0.0
    %1806 = vmatpush.msra.mxu0 0.0
    %1807 = vmatpush.msra.mxu0 0.0
    %1808 = vmatpush.msra.mxu0 %v1744
    %1809 = vmatpush.msra.mxu0 %v1600
    %1810 = vmatpush.msra.mxu0 %v1598
    %1811 = vmatpush.msra.mxu0 %v1596
    %1812 = vmatpush.msra.mxu0 %v1594
    %1813 = vmatpush.msra.mxu0 %v1592
    %1814 = vmatpush.msra.mxu0 %v1590
    %1815 = vmatmul.f32.gmra.mxu0 %v1710
    %v1816 = vpop.f32.mrf.mxu0
    %v1817 = vadd.f32 %v1767, %v1816
    %1818 = vmatmul.f32.gmra.mxu0 %v1713
    %v1819 = vpop.f32.mrf.mxu0
    %v1820 = vadd.f32 %v1770, %v1819
    %1821 = vmatmul.f32.gmra.mxu0 %v1716
    %v1822 = vpop.f32.mrf.mxu0
    %v1823 = vadd.f32 %v1773, %v1822
    %1824 = vmatmul.f32.gmra.mxu0 %v1719
    %v1825 = vpop.f32.mrf.mxu0
    %v1826 = vadd.f32 %v1776, %v1825
    %1827 = vmatmul.f32.gmra.mxu0 %v1722
    %v1828 = vpop.f32.mrf.mxu0
    %v1829 = vadd.f32 %v1779, %v1828
    %1830 = vmatmul.f32.gmra.mxu0 %v1725
    %v1831 = vpop.f32.mrf.mxu0
    %v1832 = vadd.f32 %v1782, %v1831
    %1833 = vmatmul.f32.gmra.mxu0 %v1728
    %v1834 = vpop.f32.mrf.mxu0
    %v1835 = vadd.f32 %v1785, %v1834
    %1836 = vmatmul.f32.gmra.mxu0 %v1731
    %v1837 = vpop.f32.mrf.mxu0
    %v1838 = vadd.f32 %v1788, %v1837
    %1839 = vmatmul.f32.gmra.mxu0 %v1734
    %v1840 = vpop.f32.mrf.mxu0
    %v1841 = vadd.f32 %v1791, %v1840
    %1842 = vmatmul.f32.gmra.mxu0 %v1737
    %v1843 = vpop.f32.mrf.mxu0
    %v1844 = vadd.f32 %v1794, %v1843
    %1845 = vmatmul.f32.gmra.mxu0 %v1740
    %v1846 = vpop.f32.mrf.mxu0
    %v1847 = vadd.f32 %v1797, %v1846
    %1848 = vdwg.mxu0
    %1849 = vmatpush.msra.mxu0 %v1589
    %1850 = vmatpush.msra.mxu0 %v1587
    %1851 = vmatpush.msra.mxu0 %v1585
    %1852 = vmatpush.msra.mxu0 %v1583
    %1853 = vmatpush.msra.mxu0 %v1581
    %1854 = vmatpush.msra.mxu0 %v1579
    %1855 = vmatpush.msra.mxu0 %v1577
    %1856 = vmatpush.msra.mxu0 %v1575
    %1857 = vmatpush.msra.mxu0 %v1573
    %1858 = vmatpush.msra.mxu0 %v1571
    %1859 = vmatpush.msra.mxu0 %v1569
    %1860 = vmatpush.msra.mxu0 %v1567
    %1861 = vmatpush.msra.mxu0 %v1565
    %1862 = vmatpush.msra.mxu0 %v1563
    %1863 = vmatpush.msra.mxu0 %v1561
    %1864 = vmatpush.msra.mxu0 %v1559
    %1865 = vmatmul.f32.gmra.mxu0 %v1620
    %v1866 = vpop.f32.mrf.mxu0
    %v1867 = vadd.f32 %v1656, %v1866
    %1868 = vmatmul.f32.gmra.mxu0 %v1622
    %v1869 = vpop.f32.mrf.mxu0
    %v1870 = vadd.f32 %v1661, %v1869
    %1871 = vmatmul.f32.gmra.mxu0 %v1624
    %v1872 = vpop.f32.mrf.mxu0
    %v1873 = vadd.f32 %v1666, %v1872
    %1874 = vmatmul.f32.gmra.mxu0 %v1626
    %v1875 = vpop.f32.mrf.mxu0
    %v1876 = vadd.f32 %v1671, %v1875
    %1877 = vmatmul.f32.gmra.mxu0 %v1628
    %v1878 = vpop.f32.mrf.mxu0
    %v1879 = vadd.f32 %v1676, %v1878
    %1880 = vmatmul.f32.gmra.mxu0 %v1630
    %v1881 = vpop.f32.mrf.mxu0
    %v1882 = vadd.f32 %v1681, %v1881
    %1883 = vmatmul.f32.gmra.mxu0 %v1632
    %v1884 = vpop.f32.mrf.mxu0
    %v1885 = vadd.f32 %v1686, %v1884
    %1886 = vmatmul.f32.gmra.mxu0 %v1634
    %v1887 = vpop.f32.mrf.mxu0
    %v1888 = vadd.f32 %v1691, %v1887
    %1889 = vmatmul.f32.gmra.mxu0 %v1636
    %v1890 = vpop.f32.mrf.mxu0
    %v1891 = vadd.f32 %v1696, %v1890
    %1892 = vmatmul.f32.gmra.mxu0 %v1638
    %v1893 = vpop.f32.mrf.mxu0
    %v1894 = vadd.f32 %v1701, %v1893
    %1895 = vmatmul.f32.gmra.mxu0 %v1640
    %v1896 = vpop.f32.mrf.mxu0
    %v1897 = vadd.f32 %v1706, %v1896
    %1898 = vdwg.mxu0
    %1899 = vmatpush.msra.mxu0 0.0
    %1900 = vmatpush.msra.mxu0 0.0
    %1901 = vmatpush.msra.mxu0 0.0
    %1902 = vmatpush.msra.mxu0 0.0
    %1903 = vmatpush.msra.mxu0 0.0
    %1904 = vmatpush.msra.mxu0 0.0
    %1905 = vmatpush.msra.mxu0 0.0
    %1906 = vmatpush.msra.mxu0 0.0
    %1907 = vmatpush.msra.mxu0 0.0
    %1908 = vmatpush.msra.mxu0 %v1747
    %1909 = vmatpush.msra.mxu0 %v1601
    %1910 = vmatpush.msra.mxu0 %v1599
    %1911 = vmatpush.msra.mxu0 %v1597
    %1912 = vmatpush.msra.mxu0 %v1595
    %1913 = vmatpush.msra.mxu0 %v1593
    %1914 = vmatpush.msra.mxu0 %v1591
    %1915 = vmatmul.f32.gmra.mxu0 %v1710
    %v1916 = vpop.f32.mrf.mxu0
    %v1917 = vadd.f32 %v1867, %v1916
    %1918 = vmatmul.f32.gmra.mxu0 %v1713
    %v1919 = vpop.f32.mrf.mxu0
    %v1920 = vadd.f32 %v1870, %v1919
    %1921 = vmatmul.f32.gmra.mxu0 %v1716
    %v1922 = vpop.f32.mrf.mxu0
    %v1923 = vadd.f32 %v1873, %v1922
    %1924 = vmatmul.f32.gmra.mxu0 %v1719
    %v1925 = vpop.f32.mrf.mxu0
    %v1926 = vadd.f32 %v1876, %v1925
    %1927 = vmatmul.f32.gmra.mxu0 %v1722
    %v1928 = vpop.f32.mrf.mxu0
    %v1929 = vadd.f32 %v1879, %v1928
    %1930 = vmatmul.f32.gmra.mxu0 %v1725
    %v1931 = vpop.f32.mrf.mxu0
    %v1932 = vadd.f32 %v1882, %v1931
    %1933 = vmatmul.f32.gmra.mxu0 %v1728
    %v1934 = vpop.f32.mrf.mxu0
    %v1935 = vadd.f32 %v1885, %v1934
    %1936 = vmatmul.f32.gmra.mxu0 %v1731
    %v1937 = vpop.f32.mrf.mxu0
    %v1938 = vadd.f32 %v1888, %v1937
    %1939 = vmatmul.f32.gmra.mxu0 %v1734
    %v1940 = vpop.f32.mrf.mxu0
    %v1941 = vadd.f32 %v1891, %v1940
    %1942 = vmatmul.f32.gmra.mxu0 %v1737
    %v1943 = vpop.f32.mrf.mxu0
    %v1944 = vadd.f32 %v1894, %v1943
    %1945 = vmatmul.f32.gmra.mxu0 %v1740
    %v1946 = vpop.f32.mrf.mxu0
    %v1947 = vadd.f32 %v1897, %v1946
    %1948 = vdwg.mxu0
    %v1949 = vmin.f32 %v1817, 20.0
    %v1950 = vmin.f32 %v1917, 20.0
    %v1951 = vmin.f32 %v1820, 20.0
    %v1952 = vmin.f32 %v1920, 20.0
    %v1953 = vmin.f32 %v1823, 20.0
    %v1954 = vmin.f32 %v1923, 20.0
    %v1955 = vmin.f32 %v1826, 20.0
    %v1956 = vmin.f32 %v1926, 20.0
    %v1957 = vmin.f32 %v1829, 20.0
    %v1958 = vmin.f32 %v1929, 20.0
    %v1959 = vmin.f32 %v1832, 20.0
    %v1960 = vmin.f32 %v1932, 20.0
    %v1961 = vmin.f32 %v1835, 20.0
    %v1962 = vmin.f32 %v1935, 20.0
    %v1963 = vmin.f32 %v1838, 20.0
    %v1964 = vmin.f32 %v1938, 20.0
    %v1965 = vmin.f32 %v1841, 20.0
    %v1966 = vmin.f32 %v1941, 20.0
    %v1967 = vmin.f32 %v1844, 20.0
    %v1968 = vmin.f32 %v1944, 20.0
    %v1969 = vmin.f32 %v1847, 20.0
    %v1970 = vmin.f32 %v1947, 20.0
    %v1971 = vmul.f32 %v1949, 1.442695
    %v1972 = vpow.pop %v1971
    %v1973 = vmul.f32 %v1950, 1.442695
    %v1974 = vpow.pop %v1973
    %v1975 = vmul.f32 %v1951, 1.442695
    %v1976 = vpow.pop %v1975
    %v1977 = vmul.f32 %v1952, 1.442695
    %v1978 = vpow.pop %v1977
    %v1979 = vmul.f32 %v1953, 1.442695
    %v1980 = vpow.pop %v1979
    %v1981 = vmul.f32 %v1954, 1.442695
    %v1982 = vpow.pop %v1981
    %v1983 = vmul.f32 %v1955, 1.442695
    %v1984 = vpow.pop %v1983
    %v1985 = vmul.f32 %v1956, 1.442695
    %v1986 = vpow.pop %v1985
    %v1987 = vmul.f32 %v1957, 1.442695
    %v1988 = vpow.pop %v1987
    %v1989 = vmul.f32 %v1958, 1.442695
    %v1990 = vpow.pop %v1989
    %v1991 = vmul.f32 %v1959, 1.442695
    %v1992 = vpow.pop %v1991
    %v1993 = vmul.f32 %v1960, 1.442695
    %v1994 = vpow.pop %v1993
    %v1995 = vmul.f32 %v1961, 1.442695
    %v1996 = vpow.pop %v1995
    %v1997 = vmul.f32 %v1962, 1.442695
    %v1998 = vpow.pop %v1997
    %v1999 = vmul.f32 %v1963, 1.442695
    %v2000 = vpow.pop %v1999
    %v2001 = vmul.f32 %v1964, 1.442695
    %v2002 = vpow.pop %v2001
    %v2003 = vmul.f32 %v1965, 1.442695
    %v2004 = vpow.pop %v2003
    %v2005 = vmul.f32 %v1966, 1.442695
    %v2006 = vpow.pop %v2005
    %v2007 = vmul.f32 %v1967, 1.442695
    %v2008 = vpow.pop %v2007
    %v2009 = vmul.f32 %v1968, 1.442695
    %v2010 = vpow.pop %v2009
    %v2011 = vmul.f32 %v1969, 1.442695
    %v2012 = vpow.pop %v2011
    %v2013 = vmul.f32 %v1970, 1.442695
    %v2014 = vpow.pop %v2013
    %v2015 = vadd.f32 %v1972, 2.0
    %v2016 = vadd.f32 %v1974, 2.0
    %v2017 = vadd.f32 %v1976, 2.0
    %v2018 = vadd.f32 %v1978, 2.0
    %v2019 = vadd.f32 %v1980, 2.0
    %v2020 = vadd.f32 %v1982, 2.0
    %v2021 = vadd.f32 %v1984, 2.0
    %v2022 = vadd.f32 %v1986, 2.0
    %v2023 = vadd.f32 %v1988, 2.0
    %v2024 = vadd.f32 %v1990, 2.0
    %v2025 = vadd.f32 %v1992, 2.0
    %v2026 = vadd.f32 %v1994, 2.0
    %v2027 = vadd.f32 %v1996, 2.0
    %v2028 = vadd.f32 %v1998, 2.0
    %v2029 = vadd.f32 %v2000, 2.0
    %v2030 = vadd.f32 %v2002, 2.0
    %v2031 = vadd.f32 %v2004, 2.0
    %v2032 = vadd.f32 %v2006, 2.0
    %v2033 = vadd.f32 %v2008, 2.0
    %v2034 = vadd.f32 %v2010, 2.0
    %v2035 = vadd.f32 %v2012, 2.0
    %v2036 = vadd.f32 %v2014, 2.0
    %v2037 = vmul.f32 %v1972, %v2015
    %v2038 = vmul.f32 %v1974, %v2016
    %v2039 = vmul.f32 %v1976, %v2017
    %v2040 = vmul.f32 %v1978, %v2018
    %v2041 = vmul.f32 %v1980, %v2019
    %v2042 = vmul.f32 %v1982, %v2020
    %v2043 = vmul.f32 %v1984, %v2021
    %v2044 = vmul.f32 %v1986, %v2022
    %v2045 = vmul.f32 %v1988, %v2023
    %v2046 = vmul.f32 %v1990, %v2024
    %v2047 = vmul.f32 %v1992, %v2025
    %v2048 = vmul.f32 %v1994, %v2026
    %v2049 = vmul.f32 %v1996, %v2027
    %v2050 = vmul.f32 %v1998, %v2028
    %v2051 = vmul.f32 %v2000, %v2029
    %v2052 = vmul.f32 %v2002, %v2030
    %v2053 = vmul.f32 %v2004, %v2031
    %v2054 = vmul.f32 %v2006, %v2032
    %v2055 = vmul.f32 %v2008, %v2033
    %v2056 = vmul.f32 %v2010, %v2034
    %v2057 = vmul.f32 %v2012, %v2035
    %v2058 = vmul.f32 %v2014, %v2036
    %v2059 = vmul.f32 %v1817, %v2037
    %v2060 = vmul.f32 %v1917, %v2038
    %v2061 = vmul.f32 %v1820, %v2039
    %v2062 = vmul.f32 %v1920, %v2040
    %v2063 = vmul.f32 %v1823, %v2041
    %v2064 = vmul.f32 %v1923, %v2042
    %v2065 = vmul.f32 %v1826, %v2043
    %v2066 = vmul.f32 %v1926, %v2044
    %v2067 = vmul.f32 %v1829, %v2045
    %v2068 = vmul.f32 %v1929, %v2046
    %v2069 = vmul.f32 %v1832, %v2047
    %v2070 = vmul.f32 %v1932, %v2048
    %v2071 = vmul.f32 %v1835, %v2049
    %v2072 = vmul.f32 %v1935, %v2050
    %v2073 = vmul.f32 %v1838, %v2051
    %v2074 = vmul.f32 %v1938, %v2052
    %v2075 = vmul.f32 %v1841, %v2053
    %v2076 = vmul.f32 %v1941, %v2054
    %v2077 = vmul.f32 %v1844, %v2055
    %v2078 = vmul.f32 %v1944, %v2056
    %v2079 = vmul.f32 %v1847, %v2057
    %v2080 = vmul.f32 %v1947, %v2058
    %v2081 = vadd.f32 %v2037, 2.0
    %v2082 = vadd.f32 %v2038, 2.0
    %v2083 = vadd.f32 %v2039, 2.0
    %v2084 = vadd.f32 %v2040, 2.0
    %v2085 = vadd.f32 %v2041, 2.0
    %v2086 = vadd.f32 %v2042, 2.0
    %v2087 = vadd.f32 %v2043, 2.0
    %v2088 = vadd.f32 %v2044, 2.0
    %v2089 = vadd.f32 %v2045, 2.0
    %v2090 = vadd.f32 %v2046, 2.0
    %v2091 = vadd.f32 %v2047, 2.0
    %v2092 = vadd.f32 %v2048, 2.0
    %v2093 = vadd.f32 %v2049, 2.0
    %v2094 = vadd.f32 %v2050, 2.0
    %v2095 = vadd.f32 %v2051, 2.0
    %v2096 = vadd.f32 %v2052, 2.0
    %v2097 = vadd.f32 %v2053, 2.0
    %v2098 = vadd.f32 %v2054, 2.0
    %v2099 = vadd.f32 %v2055, 2.0
    %v2100 = vadd.f32 %v2056, 2.0
    %v2101 = vadd.f32 %v2057, 2.0
    %v2102 = vadd.f32 %v2058, 2.0
    %v2103 = vrcp.pop %v2081
    %v2104 = vmul.f32 %v2081, %v2103
    %v2105 = vsub.f32 1.0, %v2104
    %v2106 = vmul.f32 %v2103, %v2105
    %v2107 = vadd.f32 %v2103, %v2106
    %vm2108 = vweird.f32 %v2081
    %vm2109 = vweird.f32 %v2103
    %vm2110 = vmor %vm2108, %vm2109
    %v2111 = vsel %vm2110, %v2103, %v2107
    %v2112 = vand.u32 2147483647, %v2081
    %vm2113 = vcmp.eq.f32.partialorder %v2112, 8.507059e+37
    %v2114 = vand.u32 %v2081, 2147483648
    %v2115 = vor.u32 1.1754944e-38, %v2114
    %v2116 = vsel %vm2113, %v2115, %v2111
    %v2117 = vrcp.pop %v2082
    %v2118 = vmul.f32 %v2082, %v2117
    %v2119 = vsub.f32 1.0, %v2118
    %v2120 = vmul.f32 %v2117, %v2119
    %v2121 = vadd.f32 %v2117, %v2120
    %vm2122 = vweird.f32 %v2082
    %vm2123 = vweird.f32 %v2117
    %vm2124 = vmor %vm2122, %vm2123
    %v2125 = vsel %vm2124, %v2117, %v2121
    %v2126 = vand.u32 2147483647, %v2082
    %vm2127 = vcmp.eq.f32.partialorder %v2126, 8.507059e+37
    %v2128 = vand.u32 %v2082, 2147483648
    %v2129 = vor.u32 1.1754944e-38, %v2128
    %v2130 = vsel %vm2127, %v2129, %v2125
    %v2131 = vrcp.pop %v2083
    %v2132 = vmul.f32 %v2083, %v2131
    %v2133 = vsub.f32 1.0, %v2132
    %v2134 = vmul.f32 %v2131, %v2133
    %v2135 = vadd.f32 %v2131, %v2134
    %vm2136 = vweird.f32 %v2083
    %vm2137 = vweird.f32 %v2131
    %vm2138 = vmor %vm2136, %vm2137
    %v2139 = vsel %vm2138, %v2131, %v2135
    %v2140 = vand.u32 2147483647, %v2083
    %vm2141 = vcmp.eq.f32.partialorder %v2140, 8.507059e+37
    %v2142 = vand.u32 %v2083, 2147483648
    %v2143 = vor.u32 1.1754944e-38, %v2142
    %v2144 = vsel %vm2141, %v2143, %v2139
    %v2145 = vrcp.pop %v2084
    %v2146 = vmul.f32 %v2084, %v2145
    %v2147 = vsub.f32 1.0, %v2146
    %v2148 = vmul.f32 %v2145, %v2147
    %v2149 = vadd.f32 %v2145, %v2148
    %vm2150 = vweird.f32 %v2084
    %vm2151 = vweird.f32 %v2145
    %vm2152 = vmor %vm2150, %vm2151
    %v2153 = vsel %vm2152, %v2145, %v2149
    %v2154 = vand.u32 2147483647, %v2084
    %vm2155 = vcmp.eq.f32.partialorder %v2154, 8.507059e+37
    %v2156 = vand.u32 %v2084, 2147483648
    %v2157 = vor.u32 1.1754944e-38, %v2156
    %v2158 = vsel %vm2155, %v2157, %v2153
    %v2159 = vrcp.pop %v2085
    %v2160 = vmul.f32 %v2085, %v2159
    %v2161 = vsub.f32 1.0, %v2160
    %v2162 = vmul.f32 %v2159, %v2161
    %v2163 = vadd.f32 %v2159, %v2162
    %vm2164 = vweird.f32 %v2085
    %vm2165 = vweird.f32 %v2159
    %vm2166 = vmor %vm2164, %vm2165
    %v2167 = vsel %vm2166, %v2159, %v2163
    %v2168 = vand.u32 2147483647, %v2085
    %vm2169 = vcmp.eq.f32.partialorder %v2168, 8.507059e+37
    %v2170 = vand.u32 %v2085, 2147483648
    %v2171 = vor.u32 1.1754944e-38, %v2170
    %v2172 = vsel %vm2169, %v2171, %v2167
    %v2173 = vrcp.pop %v2086
    %v2174 = vmul.f32 %v2086, %v2173
    %v2175 = vsub.f32 1.0, %v2174
    %v2176 = vmul.f32 %v2173, %v2175
    %v2177 = vadd.f32 %v2173, %v2176
    %vm2178 = vweird.f32 %v2086
    %vm2179 = vweird.f32 %v2173
    %vm2180 = vmor %vm2178, %vm2179
    %v2181 = vsel %vm2180, %v2173, %v2177
    %v2182 = vand.u32 2147483647, %v2086
    %vm2183 = vcmp.eq.f32.partialorder %v2182, 8.507059e+37
    %v2184 = vand.u32 %v2086, 2147483648
    %v2185 = vor.u32 1.1754944e-38, %v2184
    %v2186 = vsel %vm2183, %v2185, %v2181
    %v2187 = vrcp.pop %v2087
    %v2188 = vmul.f32 %v2087, %v2187
    %v2189 = vsub.f32 1.0, %v2188
    %v2190 = vmul.f32 %v2187, %v2189
    %v2191 = vadd.f32 %v2187, %v2190
    %vm2192 = vweird.f32 %v2087
    %vm2193 = vweird.f32 %v2187
    %vm2194 = vmor %vm2192, %vm2193
    %v2195 = vsel %vm2194, %v2187, %v2191
    %v2196 = vand.u32 2147483647, %v2087
    %vm2197 = vcmp.eq.f32.partialorder %v2196, 8.507059e+37
    %v2198 = vand.u32 %v2087, 2147483648
    %v2199 = vor.u32 1.1754944e-38, %v2198
    %v2200 = vsel %vm2197, %v2199, %v2195
    %v2201 = vrcp.pop %v2088
    %v2202 = vmul.f32 %v2088, %v2201
    %v2203 = vsub.f32 1.0, %v2202
    %v2204 = vmul.f32 %v2201, %v2203
    %v2205 = vadd.f32 %v2201, %v2204
    %vm2206 = vweird.f32 %v2088
    %vm2207 = vweird.f32 %v2201
    %vm2208 = vmor %vm2206, %vm2207
    %v2209 = vsel %vm2208, %v2201, %v2205
    %v2210 = vand.u32 2147483647, %v2088
    %vm2211 = vcmp.eq.f32.partialorder %v2210, 8.507059e+37
    %v2212 = vand.u32 %v2088, 2147483648
    %v2213 = vor.u32 1.1754944e-38, %v2212
    %v2214 = vsel %vm2211, %v2213, %v2209
    %v2215 = vrcp.pop %v2089
    %v2216 = vmul.f32 %v2089, %v2215
    %v2217 = vsub.f32 1.0, %v2216
    %v2218 = vmul.f32 %v2215, %v2217
    %v2219 = vadd.f32 %v2215, %v2218
    %vm2220 = vweird.f32 %v2089
    %vm2221 = vweird.f32 %v2215
    %vm2222 = vmor %vm2220, %vm2221
    %v2223 = vsel %vm2222, %v2215, %v2219
    %v2224 = vand.u32 2147483647, %v2089
    %vm2225 = vcmp.eq.f32.partialorder %v2224, 8.507059e+37
    %v2226 = vand.u32 %v2089, 2147483648
    %v2227 = vor.u32 1.1754944e-38, %v2226
    %v2228 = vsel %vm2225, %v2227, %v2223
    %v2229 = vrcp.pop %v2090
    %v2230 = vmul.f32 %v2090, %v2229
    %v2231 = vsub.f32 1.0, %v2230
    %v2232 = vmul.f32 %v2229, %v2231
    %v2233 = vadd.f32 %v2229, %v2232
    %vm2234 = vweird.f32 %v2090
    %vm2235 = vweird.f32 %v2229
    %vm2236 = vmor %vm2234, %vm2235
    %v2237 = vsel %vm2236, %v2229, %v2233
    %v2238 = vand.u32 2147483647, %v2090
    %vm2239 = vcmp.eq.f32.partialorder %v2238, 8.507059e+37
    %v2240 = vand.u32 %v2090, 2147483648
    %v2241 = vor.u32 1.1754944e-38, %v2240
    %v2242 = vsel %vm2239, %v2241, %v2237
    %v2243 = vrcp.pop %v2091
    %v2244 = vmul.f32 %v2091, %v2243
    %v2245 = vsub.f32 1.0, %v2244
    %v2246 = vmul.f32 %v2243, %v2245
    %v2247 = vadd.f32 %v2243, %v2246
    %vm2248 = vweird.f32 %v2091
    %vm2249 = vweird.f32 %v2243
    %vm2250 = vmor %vm2248, %vm2249
    %v2251 = vsel %vm2250, %v2243, %v2247
    %v2252 = vand.u32 2147483647, %v2091
    %vm2253 = vcmp.eq.f32.partialorder %v2252, 8.507059e+37
    %v2254 = vand.u32 %v2091, 2147483648
    %v2255 = vor.u32 1.1754944e-38, %v2254
    %v2256 = vsel %vm2253, %v2255, %v2251
    %v2257 = vrcp.pop %v2092
    %v2258 = vmul.f32 %v2092, %v2257
    %v2259 = vsub.f32 1.0, %v2258
    %v2260 = vmul.f32 %v2257, %v2259
    %v2261 = vadd.f32 %v2257, %v2260
    %vm2262 = vweird.f32 %v2092
    %vm2263 = vweird.f32 %v2257
    %vm2264 = vmor %vm2262, %vm2263
    %v2265 = vsel %vm2264, %v2257, %v2261
    %v2266 = vand.u32 2147483647, %v2092
    %vm2267 = vcmp.eq.f32.partialorder %v2266, 8.507059e+37
    %v2268 = vand.u32 %v2092, 2147483648
    %v2269 = vor.u32 1.1754944e-38, %v2268
    %v2270 = vsel %vm2267, %v2269, %v2265
    %v2271 = vrcp.pop %v2093
    %v2272 = vmul.f32 %v2093, %v2271
    %v2273 = vsub.f32 1.0, %v2272
    %v2274 = vmul.f32 %v2271, %v2273
    %v2275 = vadd.f32 %v2271, %v2274
    %vm2276 = vweird.f32 %v2093
    %vm2277 = vweird.f32 %v2271
    %vm2278 = vmor %vm2276, %vm2277
    %v2279 = vsel %vm2278, %v2271, %v2275
    %v2280 = vand.u32 2147483647, %v2093
    %vm2281 = vcmp.eq.f32.partialorder %v2280, 8.507059e+37
    %v2282 = vand.u32 %v2093, 2147483648
    %v2283 = vor.u32 1.1754944e-38, %v2282
    %v2284 = vsel %vm2281, %v2283, %v2279
    %v2285 = vrcp.pop %v2094
    %v2286 = vmul.f32 %v2094, %v2285
    %v2287 = vsub.f32 1.0, %v2286
    %v2288 = vmul.f32 %v2285, %v2287
    %v2289 = vadd.f32 %v2285, %v2288
    %vm2290 = vweird.f32 %v2094
    %vm2291 = vweird.f32 %v2285
    %vm2292 = vmor %vm2290, %vm2291
    %v2293 = vsel %vm2292, %v2285, %v2289
    %v2294 = vand.u32 2147483647, %v2094
    %vm2295 = vcmp.eq.f32.partialorder %v2294, 8.507059e+37
    %v2296 = vand.u32 %v2094, 2147483648
    %v2297 = vor.u32 1.1754944e-38, %v2296
    %v2298 = vsel %vm2295, %v2297, %v2293
    %v2299 = vrcp.pop %v2095
    %v2300 = vmul.f32 %v2095, %v2299
    %v2301 = vsub.f32 1.0, %v2300
    %v2302 = vmul.f32 %v2299, %v2301
    %v2303 = vadd.f32 %v2299, %v2302
    %vm2304 = vweird.f32 %v2095
    %vm2305 = vweird.f32 %v2299
    %vm2306 = vmor %vm2304, %vm2305
    %v2307 = vsel %vm2306, %v2299, %v2303
    %v2308 = vand.u32 2147483647, %v2095
    %vm2309 = vcmp.eq.f32.partialorder %v2308, 8.507059e+37
    %v2310 = vand.u32 %v2095, 2147483648
    %v2311 = vor.u32 1.1754944e-38, %v2310
    %v2312 = vsel %vm2309, %v2311, %v2307
    %v2313 = vrcp.pop %v2096
    %v2314 = vmul.f32 %v2096, %v2313
    %v2315 = vsub.f32 1.0, %v2314
    %v2316 = vmul.f32 %v2313, %v2315
    %v2317 = vadd.f32 %v2313, %v2316
    %vm2318 = vweird.f32 %v2096
    %vm2319 = vweird.f32 %v2313
    %vm2320 = vmor %vm2318, %vm2319
    %v2321 = vsel %vm2320, %v2313, %v2317
    %v2322 = vand.u32 2147483647, %v2096
    %vm2323 = vcmp.eq.f32.partialorder %v2322, 8.507059e+37
    %v2324 = vand.u32 %v2096, 2147483648
    %v2325 = vor.u32 1.1754944e-38, %v2324
    %v2326 = vsel %vm2323, %v2325, %v2321
    %v2327 = vrcp.pop %v2097
    %v2328 = vmul.f32 %v2097, %v2327
    %v2329 = vsub.f32 1.0, %v2328
    %v2330 = vmul.f32 %v2327, %v2329
    %v2331 = vadd.f32 %v2327, %v2330
    %vm2332 = vweird.f32 %v2097
    %vm2333 = vweird.f32 %v2327
    %vm2334 = vmor %vm2332, %vm2333
    %v2335 = vsel %vm2334, %v2327, %v2331
    %v2336 = vand.u32 2147483647, %v2097
    %vm2337 = vcmp.eq.f32.partialorder %v2336, 8.507059e+37
    %v2338 = vand.u32 %v2097, 2147483648
    %v2339 = vor.u32 1.1754944e-38, %v2338
    %v2340 = vsel %vm2337, %v2339, %v2335
    %v2341 = vrcp.pop %v2098
    %v2342 = vmul.f32 %v2098, %v2341
    %v2343 = vsub.f32 1.0, %v2342
    %v2344 = vmul.f32 %v2341, %v2343
    %v2345 = vadd.f32 %v2341, %v2344
    %vm2346 = vweird.f32 %v2098
    %vm2347 = vweird.f32 %v2341
    %vm2348 = vmor %vm2346, %vm2347
    %v2349 = vsel %vm2348, %v2341, %v2345
    %v2350 = vand.u32 2147483647, %v2098
    %vm2351 = vcmp.eq.f32.partialorder %v2350, 8.507059e+37
    %v2352 = vand.u32 %v2098, 2147483648
    %v2353 = vor.u32 1.1754944e-38, %v2352
    %v2354 = vsel %vm2351, %v2353, %v2349
    %v2355 = vrcp.pop %v2099
    %v2356 = vmul.f32 %v2099, %v2355
    %v2357 = vsub.f32 1.0, %v2356
    %v2358 = vmul.f32 %v2355, %v2357
    %v2359 = vadd.f32 %v2355, %v2358
    %vm2360 = vweird.f32 %v2099
    %vm2361 = vweird.f32 %v2355
    %vm2362 = vmor %vm2360, %vm2361
    %v2363 = vsel %vm2362, %v2355, %v2359
    %v2364 = vand.u32 2147483647, %v2099
    %vm2365 = vcmp.eq.f32.partialorder %v2364, 8.507059e+37
    %v2366 = vand.u32 %v2099, 2147483648
    %v2367 = vor.u32 1.1754944e-38, %v2366
    %v2368 = vsel %vm2365, %v2367, %v2363
    %v2369 = vrcp.pop %v2100
    %v2370 = vmul.f32 %v2100, %v2369
    %v2371 = vsub.f32 1.0, %v2370
    %v2372 = vmul.f32 %v2369, %v2371
    %v2373 = vadd.f32 %v2369, %v2372
    %vm2374 = vweird.f32 %v2100
    %vm2375 = vweird.f32 %v2369
    %vm2376 = vmor %vm2374, %vm2375
    %v2377 = vsel %vm2376, %v2369, %v2373
    %v2378 = vand.u32 2147483647, %v2100
    %vm2379 = vcmp.eq.f32.partialorder %v2378, 8.507059e+37
    %v2380 = vand.u32 %v2100, 2147483648
    %v2381 = vor.u32 1.1754944e-38, %v2380
    %v2382 = vsel %vm2379, %v2381, %v2377
    %v2383 = vrcp.pop %v2101
    %v2384 = vmul.f32 %v2101, %v2383
    %v2385 = vsub.f32 1.0, %v2384
    %v2386 = vmul.f32 %v2383, %v2385
    %v2387 = vadd.f32 %v2383, %v2386
    %vm2388 = vweird.f32 %v2101
    %vm2389 = vweird.f32 %v2383
    %vm2390 = vmor %vm2388, %vm2389
    %v2391 = vsel %vm2390, %v2383, %v2387
    %v2392 = vand.u32 2147483647, %v2101
    %vm2393 = vcmp.eq.f32.partialorder %v2392, 8.507059e+37
    %v2394 = vand.u32 %v2101, 2147483648
    %v2395 = vor.u32 1.1754944e-38, %v2394
    %v2396 = vsel %vm2393, %v2395, %v2391
    %v2397 = vrcp.pop %v2102
    %v2398 = vmul.f32 %v2102, %v2397
    %v2399 = vsub.f32 1.0, %v2398
    %v2400 = vmul.f32 %v2397, %v2399
    %v2401 = vadd.f32 %v2397, %v2400
    %vm2402 = vweird.f32 %v2102
    %vm2403 = vweird.f32 %v2397
    %vm2404 = vmor %vm2402, %vm2403
    %v2405 = vsel %vm2404, %v2397, %v2401
    %v2406 = vand.u32 2147483647, %v2102
    %vm2407 = vcmp.eq.f32.partialorder %v2406, 8.507059e+37
    %v2408 = vand.u32 %v2102, 2147483648
    %v2409 = vor.u32 1.1754944e-38, %v2408
    %v2410 = vsel %vm2407, %v2409, %v2405
    %v2411 = vmul.f32 %v2059, %v2116
    %v2412 = vmul.f32 %v2060, %v2130
    %v2413 = vmul.f32 %v2061, %v2144
    %v2414 = vmul.f32 %v2062, %v2158
    %v2415 = vmul.f32 %v2063, %v2172
    %v2416 = vmul.f32 %v2064, %v2186
    %v2417 = vmul.f32 %v2065, %v2200
    %v2418 = vmul.f32 %v2066, %v2214
    %v2419 = vmul.f32 %v2067, %v2228
    %v2420 = vmul.f32 %v2068, %v2242
    %v2421 = vmul.f32 %v2069, %v2256
    %v2422 = vmul.f32 %v2070, %v2270
    %v2423 = vmul.f32 %v2071, %v2284
    %v2424 = vmul.f32 %v2072, %v2298
    %v2425 = vmul.f32 %v2073, %v2312
    %v2426 = vmul.f32 %v2074, %v2326
    %v2427 = vmul.f32 %v2075, %v2340
    %v2428 = vmul.f32 %v2076, %v2354
    %v2429 = vmul.f32 %v2077, %v2368
    %v2430 = vmul.f32 %v2078, %v2382
    %v2431 = vmul.f32 %v2079, %v2396
    %v2432 = vmul.f32 %v2080, %v2410
    %2433 = vset.pattern.permute.xlu0 3
    %2434 = vperm.xlu0 %2433, %v1604
    %v2435 = vpop.permute.xlu0 %2434
    %v2437 = vmul.f32 %v2411, %v2435
    %v2438 = vmul.f32 %v2412, %v2435
    %v2439 = vadd.f32 %v1618, %v2437
    %v2440 = vadd.f32 %v1619, %v2438
    %v2441 = vld [vmem:[%s5] sm:$0xff]
    %v2442 = vld [vmem:[%s5 + $0x8] sm:$0xff]
    %v2443 = vld [vmem:[%s5 + $0x10] sm:$0xff]
    %v2444 = vld [vmem:[%s5 + $0x18] sm:$0xff]
    %v2445 = vld [vmem:[%s5 + $0x20] sm:$0x7f]
    %v2446 = vld [vmem:[%s6] sm:$0xff]
    %v2447 = vld [vmem:[%s6 + $0x8] sm:$0xff]
    %v2448 = vld [vmem:[%s6 + $0x10] sm:$0xff]
    %v2449 = vld [vmem:[%s6 + $0x18] sm:$0xff]
    %v2450 = vld [vmem:[%s6 + $0x20] sm:$0x7f]
    %2452 = vset.pattern.permute.xlu0 0
    %2453 = vperm.xlu0 %2452, %v2446
    %v2454 = vpop.permute.xlu0 %2453
    %2457 = vset.pattern.permute.xlu0 0
    %2458 = vperm.xlu0 %2457, %v2447
    %v2459 = vpop.permute.xlu0 %2458
    %2462 = vset.pattern.permute.xlu0 0
    %2463 = vperm.xlu0 %2462, %v2448
    %v2464 = vpop.permute.xlu0 %2463
    %2467 = vset.pattern.permute.xlu0 0
    %2468 = vperm.xlu0 %2467, %v2449
    %v2469 = vpop.permute.xlu0 %2468
    %2472 = vset.pattern.permute.xlu0 0
    %2473 = vperm.xlu0 %2472, %v2450
    %v2474 = vpop.permute.xlu0 %2473
    %vm2476 = vcmask 711680
    %v2478 = vsel %vm2476, %v2441, 0
    %v2481 = vsel %vm2476, %v2442, 0
    %v2484 = vsel %vm2476, %v2443, 0
    %v2487 = vsel %vm2476, %v2444, 0
    %v2490 = vsel %vm2476, %v2445, 0
    %v2493 = vsel %vm1742, %v2431, 0
    %v2496 = vsel %vm1742, %v2432, 0
    %2498 = vmatpush.msra.mxu0 0.0
    %2499 = vmatpush.msra.mxu0 0.0
    %2500 = vmatpush.msra.mxu0 0.0
    %2501 = vmatpush.msra.mxu0 0.0
    %2502 = vmatpush.msra.mxu0 0.0
    %2503 = vmatpush.msra.mxu0 %v2493
    %2504 = vmatpush.msra.mxu0 %v2429
    %2505 = vmatpush.msra.mxu0 %v2427
    %2506 = vmatpush.msra.mxu0 %v2425
    %2507 = vmatpush.msra.mxu0 %v2423
    %2508 = vmatpush.msra.mxu0 %v2421
    %2509 = vmatpush.msra.mxu0 %v2419
    %2510 = vmatpush.msra.mxu0 %v2417
    %2511 = vmatpush.msra.mxu0 %v2415
    %2512 = vmatpush.msra.mxu0 %v2413
    %2513 = vmatpush.msra.mxu0 %v2411
    %2514 = vmatmul.f32.gmra.mxu0 %v2478
    %v2515 = vpop.f32.mrf.mxu0
    %v2516 = vadd.f32 %v2454, %v2515
    %2517 = vmatmul.f32.gmra.mxu0 %v2481
    %v2518 = vpop.f32.mrf.mxu0
    %v2519 = vadd.f32 %v2459, %v2518
    %2520 = vmatmul.f32.gmra.mxu0 %v2484
    %v2521 = vpop.f32.mrf.mxu0
    %v2522 = vadd.f32 %v2464, %v2521
    %2523 = vmatmul.f32.gmra.mxu0 %v2487
    %v2524 = vpop.f32.mrf.mxu0
    %v2525 = vadd.f32 %v2469, %v2524
    %2526 = vmatmul.f32.gmra.mxu0 %v2490
    %v2527 = vpop.f32.mrf.mxu0
    %v2528 = vadd.f32 %v2474, %v2527
    %2529 = vdwg.mxu0
    %2530 = vmatpush.msra.mxu0 0.0
    %2531 = vmatpush.msra.mxu0 0.0
    %2532 = vmatpush.msra.mxu0 0.0
    %2533 = vmatpush.msra.mxu0 0.0
    %2534 = vmatpush.msra.mxu0 0.0
    %2535 = vmatpush.msra.mxu0 %v2496
    %2536 = vmatpush.msra.mxu0 %v2430
    %2537 = vmatpush.msra.mxu0 %v2428
    %2538 = vmatpush.msra.mxu0 %v2426
    %2539 = vmatpush.msra.mxu0 %v2424
    %2540 = vmatpush.msra.mxu0 %v2422
    %2541 = vmatpush.msra.mxu0 %v2420
    %2542 = vmatpush.msra.mxu0 %v2418
    %2543 = vmatpush.msra.mxu0 %v2416
    %2544 = vmatpush.msra.mxu0 %v2414
    %2545 = vmatpush.msra.mxu0 %v2412
    %2546 = vmatmul.f32.gmra.mxu0 %v2478
    %v2547 = vpop.f32.mrf.mxu0
    %v2548 = vadd.f32 %v2454, %v2547
    %2549 = vmatmul.f32.gmra.mxu0 %v2481
    %v2550 = vpop.f32.mrf.mxu0
    %v2551 = vadd.f32 %v2459, %v2550
    %2552 = vmatmul.f32.gmra.mxu0 %v2484
    %v2553 = vpop.f32.mrf.mxu0
    %v2554 = vadd.f32 %v2464, %v2553
    %2555 = vmatmul.f32.gmra.mxu0 %v2487
    %v2556 = vpop.f32.mrf.mxu0
    %v2557 = vadd.f32 %v2469, %v2556
    %2558 = vmatmul.f32.gmra.mxu0 %v2490
    %v2559 = vpop.f32.mrf.mxu0
    %v2560 = vadd.f32 %v2474, %v2559
    %2561 = vdwg.mxu0
    %v2562 = vmin.f32 %v2516, 20.0
    %v2563 = vmin.f32 %v2548, 20.0
    %v2564 = vmin.f32 %v2519, 20.0
    %v2565 = vmin.f32 %v2551, 20.0
    %v2566 = vmin.f32 %v2522, 20.0
    %v2567 = vmin.f32 %v2554, 20.0
    %v2568 = vmin.f32 %v2525, 20.0
    %v2569 = vmin.f32 %v2557, 20.0
    %v2570 = vmin.f32 %v2528, 20.0
    %v2571 = vmin.f32 %v2560, 20.0
    %v2572 = vmul.f32 %v2562, 1.442695
    %v2573 = vpow.pop %v2572
    %v2574 = vmul.f32 %v2563, 1.442695
    %v2575 = vpow.pop %v2574
    %v2576 = vmul.f32 %v2564, 1.442695
    %v2577 = vpow.pop %v2576
    %v2578 = vmul.f32 %v2565, 1.442695
    %v2579 = vpow.pop %v2578
    %v2580 = vmul.f32 %v2566, 1.442695
    %v2581 = vpow.pop %v2580
    %v2582 = vmul.f32 %v2567, 1.442695
    %v2583 = vpow.pop %v2582
    %v2584 = vmul.f32 %v2568, 1.442695
    %v2585 = vpow.pop %v2584
    %v2586 = vmul.f32 %v2569, 1.442695
    %v2587 = vpow.pop %v2586
    %v2588 = vmul.f32 %v2570, 1.442695
    %v2589 = vpow.pop %v2588
    %v2590 = vmul.f32 %v2571, 1.442695
    %v2591 = vpow.pop %v2590
    %v2592 = vadd.f32 %v2573, 2.0
    %v2593 = vadd.f32 %v2575, 2.0
    %v2594 = vadd.f32 %v2577, 2.0
    %v2595 = vadd.f32 %v2579, 2.0
    %v2596 = vadd.f32 %v2581, 2.0
    %v2597 = vadd.f32 %v2583, 2.0
    %v2598 = vadd.f32 %v2585, 2.0
    %v2599 = vadd.f32 %v2587, 2.0
    %v2600 = vadd.f32 %v2589, 2.0
    %v2601 = vadd.f32 %v2591, 2.0
    %v2602 = vmul.f32 %v2573, %v2592
    %v2603 = vmul.f32 %v2575, %v2593
    %v2604 = vmul.f32 %v2577, %v2594
    %v2605 = vmul.f32 %v2579, %v2595
    %v2606 = vmul.f32 %v2581, %v2596
    %v2607 = vmul.f32 %v2583, %v2597
    %v2608 = vmul.f32 %v2585, %v2598
    %v2609 = vmul.f32 %v2587, %v2599
    %v2610 = vmul.f32 %v2589, %v2600
    %v2611 = vmul.f32 %v2591, %v2601
    %v2612 = vmul.f32 %v2516, %v2602
    %v2613 = vmul.f32 %v2548, %v2603
    %v2614 = vmul.f32 %v2519, %v2604
    %v2615 = vmul.f32 %v2551, %v2605
    %v2616 = vmul.f32 %v2522, %v2606
    %v2617 = vmul.f32 %v2554, %v2607
    %v2618 = vmul.f32 %v2525, %v2608
    %v2619 = vmul.f32 %v2557, %v2609
    %v2620 = vmul.f32 %v2528, %v2610
    %v2621 = vmul.f32 %v2560, %v2611
    %v2622 = vadd.f32 %v2602, 2.0
    %v2623 = vadd.f32 %v2603, 2.0
    %v2624 = vadd.f32 %v2604, 2.0
    %v2625 = vadd.f32 %v2605, 2.0
    %v2626 = vadd.f32 %v2606, 2.0
    %v2627 = vadd.f32 %v2607, 2.0
    %v2628 = vadd.f32 %v2608, 2.0
    %v2629 = vadd.f32 %v2609, 2.0
    %v2630 = vadd.f32 %v2610, 2.0
    %v2631 = vadd.f32 %v2611, 2.0
    %v2632 = vrcp.pop %v2622
    %v2633 = vmul.f32 %v2622, %v2632
    %v2634 = vsub.f32 1.0, %v2633
    %v2635 = vmul.f32 %v2632, %v2634
    %v2636 = vadd.f32 %v2632, %v2635
    %vm2637 = vweird.f32 %v2622
    %vm2638 = vweird.f32 %v2632
    %vm2639 = vmor %vm2637, %vm2638
    %v2640 = vsel %vm2639, %v2632, %v2636
    %v2641 = vand.u32 2147483647, %v2622
    %vm2642 = vcmp.eq.f32.partialorder %v2641, 8.507059e+37
    %v2643 = vand.u32 %v2622, 2147483648
    %v2644 = vor.u32 1.1754944e-38, %v2643
    %v2645 = vsel %vm2642, %v2644, %v2640
    %v2646 = vrcp.pop %v2623
    %v2647 = vmul.f32 %v2623, %v2646
    %v2648 = vsub.f32 1.0, %v2647
    %v2649 = vmul.f32 %v2646, %v2648
    %v2650 = vadd.f32 %v2646, %v2649
    %vm2651 = vweird.f32 %v2623
    %vm2652 = vweird.f32 %v2646
    %vm2653 = vmor %vm2651, %vm2652
    %v2654 = vsel %vm2653, %v2646, %v2650
    %v2655 = vand.u32 2147483647, %v2623
    %vm2656 = vcmp.eq.f32.partialorder %v2655, 8.507059e+37
    %v2657 = vand.u32 %v2623, 2147483648
    %v2658 = vor.u32 1.1754944e-38, %v2657
    %v2659 = vsel %vm2656, %v2658, %v2654
    %v2660 = vrcp.pop %v2624
    %v2661 = vmul.f32 %v2624, %v2660
    %v2662 = vsub.f32 1.0, %v2661
    %v2663 = vmul.f32 %v2660, %v2662
    %v2664 = vadd.f32 %v2660, %v2663
    %vm2665 = vweird.f32 %v2624
    %vm2666 = vweird.f32 %v2660
    %vm2667 = vmor %vm2665, %vm2666
    %v2668 = vsel %vm2667, %v2660, %v2664
    %v2669 = vand.u32 2147483647, %v2624
    %vm2670 = vcmp.eq.f32.partialorder %v2669, 8.507059e+37
    %v2671 = vand.u32 %v2624, 2147483648
    %v2672 = vor.u32 1.1754944e-38, %v2671
    %v2673 = vsel %vm2670, %v2672, %v2668
    %v2674 = vrcp.pop %v2625
    %v2675 = vmul.f32 %v2625, %v2674
    %v2676 = vsub.f32 1.0, %v2675
    %v2677 = vmul.f32 %v2674, %v2676
    %v2678 = vadd.f32 %v2674, %v2677
    %vm2679 = vweird.f32 %v2625
    %vm2680 = vweird.f32 %v2674
    %vm2681 = vmor %vm2679, %vm2680
    %v2682 = vsel %vm2681, %v2674, %v2678
    %v2683 = vand.u32 2147483647, %v2625
    %vm2684 = vcmp.eq.f32.partialorder %v2683, 8.507059e+37
    %v2685 = vand.u32 %v2625, 2147483648
    %v2686 = vor.u32 1.1754944e-38, %v2685
    %v2687 = vsel %vm2684, %v2686, %v2682
    %v2688 = vrcp.pop %v2626
    %v2689 = vmul.f32 %v2626, %v2688
    %v2690 = vsub.f32 1.0, %v2689
    %v2691 = vmul.f32 %v2688, %v2690
    %v2692 = vadd.f32 %v2688, %v2691
    %vm2693 = vweird.f32 %v2626
    %vm2694 = vweird.f32 %v2688
    %vm2695 = vmor %vm2693, %vm2694
    %v2696 = vsel %vm2695, %v2688, %v2692
    %v2697 = vand.u32 2147483647, %v2626
    %vm2698 = vcmp.eq.f32.partialorder %v2697, 8.507059e+37
    %v2699 = vand.u32 %v2626, 2147483648
    %v2700 = vor.u32 1.1754944e-38, %v2699
    %v2701 = vsel %vm2698, %v2700, %v2696
    %v2702 = vrcp.pop %v2627
    %v2703 = vmul.f32 %v2627, %v2702
    %v2704 = vsub.f32 1.0, %v2703
    %v2705 = vmul.f32 %v2702, %v2704
    %v2706 = vadd.f32 %v2702, %v2705
    %vm2707 = vweird.f32 %v2627
    %vm2708 = vweird.f32 %v2702
    %vm2709 = vmor %vm2707, %vm2708
    %v2710 = vsel %vm2709, %v2702, %v2706
    %v2711 = vand.u32 2147483647, %v2627
    %vm2712 = vcmp.eq.f32.partialorder %v2711, 8.507059e+37
    %v2713 = vand.u32 %v2627, 2147483648
    %v2714 = vor.u32 1.1754944e-38, %v2713
    %v2715 = vsel %vm2712, %v2714, %v2710
    %v2716 = vrcp.pop %v2628
    %v2717 = vmul.f32 %v2628, %v2716
    %v2718 = vsub.f32 1.0, %v2717
    %v2719 = vmul.f32 %v2716, %v2718
    %v2720 = vadd.f32 %v2716, %v2719
    %vm2721 = vweird.f32 %v2628
    %vm2722 = vweird.f32 %v2716
    %vm2723 = vmor %vm2721, %vm2722
    %v2724 = vsel %vm2723, %v2716, %v2720
    %v2725 = vand.u32 2147483647, %v2628
    %vm2726 = vcmp.eq.f32.partialorder %v2725, 8.507059e+37
    %v2727 = vand.u32 %v2628, 2147483648
    %v2728 = vor.u32 1.1754944e-38, %v2727
    %v2729 = vsel %vm2726, %v2728, %v2724
    %v2730 = vrcp.pop %v2629
    %v2731 = vmul.f32 %v2629, %v2730
    %v2732 = vsub.f32 1.0, %v2731
    %v2733 = vmul.f32 %v2730, %v2732
    %v2734 = vadd.f32 %v2730, %v2733
    %vm2735 = vweird.f32 %v2629
    %vm2736 = vweird.f32 %v2730
    %vm2737 = vmor %vm2735, %vm2736
    %v2738 = vsel %vm2737, %v2730, %v2734
    %v2739 = vand.u32 2147483647, %v2629
    %vm2740 = vcmp.eq.f32.partialorder %v2739, 8.507059e+37
    %v2741 = vand.u32 %v2629, 2147483648
    %v2742 = vor.u32 1.1754944e-38, %v2741
    %v2743 = vsel %vm2740, %v2742, %v2738
    %v2744 = vrcp.pop %v2630
    %v2745 = vmul.f32 %v2630, %v2744
    %v2746 = vsub.f32 1.0, %v2745
    %v2747 = vmul.f32 %v2744, %v2746
    %v2748 = vadd.f32 %v2744, %v2747
    %vm2749 = vweird.f32 %v2630
    %vm2750 = vweird.f32 %v2744
    %vm2751 = vmor %vm2749, %vm2750
    %v2752 = vsel %vm2751, %v2744, %v2748
    %v2753 = vand.u32 2147483647, %v2630
    %vm2754 = vcmp.eq.f32.partialorder %v2753, 8.507059e+37
    %v2755 = vand.u32 %v2630, 2147483648
    %v2756 = vor.u32 1.1754944e-38, %v2755
    %v2757 = vsel %vm2754, %v2756, %v2752
    %v2758 = vrcp.pop %v2631
    %v2759 = vmul.f32 %v2631, %v2758
    %v2760 = vsub.f32 1.0, %v2759
    %v2761 = vmul.f32 %v2758, %v2760
    %v2762 = vadd.f32 %v2758, %v2761
    %vm2763 = vweird.f32 %v2631
    %vm2764 = vweird.f32 %v2758
    %vm2765 = vmor %vm2763, %vm2764
    %v2766 = vsel %vm2765, %v2758, %v2762
    %v2767 = vand.u32 2147483647, %v2631
    %vm2768 = vcmp.eq.f32.partialorder %v2767, 8.507059e+37
    %v2769 = vand.u32 %v2631, 2147483648
    %v2770 = vor.u32 1.1754944e-38, %v2769
    %v2771 = vsel %vm2768, %v2770, %v2766
    %v2772 = vmul.f32 %v2612, %v2645
    %v2773 = vmul.f32 %v2613, %v2659
    %v2774 = vmul.f32 %v2614, %v2673
    %v2775 = vmul.f32 %v2615, %v2687
    %v2776 = vmul.f32 %v2616, %v2701
    %v2777 = vmul.f32 %v2617, %v2715
    %v2778 = vmul.f32 %v2618, %v2729
    %v2779 = vmul.f32 %v2619, %v2743
    %v2780 = vmul.f32 %v2620, %v2757
    %v2781 = vmul.f32 %v2621, %v2771
    %2782 = vset.pattern.permute.xlu0 2
    %2783 = vperm.xlu0 %2782, %v1604
    %v2784 = vpop.permute.xlu0 %2783
    %v2786 = vmul.f32 %v2772, %v2784
    %v2787 = vmul.f32 %v2773, %v2784
    %v2788 = vadd.f32 %v2439, %v2786
    %v2789 = vadd.f32 %v2440, %v2787
    %v2790 = vld [vmem:[%s7] sm:$0xff]
    %v2791 = vld [vmem:[%s7 + $0x8] sm:$0x7f]
    %v2792 = vld [vmem:[%s8] sm:$0xff]
    %v2793 = vld [vmem:[%s8 + $0x8] sm:$0x7f]
    %2795 = vset.pattern.permute.xlu0 0
    %2796 = vperm.xlu0 %2795, %v2790
    %v2797 = vpop.permute.xlu0 %2796
    %2800 = vset.pattern.permute.xlu0 0
    %2801 = vperm.xlu0 %2800, %v2791
    %v2802 = vpop.permute.xlu0 %2801
    %v2804 = vperm.slane %v2772, 0
    %v2805 = vperm.slane %v2773, 0
    %v2806 = vmul.f32 %v2797, %v2804
    %v2807 = vmul.f32 %v2797, %v2805
    %v2808 = vmul.f32 %v2802, %v2804
    %v2809 = vmul.f32 %v2802, %v2805
    %2811 = vset.pattern.permute.xlu0 0
    %2812 = vperm.xlu0 %2811, %v2792
    %v2813 = vpop.permute.xlu0 %2812
    %2816 = vset.pattern.permute.xlu0 0
    %2817 = vperm.xlu0 %2816, %v2793
    %v2818 = vpop.permute.xlu0 %2817
    %v2820 = vadd.f32 %v2813, %v2806
    %v2821 = vadd.f32 %v2813, %v2807
    %v2822 = vadd.f32 %v2818, %v2808
    %v2823 = vadd.f32 %v2818, %v2809
    %2824 = vset.pattern.permute.xlu0 1
    %2825 = vperm.xlu0 %2824, %v2790
    %v2826 = vpop.permute.xlu0 %2825
    %2828 = vset.pattern.permute.xlu0 1
    %2829 = vperm.xlu0 %2828, %v2791
    %v2830 = vpop.permute.xlu0 %2829
    %v2832 = vperm.slane %v2772, 1
    %v2833 = vperm.slane %v2773, 1
    %v2834 = vmul.f32 %v2826, %v2832
    %v2835 = vmul.f32 %v2826, %v2833
    %v2836 = vmul.f32 %v2830, %v2832
    %v2837 = vmul.f32 %v2830, %v2833
    %v2838 = vadd.f32 %v2820, %v2834
    %v2839 = vadd.f32 %v2821, %v2835
    %v2840 = vadd.f32 %v2822, %v2836
    %v2841 = vadd.f32 %v2823, %v2837
    %2842 = vset.pattern.permute.xlu0 2
    %2843 = vperm.xlu0 %2842, %v2790
    %v2844 = vpop.permute.xlu0 %2843
    %2846 = vset.pattern.permute.xlu0 2
    %2847 = vperm.xlu0 %2846, %v2791
    %v2848 = vpop.permute.xlu0 %2847
    %v2850 = vperm.slane %v2772, 2
    %v2851 = vperm.slane %v2773, 2
    %v2852 = vmul.f32 %v2844, %v2850
    %v2853 = vmul.f32 %v2844, %v2851
    %v2854 = vmul.f32 %v2848, %v2850
    %v2855 = vmul.f32 %v2848, %v2851
    %v2856 = vadd.f32 %v2838, %v2852
    %v2857 = vadd.f32 %v2839, %v2853
    %v2858 = vadd.f32 %v2840, %v2854
    %v2859 = vadd.f32 %v2841, %v2855
    %2860 = vset.pattern.permute.xlu0 3
    %2861 = vperm.xlu0 %2860, %v2790
    %v2862 = vpop.permute.xlu0 %2861
    %2864 = vset.pattern.permute.xlu0 3
    %2865 = vperm.xlu0 %2864, %v2791
    %v2866 = vpop.permute.xlu0 %2865
    %v2868 = vperm.slane %v2772, 3
    %v2869 = vperm.slane %v2773, 3
    %v2870 = vmul.f32 %v2862, %v2868
    %v2871 = vmul.f32 %v2862, %v2869
    %v2872 = vmul.f32 %v2866, %v2868
    %v2873 = vmul.f32 %v2866, %v2869
    %v2874 = vadd.f32 %v2856, %v2870
    %v2875 = vadd.f32 %v2857, %v2871
    %v2876 = vadd.f32 %v2858, %v2872
    %v2877 = vadd.f32 %v2859, %v2873
    %2878 = vset.pattern.permute.xlu0 4
    %2879 = vperm.xlu0 %2878, %v2790
    %v2880 = vpop.permute.xlu0 %2879
    %2882 = vset.pattern.permute.xlu0 4
    %2883 = vperm.xlu0 %2882, %v2791
    %v2884 = vpop.permute.xlu0 %2883
    %v2886 = vperm.slane %v2772, 4
    %v2887 = vperm.slane %v2773, 4
    %v2888 = vmul.f32 %v2880, %v2886
    %v2889 = vmul.f32 %v2880, %v2887
    %v2890 = vmul.f32 %v2884, %v2886
    %v2891 = vmul.f32 %v2884, %v2887
    %v2892 = vadd.f32 %v2874, %v2888
    %v2893 = vadd.f32 %v2875, %v2889
    %v2894 = vadd.f32 %v2876, %v2890
    %v2895 = vadd.f32 %v2877, %v2891
    %2896 = vset.pattern.permute.xlu0 5
    %2897 = vperm.xlu0 %2896, %v2790
    %v2898 = vpop.permute.xlu0 %2897
    %2900 = vset.pattern.permute.xlu0 5
    %2901 = vperm.xlu0 %2900, %v2791
    %v2902 = vpop.permute.xlu0 %2901
    %v2904 = vperm.slane %v2772, 5
    %v2905 = vperm.slane %v2773, 5
    %v2906 = vmul.f32 %v2898, %v2904
    %v2907 = vmul.f32 %v2898, %v2905
    %v2908 = vmul.f32 %v2902, %v2904
    %v2909 = vmul.f32 %v2902, %v2905
    %v2910 = vadd.f32 %v2892, %v2906
    %v2911 = vadd.f32 %v2893, %v2907
    %v2912 = vadd.f32 %v2894, %v2908
    %v2913 = vadd.f32 %v2895, %v2909
    %2914 = vset.pattern.permute.xlu0 6
    %2915 = vperm.xlu0 %2914, %v2790
    %v2916 = vpop.permute.xlu0 %2915
    %2918 = vset.pattern.permute.xlu0 6
    %2919 = vperm.xlu0 %2918, %v2791
    %v2920 = vpop.permute.xlu0 %2919
    %v2922 = vperm.slane %v2772, 6
    %v2923 = vperm.slane %v2773, 6
    %v2924 = vmul.f32 %v2916, %v2922
    %v2925 = vmul.f32 %v2916, %v2923
    %v2926 = vmul.f32 %v2920, %v2922
    %v2927 = vmul.f32 %v2920, %v2923
    %v2928 = vadd.f32 %v2910, %v2924
    %v2929 = vadd.f32 %v2911, %v2925
    %v2930 = vadd.f32 %v2912, %v2926
    %v2931 = vadd.f32 %v2913, %v2927
    %2932 = vset.pattern.permute.xlu0 7
    %2933 = vperm.xlu0 %2932, %v2790
    %v2934 = vpop.permute.xlu0 %2933
    %2936 = vset.pattern.permute.xlu0 7
    %2937 = vperm.xlu0 %2936, %v2791
    %v2938 = vpop.permute.xlu0 %2937
    %v2940 = vperm.slane %v2772, 7
    %v2941 = vperm.slane %v2773, 7
    %v2942 = vmul.f32 %v2934, %v2940
    %v2943 = vmul.f32 %v2934, %v2941
    %v2944 = vmul.f32 %v2938, %v2940
    %v2945 = vmul.f32 %v2938, %v2941
    %v2946 = vadd.f32 %v2928, %v2942
    %v2947 = vadd.f32 %v2929, %v2943
    %v2948 = vadd.f32 %v2930, %v2944
    %v2949 = vadd.f32 %v2931, %v2945
    %2950 = vset.pattern.permute.xlu0 8
    %2951 = vperm.xlu0 %2950, %v2790
    %v2952 = vpop.permute.xlu0 %2951
    %2954 = vset.pattern.permute.xlu0 8
    %2955 = vperm.xlu0 %2954, %v2791
    %v2956 = vpop.permute.xlu0 %2955
    %v2958 = vperm.slane %v2774, 0
    %v2959 = vperm.slane %v2775, 0
    %v2960 = vmul.f32 %v2952, %v2958
    %v2961 = vmul.f32 %v2952, %v2959
    %v2962 = vmul.f32 %v2956, %v2958
    %v2963 = vmul.f32 %v2956, %v2959
    %v2964 = vadd.f32 %v2946, %v2960
    %v2965 = vadd.f32 %v2947, %v2961
    %v2966 = vadd.f32 %v2948, %v2962
    %v2967 = vadd.f32 %v2949, %v2963
    %2968 = vset.pattern.permute.xlu0 9
    %2969 = vperm.xlu0 %2968, %v2790
    %v2970 = vpop.permute.xlu0 %2969
    %2972 = vset.pattern.permute.xlu0 9
    %2973 = vperm.xlu0 %2972, %v2791
    %v2974 = vpop.permute.xlu0 %2973
    %v2976 = vperm.slane %v2774, 1
    %v2977 = vperm.slane %v2775, 1
    %v2978 = vmul.f32 %v2970, %v2976
    %v2979 = vmul.f32 %v2970, %v2977
    %v2980 = vmul.f32 %v2974, %v2976
    %v2981 = vmul.f32 %v2974, %v2977
    %v2982 = vadd.f32 %v2964, %v2978
    %v2983 = vadd.f32 %v2965, %v2979
    %v2984 = vadd.f32 %v2966, %v2980
    %v2985 = vadd.f32 %v2967, %v2981
    %2986 = vset.pattern.permute.xlu0 10
    %2987 = vperm.xlu0 %2986, %v2790
    %v2988 = vpop.permute.xlu0 %2987
    %2990 = vset.pattern.permute.xlu0 10
    %2991 = vperm.xlu0 %2990, %v2791
    %v2992 = vpop.permute.xlu0 %2991
    %v2994 = vperm.slane %v2774, 2
    %v2995 = vperm.slane %v2775, 2
    %v2996 = vmul.f32 %v2988, %v2994
    %v2997 = vmul.f32 %v2988, %v2995
    %v2998 = vmul.f32 %v2992, %v2994
    %v2999 = vmul.f32 %v2992, %v2995
    %v3000 = vadd.f32 %v2982, %v2996
    %v3001 = vadd.f32 %v2983, %v2997
    %v3002 = vadd.f32 %v2984, %v2998
    %v3003 = vadd.f32 %v2985, %v2999
    %3004 = vset.pattern.permute.xlu0 11
    %3005 = vperm.xlu0 %3004, %v2790
    %v3006 = vpop.permute.xlu0 %3005
    %3008 = vset.pattern.permute.xlu0 11
    %3009 = vperm.xlu0 %3008, %v2791
    %v3010 = vpop.permute.xlu0 %3009
    %v3012 = vperm.slane %v2774, 3
    %v3013 = vperm.slane %v2775, 3
    %v3014 = vmul.f32 %v3006, %v3012
    %v3015 = vmul.f32 %v3006, %v3013
    %v3016 = vmul.f32 %v3010, %v3012
    %v3017 = vmul.f32 %v3010, %v3013
    %v3018 = vadd.f32 %v3000, %v3014
    %v3019 = vadd.f32 %v3001, %v3015
    %v3020 = vadd.f32 %v3002, %v3016
    %v3021 = vadd.f32 %v3003, %v3017
    %3022 = vset.pattern.permute.xlu0 12
    %3023 = vperm.xlu0 %3022, %v2790
    %v3024 = vpop.permute.xlu0 %3023
    %3026 = vset.pattern.permute.xlu0 12
    %3027 = vperm.xlu0 %3026, %v2791
    %v3028 = vpop.permute.xlu0 %3027
    %v3030 = vperm.slane %v2774, 4
    %v3031 = vperm.slane %v2775, 4
    %v3032 = vmul.f32 %v3024, %v3030
    %v3033 = vmul.f32 %v3024, %v3031
    %v3034 = vmul.f32 %v3028, %v3030
    %v3035 = vmul.f32 %v3028, %v3031
    %v3036 = vadd.f32 %v3018, %v3032
    %v3037 = vadd.f32 %v3019, %v3033
    %v3038 = vadd.f32 %v3020, %v3034
    %v3039 = vadd.f32 %v3021, %v3035
    %3040 = vset.pattern.permute.xlu0 13
    %3041 = vperm.xlu0 %3040, %v2790
    %v3042 = vpop.permute.xlu0 %3041
    %3044 = vset.pattern.permute.xlu0 13
    %3045 = vperm.xlu0 %3044, %v2791
    %v3046 = vpop.permute.xlu0 %3045
    %v3048 = vperm.slane %v2774, 5
    %v3049 = vperm.slane %v2775, 5
    %v3050 = vmul.f32 %v3042, %v3048
    %v3051 = vmul.f32 %v3042, %v3049
    %v3052 = vmul.f32 %v3046, %v3048
    %v3053 = vmul.f32 %v3046, %v3049
    %v3054 = vadd.f32 %v3036, %v3050
    %v3055 = vadd.f32 %v3037, %v3051
    %v3056 = vadd.f32 %v3038, %v3052
    %v3057 = vadd.f32 %v3039, %v3053
    %3058 = vset.pattern.permute.xlu0 14
    %3059 = vperm.xlu0 %3058, %v2790
    %v3060 = vpop.permute.xlu0 %3059
    %3062 = vset.pattern.permute.xlu0 14
    %3063 = vperm.xlu0 %3062, %v2791
    %v3064 = vpop.permute.xlu0 %3063
    %v3066 = vperm.slane %v2774, 6
    %v3067 = vperm.slane %v2775, 6
    %v3068 = vmul.f32 %v3060, %v3066
    %v3069 = vmul.f32 %v3060, %v3067
    %v3070 = vmul.f32 %v3064, %v3066
    %v3071 = vmul.f32 %v3064, %v3067
    %v3072 = vadd.f32 %v3054, %v3068
    %v3073 = vadd.f32 %v3055, %v3069
    %v3074 = vadd.f32 %v3056, %v3070
    %v3075 = vadd.f32 %v3057, %v3071
    %3076 = vset.pattern.permute.xlu0 15
    %3077 = vperm.xlu0 %3076, %v2790
    %v3078 = vpop.permute.xlu0 %3077
    %3080 = vset.pattern.permute.xlu0 15
    %3081 = vperm.xlu0 %3080, %v2791
    %v3082 = vpop.permute.xlu0 %3081
    %v3084 = vperm.slane %v2774, 7
    %v3085 = vperm.slane %v2775, 7
    %v3086 = vmul.f32 %v3078, %v3084
    %v3087 = vmul.f32 %v3078, %v3085
    %v3088 = vmul.f32 %v3082, %v3084
    %v3089 = vmul.f32 %v3082, %v3085
    %v3090 = vadd.f32 %v3072, %v3086
    %v3091 = vadd.f32 %v3073, %v3087
    %v3092 = vadd.f32 %v3074, %v3088
    %v3093 = vadd.f32 %v3075, %v3089
    %3094 = vset.pattern.permute.xlu0 16
    %3095 = vperm.xlu0 %3094, %v2790
    %v3096 = vpop.permute.xlu0 %3095
    %3098 = vset.pattern.permute.xlu0 16
    %3099 = vperm.xlu0 %3098, %v2791
    %v3100 = vpop.permute.xlu0 %3099
    %v3102 = vperm.slane %v2776, 0
    %v3103 = vperm.slane %v2777, 0
    %v3104 = vmul.f32 %v3096, %v3102
    %v3105 = vmul.f32 %v3096, %v3103
    %v3106 = vmul.f32 %v3100, %v3102
    %v3107 = vmul.f32 %v3100, %v3103
    %v3108 = vadd.f32 %v3090, %v3104
    %v3109 = vadd.f32 %v3091, %v3105
    %v3110 = vadd.f32 %v3092, %v3106
    %v3111 = vadd.f32 %v3093, %v3107
    %3112 = vset.pattern.permute.xlu0 17
    %3113 = vperm.xlu0 %3112, %v2790
    %v3114 = vpop.permute.xlu0 %3113
    %3116 = vset.pattern.permute.xlu0 17
    %3117 = vperm.xlu0 %3116, %v2791
    %v3118 = vpop.permute.xlu0 %3117
    %v3120 = vperm.slane %v2776, 1
    %v3121 = vperm.slane %v2777, 1
    %v3122 = vmul.f32 %v3114, %v3120
    %v3123 = vmul.f32 %v3114, %v3121
    %v3124 = vmul.f32 %v3118, %v3120
    %v3125 = vmul.f32 %v3118, %v3121
    %v3126 = vadd.f32 %v3108, %v3122
    %v3127 = vadd.f32 %v3109, %v3123
    %v3128 = vadd.f32 %v3110, %v3124
    %v3129 = vadd.f32 %v3111, %v3125
    %3130 = vset.pattern.permute.xlu0 18
    %3131 = vperm.xlu0 %3130, %v2790
    %v3132 = vpop.permute.xlu0 %3131
    %3134 = vset.pattern.permute.xlu0 18
    %3135 = vperm.xlu0 %3134, %v2791
    %v3136 = vpop.permute.xlu0 %3135
    %v3138 = vperm.slane %v2776, 2
    %v3139 = vperm.slane %v2777, 2
    %v3140 = vmul.f32 %v3132, %v3138
    %v3141 = vmul.f32 %v3132, %v3139
    %v3142 = vmul.f32 %v3136, %v3138
    %v3143 = vmul.f32 %v3136, %v3139
    %v3144 = vadd.f32 %v3126, %v3140
    %v3145 = vadd.f32 %v3127, %v3141
    %v3146 = vadd.f32 %v3128, %v3142
    %v3147 = vadd.f32 %v3129, %v3143
    %3148 = vset.pattern.permute.xlu0 19
    %3149 = vperm.xlu0 %3148, %v2790
    %v3150 = vpop.permute.xlu0 %3149
    %3152 = vset.pattern.permute.xlu0 19
    %3153 = vperm.xlu0 %3152, %v2791
    %v3154 = vpop.permute.xlu0 %3153
    %v3156 = vperm.slane %v2776, 3
    %v3157 = vperm.slane %v2777, 3
    %v3158 = vmul.f32 %v3150, %v3156
    %v3159 = vmul.f32 %v3150, %v3157
    %v3160 = vmul.f32 %v3154, %v3156
    %v3161 = vmul.f32 %v3154, %v3157
    %v3162 = vadd.f32 %v3144, %v3158
    %v3163 = vadd.f32 %v3145, %v3159
    %v3164 = vadd.f32 %v3146, %v3160
    %v3165 = vadd.f32 %v3147, %v3161
    %3166 = vset.pattern.permute.xlu0 20
    %3167 = vperm.xlu0 %3166, %v2790
    %v3168 = vpop.permute.xlu0 %3167
    %3170 = vset.pattern.permute.xlu0 20
    %3171 = vperm.xlu0 %3170, %v2791
    %v3172 = vpop.permute.xlu0 %3171
    %v3174 = vperm.slane %v2776, 4
    %v3175 = vperm.slane %v2777, 4
    %v3176 = vmul.f32 %v3168, %v3174
    %v3177 = vmul.f32 %v3168, %v3175
    %v3178 = vmul.f32 %v3172, %v3174
    %v3179 = vmul.f32 %v3172, %v3175
    %v3180 = vadd.f32 %v3162, %v3176
    %v3181 = vadd.f32 %v3163, %v3177
    %v3182 = vadd.f32 %v3164, %v3178
    %v3183 = vadd.f32 %v3165, %v3179
    %3184 = vset.pattern.permute.xlu0 21
    %3185 = vperm.xlu0 %3184, %v2790
    %v3186 = vpop.permute.xlu0 %3185
    %3188 = vset.pattern.permute.xlu0 21
    %3189 = vperm.xlu0 %3188, %v2791
    %v3190 = vpop.permute.xlu0 %3189
    %v3192 = vperm.slane %v2776, 5
    %v3193 = vperm.slane %v2777, 5
    %v3194 = vmul.f32 %v3186, %v3192
    %v3195 = vmul.f32 %v3186, %v3193
    %v3196 = vmul.f32 %v3190, %v3192
    %v3197 = vmul.f32 %v3190, %v3193
    %v3198 = vadd.f32 %v3180, %v3194
    %v3199 = vadd.f32 %v3181, %v3195
    %v3200 = vadd.f32 %v3182, %v3196
    %v3201 = vadd.f32 %v3183, %v3197
    %3202 = vset.pattern.permute.xlu0 22
    %3203 = vperm.xlu0 %3202, %v2790
    %v3204 = vpop.permute.xlu0 %3203
    %3206 = vset.pattern.permute.xlu0 22
    %3207 = vperm.xlu0 %3206, %v2791
    %v3208 = vpop.permute.xlu0 %3207
    %v3210 = vperm.slane %v2776, 6
    %v3211 = vperm.slane %v2777, 6
    %v3212 = vmul.f32 %v3204, %v3210
    %v3213 = vmul.f32 %v3204, %v3211
    %v3214 = vmul.f32 %v3208, %v3210
    %v3215 = vmul.f32 %v3208, %v3211
    %v3216 = vadd.f32 %v3198, %v3212
    %v3217 = vadd.f32 %v3199, %v3213
    %v3218 = vadd.f32 %v3200, %v3214
    %v3219 = vadd.f32 %v3201, %v3215
    %3220 = vset.pattern.permute.xlu0 23
    %3221 = vperm.xlu0 %3220, %v2790
    %v3222 = vpop.permute.xlu0 %3221
    %3224 = vset.pattern.permute.xlu0 23
    %3225 = vperm.xlu0 %3224, %v2791
    %v3226 = vpop.permute.xlu0 %3225
    %v3228 = vperm.slane %v2776, 7
    %v3229 = vperm.slane %v2777, 7
    %v3230 = vmul.f32 %v3222, %v3228
    %v3231 = vmul.f32 %v3222, %v3229
    %v3232 = vmul.f32 %v3226, %v3228
    %v3233 = vmul.f32 %v3226, %v3229
    %v3234 = vadd.f32 %v3216, %v3230
    %v3235 = vadd.f32 %v3217, %v3231
    %v3236 = vadd.f32 %v3218, %v3232
    %v3237 = vadd.f32 %v3219, %v3233
    %3238 = vset.pattern.permute.xlu0 24
    %3239 = vperm.xlu0 %3238, %v2790
    %v3240 = vpop.permute.xlu0 %3239
    %3242 = vset.pattern.permute.xlu0 24
    %3243 = vperm.xlu0 %3242, %v2791
    %v3244 = vpop.permute.xlu0 %3243
    %v3246 = vperm.slane %v2778, 0
    %v3247 = vperm.slane %v2779, 0
    %v3248 = vmul.f32 %v3240, %v3246
    %v3249 = vmul.f32 %v3240, %v3247
    %v3250 = vmul.f32 %v3244, %v3246
    %v3251 = vmul.f32 %v3244, %v3247
    %v3252 = vadd.f32 %v3234, %v3248
    %v3253 = vadd.f32 %v3235, %v3249
    %v3254 = vadd.f32 %v3236, %v3250
    %v3255 = vadd.f32 %v3237, %v3251
    %3256 = vset.pattern.permute.xlu0 25
    %3257 = vperm.xlu0 %3256, %v2790
    %v3258 = vpop.permute.xlu0 %3257
    %3260 = vset.pattern.permute.xlu0 25
    %3261 = vperm.xlu0 %3260, %v2791
    %v3262 = vpop.permute.xlu0 %3261
    %v3264 = vperm.slane %v2778, 1
    %v3265 = vperm.slane %v2779, 1
    %v3266 = vmul.f32 %v3258, %v3264
    %v3267 = vmul.f32 %v3258, %v3265
    %v3268 = vmul.f32 %v3262, %v3264
    %v3269 = vmul.f32 %v3262, %v3265
    %v3270 = vadd.f32 %v3252, %v3266
    %v3271 = vadd.f32 %v3253, %v3267
    %v3272 = vadd.f32 %v3254, %v3268
    %v3273 = vadd.f32 %v3255, %v3269
    %3274 = vset.pattern.permute.xlu0 26
    %3275 = vperm.xlu0 %3274, %v2790
    %v3276 = vpop.permute.xlu0 %3275
    %3278 = vset.pattern.permute.xlu0 26
    %3279 = vperm.xlu0 %3278, %v2791
    %v3280 = vpop.permute.xlu0 %3279
    %v3282 = vperm.slane %v2778, 2
    %v3283 = vperm.slane %v2779, 2
    %v3284 = vmul.f32 %v3276, %v3282
    %v3285 = vmul.f32 %v3276, %v3283
    %v3286 = vmul.f32 %v3280, %v3282
    %v3287 = vmul.f32 %v3280, %v3283
    %v3288 = vadd.f32 %v3270, %v3284
    %v3289 = vadd.f32 %v3271, %v3285
    %v3290 = vadd.f32 %v3272, %v3286
    %v3291 = vadd.f32 %v3273, %v3287
    %3292 = vset.pattern.permute.xlu0 27
    %3293 = vperm.xlu0 %3292, %v2790
    %v3294 = vpop.permute.xlu0 %3293
    %3296 = vset.pattern.permute.xlu0 27
    %3297 = vperm.xlu0 %3296, %v2791
    %v3298 = vpop.permute.xlu0 %3297
    %v3300 = vperm.slane %v2778, 3
    %v3301 = vperm.slane %v2779, 3
    %v3302 = vmul.f32 %v3294, %v3300
    %v3303 = vmul.f32 %v3294, %v3301
    %v3304 = vmul.f32 %v3298, %v3300
    %v3305 = vmul.f32 %v3298, %v3301
    %v3306 = vadd.f32 %v3288, %v3302
    %v3307 = vadd.f32 %v3289, %v3303
    %v3308 = vadd.f32 %v3290, %v3304
    %v3309 = vadd.f32 %v3291, %v3305
    %3310 = vset.pattern.permute.xlu0 28
    %3311 = vperm.xlu0 %3310, %v2790
    %v3312 = vpop.permute.xlu0 %3311
    %3314 = vset.pattern.permute.xlu0 28
    %3315 = vperm.xlu0 %3314, %v2791
    %v3316 = vpop.permute.xlu0 %3315
    %v3318 = vperm.slane %v2778, 4
    %v3319 = vperm.slane %v2779, 4
    %v3320 = vmul.f32 %v3312, %v3318
    %v3321 = vmul.f32 %v3312, %v3319
    %v3322 = vmul.f32 %v3316, %v3318
    %v3323 = vmul.f32 %v3316, %v3319
    %v3324 = vadd.f32 %v3306, %v3320
    %v3325 = vadd.f32 %v3307, %v3321
    %v3326 = vadd.f32 %v3308, %v3322
    %v3327 = vadd.f32 %v3309, %v3323
    %3328 = vset.pattern.permute.xlu0 29
    %3329 = vperm.xlu0 %3328, %v2790
    %v3330 = vpop.permute.xlu0 %3329
    %3332 = vset.pattern.permute.xlu0 29
    %3333 = vperm.xlu0 %3332, %v2791
    %v3334 = vpop.permute.xlu0 %3333
    %v3336 = vperm.slane %v2778, 5
    %v3337 = vperm.slane %v2779, 5
    %v3338 = vmul.f32 %v3330, %v3336
    %v3339 = vmul.f32 %v3330, %v3337
    %v3340 = vmul.f32 %v3334, %v3336
    %v3341 = vmul.f32 %v3334, %v3337
    %v3342 = vadd.f32 %v3324, %v3338
    %v3343 = vadd.f32 %v3325, %v3339
    %v3344 = vadd.f32 %v3326, %v3340
    %v3345 = vadd.f32 %v3327, %v3341
    %3346 = vset.pattern.permute.xlu0 30
    %3347 = vperm.xlu0 %3346, %v2790
    %v3348 = vpop.permute.xlu0 %3347
    %3350 = vset.pattern.permute.xlu0 30
    %3351 = vperm.xlu0 %3350, %v2791
    %v3352 = vpop.permute.xlu0 %3351
    %v3354 = vperm.slane %v2778, 6
    %v3355 = vperm.slane %v2779, 6
    %v3356 = vmul.f32 %v3348, %v3354
    %v3357 = vmul.f32 %v3348, %v3355
    %v3358 = vmul.f32 %v3352, %v3354
    %v3359 = vmul.f32 %v3352, %v3355
    %v3360 = vadd.f32 %v3342, %v3356
    %v3361 = vadd.f32 %v3343, %v3357
    %v3362 = vadd.f32 %v3344, %v3358
    %v3363 = vadd.f32 %v3345, %v3359
    %3364 = vset.pattern.permute.xlu0 31
    %3365 = vperm.xlu0 %3364, %v2790
    %v3366 = vpop.permute.xlu0 %3365
    %3368 = vset.pattern.permute.xlu0 31
    %3369 = vperm.xlu0 %3368, %v2791
    %v3370 = vpop.permute.xlu0 %3369
    %v3372 = vperm.slane %v2778, 7
    %v3373 = vperm.slane %v2779, 7
    %v3374 = vmul.f32 %v3366, %v3372
    %v3375 = vmul.f32 %v3366, %v3373
    %v3376 = vmul.f32 %v3370, %v3372
    %v3377 = vmul.f32 %v3370, %v3373
    %v3378 = vadd.f32 %v3360, %v3374
    %v3379 = vadd.f32 %v3361, %v3375
    %v3380 = vadd.f32 %v3362, %v3376
    %v3381 = vadd.f32 %v3363, %v3377
    %3382 = vset.pattern.permute.xlu0 32
    %3383 = vperm.xlu0 %3382, %v2790
    %v3384 = vpop.permute.xlu0 %3383
    %3386 = vset.pattern.permute.xlu0 32
    %3387 = vperm.xlu0 %3386, %v2791
    %v3388 = vpop.permute.xlu0 %3387
    %v3390 = vperm.slane %v2780, 0
    %v3391 = vperm.slane %v2781, 0
    %v3392 = vmul.f32 %v3384, %v3390
    %v3393 = vmul.f32 %v3384, %v3391
    %v3394 = vmul.f32 %v3388, %v3390
    %v3395 = vmul.f32 %v3388, %v3391
    %v3396 = vadd.f32 %v3378, %v3392
    %v3397 = vadd.f32 %v3379, %v3393
    %v3398 = vadd.f32 %v3380, %v3394
    %v3399 = vadd.f32 %v3381, %v3395
    %3400 = vset.pattern.permute.xlu0 33
    %3401 = vperm.xlu0 %3400, %v2790
    %v3402 = vpop.permute.xlu0 %3401
    %3404 = vset.pattern.permute.xlu0 33
    %3405 = vperm.xlu0 %3404, %v2791
    %v3406 = vpop.permute.xlu0 %3405
    %v3408 = vperm.slane %v2780, 1
    %v3409 = vperm.slane %v2781, 1
    %v3410 = vmul.f32 %v3402, %v3408
    %v3411 = vmul.f32 %v3402, %v3409
    %v3412 = vmul.f32 %v3406, %v3408
    %v3413 = vmul.f32 %v3406, %v3409
    %v3414 = vadd.f32 %v3396, %v3410
    %v3415 = vadd.f32 %v3397, %v3411
    %v3416 = vadd.f32 %v3398, %v3412
    %v3417 = vadd.f32 %v3399, %v3413
    %3418 = vset.pattern.permute.xlu0 34
    %3419 = vperm.xlu0 %3418, %v2790
    %v3420 = vpop.permute.xlu0 %3419
    %3422 = vset.pattern.permute.xlu0 34
    %3423 = vperm.xlu0 %3422, %v2791
    %v3424 = vpop.permute.xlu0 %3423
    %v3426 = vperm.slane %v2780, 2
    %v3427 = vperm.slane %v2781, 2
    %v3428 = vmul.f32 %v3420, %v3426
    %v3429 = vmul.f32 %v3420, %v3427
    %v3430 = vmul.f32 %v3424, %v3426
    %v3431 = vmul.f32 %v3424, %v3427
    %v3432 = vadd.f32 %v3414, %v3428
    %v3433 = vadd.f32 %v3415, %v3429
    %v3434 = vadd.f32 %v3416, %v3430
    %v3435 = vadd.f32 %v3417, %v3431
    %3436 = vset.pattern.permute.xlu0 35
    %3437 = vperm.xlu0 %3436, %v2790
    %v3438 = vpop.permute.xlu0 %3437
    %3440 = vset.pattern.permute.xlu0 35
    %3441 = vperm.xlu0 %3440, %v2791
    %v3442 = vpop.permute.xlu0 %3441
    %v3444 = vperm.slane %v2780, 3
    %v3445 = vperm.slane %v2781, 3
    %v3446 = vmul.f32 %v3438, %v3444
    %v3447 = vmul.f32 %v3438, %v3445
    %v3448 = vmul.f32 %v3442, %v3444
    %v3449 = vmul.f32 %v3442, %v3445
    %v3450 = vadd.f32 %v3432, %v3446
    %v3451 = vadd.f32 %v3433, %v3447
    %v3452 = vadd.f32 %v3434, %v3448
    %v3453 = vadd.f32 %v3435, %v3449
    %3454 = vset.pattern.permute.xlu0 36
    %3455 = vperm.xlu0 %3454, %v2790
    %v3456 = vpop.permute.xlu0 %3455
    %3458 = vset.pattern.permute.xlu0 36
    %3459 = vperm.xlu0 %3458, %v2791
    %v3460 = vpop.permute.xlu0 %3459
    %v3462 = vperm.slane %v2780, 4
    %v3463 = vperm.slane %v2781, 4
    %v3464 = vmul.f32 %v3456, %v3462
    %v3465 = vmul.f32 %v3456, %v3463
    %v3466 = vmul.f32 %v3460, %v3462
    %v3467 = vmul.f32 %v3460, %v3463
    %v3468 = vadd.f32 %v3450, %v3464
    %v3469 = vadd.f32 %v3451, %v3465
    %v3470 = vadd.f32 %v3452, %v3466
    %v3471 = vadd.f32 %v3453, %v3467
    %3472 = vset.pattern.permute.xlu0 37
    %3473 = vperm.xlu0 %3472, %v2790
    %v3474 = vpop.permute.xlu0 %3473
    %3476 = vset.pattern.permute.xlu0 37
    %3477 = vperm.xlu0 %3476, %v2791
    %v3478 = vpop.permute.xlu0 %3477
    %v3480 = vperm.slane %v2780, 5
    %v3481 = vperm.slane %v2781, 5
    %v3482 = vmul.f32 %v3474, %v3480
    %v3483 = vmul.f32 %v3474, %v3481
    %v3484 = vmul.f32 %v3478, %v3480
    %v3485 = vmul.f32 %v3478, %v3481
    %v3486 = vadd.f32 %v3468, %v3482
    %v3487 = vadd.f32 %v3469, %v3483
    %v3488 = vadd.f32 %v3470, %v3484
    %v3489 = vadd.f32 %v3471, %v3485
    %3490 = vset.pattern.permute.xlu0 38
    %3491 = vperm.xlu0 %3490, %v2790
    %v3492 = vpop.permute.xlu0 %3491
    %3494 = vset.pattern.permute.xlu0 38
    %3495 = vperm.xlu0 %3494, %v2791
    %v3496 = vpop.permute.xlu0 %3495
    %v3498 = vperm.slane %v2780, 6
    %v3499 = vperm.slane %v2781, 6
    %v3500 = vmul.f32 %v3492, %v3498
    %v3501 = vmul.f32 %v3492, %v3499
    %v3502 = vmul.f32 %v3496, %v3498
    %v3503 = vmul.f32 %v3496, %v3499
    %v3504 = vadd.f32 %v3486, %v3500
    %v3505 = vadd.f32 %v3487, %v3501
    %v3506 = vadd.f32 %v3488, %v3502
    %v3507 = vadd.f32 %v3489, %v3503
    %v3508 = vmin.f32 %v3504, 20.0
    %v3509 = vmin.f32 %v3505, 20.0
    %v3510 = vmin.f32 %v3506, 20.0
    %v3511 = vmin.f32 %v3507, 20.0
    %v3512 = vmul.f32 %v3508, 1.442695
    %v3513 = vpow.pop %v3512
    %v3514 = vmul.f32 %v3509, 1.442695
    %v3515 = vpow.pop %v3514
    %v3516 = vmul.f32 %v3510, 1.442695
    %v3517 = vpow.pop %v3516
    %v3518 = vmul.f32 %v3511, 1.442695
    %v3519 = vpow.pop %v3518
    %v3520 = vadd.f32 %v3513, 2.0
    %v3521 = vadd.f32 %v3515, 2.0
    %v3522 = vadd.f32 %v3517, 2.0
    %v3523 = vadd.f32 %v3519, 2.0
    %v3524 = vmul.f32 %v3513, %v3520
    %v3525 = vmul.f32 %v3515, %v3521
    %v3526 = vmul.f32 %v3517, %v3522
    %v3527 = vmul.f32 %v3519, %v3523
    %v3528 = vmul.f32 %v3504, %v3524
    %v3529 = vmul.f32 %v3505, %v3525
    %v3530 = vmul.f32 %v3506, %v3526
    %v3531 = vmul.f32 %v3507, %v3527
    %v3532 = vadd.f32 %v3524, 2.0
    %v3533 = vadd.f32 %v3525, 2.0
    %v3534 = vadd.f32 %v3526, 2.0
    %v3535 = vadd.f32 %v3527, 2.0
    %v3536 = vrcp.pop %v3532
    %v3537 = vmul.f32 %v3532, %v3536
    %v3538 = vsub.f32 1.0, %v3537
    %v3539 = vmul.f32 %v3536, %v3538
    %v3540 = vadd.f32 %v3536, %v3539
    %vm3541 = vweird.f32 %v3532
    %vm3542 = vweird.f32 %v3536
    %vm3543 = vmor %vm3541, %vm3542
    %v3544 = vsel %vm3543, %v3536, %v3540
    %v3545 = vand.u32 2147483647, %v3532
    %vm3546 = vcmp.eq.f32.partialorder %v3545, 8.507059e+37
    %v3547 = vand.u32 %v3532, 2147483648
    %v3548 = vor.u32 1.1754944e-38, %v3547
    %v3549 = vsel %vm3546, %v3548, %v3544
    %v3550 = vrcp.pop %v3533
    %v3551 = vmul.f32 %v3533, %v3550
    %v3552 = vsub.f32 1.0, %v3551
    %v3553 = vmul.f32 %v3550, %v3552
    %v3554 = vadd.f32 %v3550, %v3553
    %vm3555 = vweird.f32 %v3533
    %vm3556 = vweird.f32 %v3550
    %vm3557 = vmor %vm3555, %vm3556
    %v3558 = vsel %vm3557, %v3550, %v3554
    %v3559 = vand.u32 2147483647, %v3533
    %vm3560 = vcmp.eq.f32.partialorder %v3559, 8.507059e+37
    %v3561 = vand.u32 %v3533, 2147483648
    %v3562 = vor.u32 1.1754944e-38, %v3561
    %v3563 = vsel %vm3560, %v3562, %v3558
    %v3564 = vrcp.pop %v3534
    %v3565 = vmul.f32 %v3534, %v3564
    %v3566 = vsub.f32 1.0, %v3565
    %v3567 = vmul.f32 %v3564, %v3566
    %v3568 = vadd.f32 %v3564, %v3567
    %vm3569 = vweird.f32 %v3534
    %vm3570 = vweird.f32 %v3564
    %vm3571 = vmor %vm3569, %vm3570
    %v3572 = vsel %vm3571, %v3564, %v3568
    %v3573 = vand.u32 2147483647, %v3534
    %vm3574 = vcmp.eq.f32.partialorder %v3573, 8.507059e+37
    %v3575 = vand.u32 %v3534, 2147483648
    %v3576 = vor.u32 1.1754944e-38, %v3575
    %v3577 = vsel %vm3574, %v3576, %v3572
    %v3578 = vrcp.pop %v3535
    %v3579 = vmul.f32 %v3535, %v3578
    %v3580 = vsub.f32 1.0, %v3579
    %v3581 = vmul.f32 %v3578, %v3580
    %v3582 = vadd.f32 %v3578, %v3581
    %vm3583 = vweird.f32 %v3535
    %vm3584 = vweird.f32 %v3578
    %vm3585 = vmor %vm3583, %vm3584
    %v3586 = vsel %vm3585, %v3578, %v3582
    %v3587 = vand.u32 2147483647, %v3535
    %vm3588 = vcmp.eq.f32.partialorder %v3587, 8.507059e+37
    %v3589 = vand.u32 %v3535, 2147483648
    %v3590 = vor.u32 1.1754944e-38, %v3589
    %v3591 = vsel %vm3588, %v3590, %v3586
    %v3592 = vmul.f32 %v3528, %v3549
    %v3593 = vmul.f32 %v3529, %v3563
    %v3594 = vmul.f32 %v3530, %v3577
    %v3595 = vmul.f32 %v3531, %v3591
    %3596 = vset.pattern.permute.xlu0 1
    %3597 = vperm.xlu0 %3596, %v1604
    %v3598 = vpop.permute.xlu0 %3597
    %v3600 = vmul.f32 %v3592, %v3598
    %v3601 = vmul.f32 %v3593, %v3598
    %v3602 = vadd.f32 %v2788, %v3600
    %v3603 = vadd.f32 %v2789, %v3601
    %v3604 = vld [vmem:[%s9] sm:$0x7]
    %v3605 = vld [vmem:[%s10] sm:$0x7]
    %3607 = vset.pattern.permute.xlu0 0
    %3608 = vperm.xlu0 %3607, %v3604
    %v3609 = vpop.permute.xlu0 %3608
    %v3611 = vperm.slane %v3592, 0
    %v3612 = vperm.slane %v3593, 0
    %v3613 = vmul.f32 %v3609, %v3611
    %v3614 = vmul.f32 %v3609, %v3612
    %3616 = vset.pattern.permute.xlu0 0
    %3617 = vperm.xlu0 %3616, %v3605
    %v3618 = vpop.permute.xlu0 %3617
    %v3620 = vadd.f32 %v3618, %v3613
    %v3621 = vadd.f32 %v3618, %v3614
    %3622 = vset.pattern.permute.xlu0 1
    %3623 = vperm.xlu0 %3622, %v3604
    %v3624 = vpop.permute.xlu0 %3623
    %v3626 = vperm.slane %v3592, 1
    %v3627 = vperm.slane %v3593, 1
    %v3628 = vmul.f32 %v3624, %v3626
    %v3629 = vmul.f32 %v3624, %v3627
    %v3630 = vadd.f32 %v3620, %v3628
    %v3631 = vadd.f32 %v3621, %v3629
    %3632 = vset.pattern.permute.xlu0 2
    %3633 = vperm.xlu0 %3632, %v3604
    %v3634 = vpop.permute.xlu0 %3633
    %v3636 = vperm.slane %v3592, 2
    %v3637 = vperm.slane %v3593, 2
    %v3638 = vmul.f32 %v3634, %v3636
    %v3639 = vmul.f32 %v3634, %v3637
    %v3640 = vadd.f32 %v3630, %v3638
    %v3641 = vadd.f32 %v3631, %v3639
    %3642 = vset.pattern.permute.xlu0 3
    %3643 = vperm.xlu0 %3642, %v3604
    %v3644 = vpop.permute.xlu0 %3643
    %v3646 = vperm.slane %v3592, 3
    %v3647 = vperm.slane %v3593, 3
    %v3648 = vmul.f32 %v3644, %v3646
    %v3649 = vmul.f32 %v3644, %v3647
    %v3650 = vadd.f32 %v3640, %v3648
    %v3651 = vadd.f32 %v3641, %v3649
    %3652 = vset.pattern.permute.xlu0 4
    %3653 = vperm.xlu0 %3652, %v3604
    %v3654 = vpop.permute.xlu0 %3653
    %v3656 = vperm.slane %v3592, 4
    %v3657 = vperm.slane %v3593, 4
    %v3658 = vmul.f32 %v3654, %v3656
    %v3659 = vmul.f32 %v3654, %v3657
    %v3660 = vadd.f32 %v3650, %v3658
    %v3661 = vadd.f32 %v3651, %v3659
    %3662 = vset.pattern.permute.xlu0 5
    %3663 = vperm.xlu0 %3662, %v3604
    %v3664 = vpop.permute.xlu0 %3663
    %v3666 = vperm.slane %v3592, 5
    %v3667 = vperm.slane %v3593, 5
    %v3668 = vmul.f32 %v3664, %v3666
    %v3669 = vmul.f32 %v3664, %v3667
    %v3670 = vadd.f32 %v3660, %v3668
    %v3671 = vadd.f32 %v3661, %v3669
    %3672 = vset.pattern.permute.xlu0 6
    %3673 = vperm.xlu0 %3672, %v3604
    %v3674 = vpop.permute.xlu0 %3673
    %v3676 = vperm.slane %v3592, 6
    %v3677 = vperm.slane %v3593, 6
    %v3678 = vmul.f32 %v3674, %v3676
    %v3679 = vmul.f32 %v3674, %v3677
    %v3680 = vadd.f32 %v3670, %v3678
    %v3681 = vadd.f32 %v3671, %v3679
    %3682 = vset.pattern.permute.xlu0 7
    %3683 = vperm.xlu0 %3682, %v3604
    %v3684 = vpop.permute.xlu0 %3683
    %v3686 = vperm.slane %v3592, 7
    %v3687 = vperm.slane %v3593, 7
    %v3688 = vmul.f32 %v3684, %v3686
    %v3689 = vmul.f32 %v3684, %v3687
    %v3690 = vadd.f32 %v3680, %v3688
    %v3691 = vadd.f32 %v3681, %v3689
    %3692 = vset.pattern.permute.xlu0 8
    %3693 = vperm.xlu0 %3692, %v3604
    %v3694 = vpop.permute.xlu0 %3693
    %v3696 = vperm.slane %v3594, 0
    %v3697 = vperm.slane %v3595, 0
    %v3698 = vmul.f32 %v3694, %v3696
    %v3699 = vmul.f32 %v3694, %v3697
    %v3700 = vadd.f32 %v3690, %v3698
    %v3701 = vadd.f32 %v3691, %v3699
    %3702 = vset.pattern.permute.xlu0 9
    %3703 = vperm.xlu0 %3702, %v3604
    %v3704 = vpop.permute.xlu0 %3703
    %v3706 = vperm.slane %v3594, 1
    %v3707 = vperm.slane %v3595, 1
    %v3708 = vmul.f32 %v3704, %v3706
    %v3709 = vmul.f32 %v3704, %v3707
    %v3710 = vadd.f32 %v3700, %v3708
    %v3711 = vadd.f32 %v3701, %v3709
    %3712 = vset.pattern.permute.xlu0 10
    %3713 = vperm.xlu0 %3712, %v3604
    %v3714 = vpop.permute.xlu0 %3713
    %v3716 = vperm.slane %v3594, 2
    %v3717 = vperm.slane %v3595, 2
    %v3718 = vmul.f32 %v3714, %v3716
    %v3719 = vmul.f32 %v3714, %v3717
    %v3720 = vadd.f32 %v3710, %v3718
    %v3721 = vadd.f32 %v3711, %v3719
    %3722 = vset.pattern.permute.xlu0 11
    %3723 = vperm.xlu0 %3722, %v3604
    %v3724 = vpop.permute.xlu0 %3723
    %v3726 = vperm.slane %v3594, 3
    %v3727 = vperm.slane %v3595, 3
    %v3728 = vmul.f32 %v3724, %v3726
    %v3729 = vmul.f32 %v3724, %v3727
    %v3730 = vadd.f32 %v3720, %v3728
    %v3731 = vadd.f32 %v3721, %v3729
    %3732 = vset.pattern.permute.xlu0 12
    %3733 = vperm.xlu0 %3732, %v3604
    %v3734 = vpop.permute.xlu0 %3733
    %v3736 = vperm.slane %v3594, 4
    %v3737 = vperm.slane %v3595, 4
    %v3738 = vmul.f32 %v3734, %v3736
    %v3739 = vmul.f32 %v3734, %v3737
    %v3740 = vadd.f32 %v3730, %v3738
    %v3741 = vadd.f32 %v3731, %v3739
    %3742 = vset.pattern.permute.xlu0 13
    %3743 = vperm.xlu0 %3742, %v3604
    %v3744 = vpop.permute.xlu0 %3743
    %v3746 = vperm.slane %v3594, 5
    %v3747 = vperm.slane %v3595, 5
    %v3748 = vmul.f32 %v3744, %v3746
    %v3749 = vmul.f32 %v3744, %v3747
    %v3750 = vadd.f32 %v3740, %v3748
    %v3751 = vadd.f32 %v3741, %v3749
    %3752 = vset.pattern.permute.xlu0 14
    %3753 = vperm.xlu0 %3752, %v3604
    %v3754 = vpop.permute.xlu0 %3753
    %v3756 = vperm.slane %v3594, 6
    %v3757 = vperm.slane %v3595, 6
    %v3758 = vmul.f32 %v3754, %v3756
    %v3759 = vmul.f32 %v3754, %v3757
    %v3760 = vadd.f32 %v3750, %v3758
    %v3761 = vadd.f32 %v3751, %v3759
    %v3762 = vmin.f32 %v3760, 20.0
    %v3763 = vmin.f32 %v3761, 20.0
    %v3764 = vmul.f32 %v3762, 1.442695
    %v3765 = vpow.pop %v3764
    %v3766 = vmul.f32 %v3763, 1.442695
    %v3767 = vpow.pop %v3766
    %v3768 = vadd.f32 %v3765, 2.0
    %v3769 = vadd.f32 %v3767, 2.0
    %v3770 = vmul.f32 %v3765, %v3768
    %v3771 = vmul.f32 %v3767, %v3769
    %v3772 = vmul.f32 %v3760, %v3770
    %v3773 = vmul.f32 %v3761, %v3771
    %v3774 = vadd.f32 %v3770, 2.0
    %v3775 = vadd.f32 %v3771, 2.0
    %v3776 = vrcp.pop %v3774
    %v3777 = vmul.f32 %v3774, %v3776
    %v3778 = vsub.f32 1.0, %v3777
    %v3779 = vmul.f32 %v3776, %v3778
    %v3780 = vadd.f32 %v3776, %v3779
    %vm3781 = vweird.f32 %v3774
    %vm3782 = vweird.f32 %v3776
    %vm3783 = vmor %vm3781, %vm3782
    %v3784 = vsel %vm3783, %v3776, %v3780
    %v3785 = vand.u32 2147483647, %v3774
    %vm3786 = vcmp.eq.f32.partialorder %v3785, 8.507059e+37
    %v3787 = vand.u32 %v3774, 2147483648
    %v3788 = vor.u32 1.1754944e-38, %v3787
    %v3789 = vsel %vm3786, %v3788, %v3784
    %v3790 = vrcp.pop %v3775
    %v3791 = vmul.f32 %v3775, %v3790
    %v3792 = vsub.f32 1.0, %v3791
    %v3793 = vmul.f32 %v3790, %v3792
    %v3794 = vadd.f32 %v3790, %v3793
    %vm3795 = vweird.f32 %v3775
    %vm3796 = vweird.f32 %v3790
    %vm3797 = vmor %vm3795, %vm3796
    %v3798 = vsel %vm3797, %v3790, %v3794
    %v3799 = vand.u32 2147483647, %v3775
    %vm3800 = vcmp.eq.f32.partialorder %v3799, 8.507059e+37
    %v3801 = vand.u32 %v3775, 2147483648
    %v3802 = vor.u32 1.1754944e-38, %v3801
    %v3803 = vsel %vm3800, %v3802, %v3798
    %v3804 = vmul.f32 %v3772, %v3789
    %v3805 = vmul.f32 %v3773, %v3803
    %3806 = vset.pattern.permute.xlu0 0
    %3807 = vperm.xlu0 %3806, %v1604
    %v3808 = vpop.permute.xlu0 %3807
    %v3810 = vmul.f32 %v3804, %v3808
    %v3811 = vmul.f32 %v3805, %v3808
    %v3812 = vadd.f32 %v3602, %v3810
    %v3813 = vadd.f32 %v3603, %v3811
    %v3814 = vmin.f32 %v3812, 20.0
    %v3815 = vmin.f32 %v3813, 20.0
    %v3816 = vmul.f32 %v3814, 1.442695
    %v3817 = vpow.pop %v3816
    %v3818 = vmul.f32 %v3815, 1.442695
    %v3819 = vpow.pop %v3818
    %v3820 = vadd.f32 %v3817, 2.0
    %v3821 = vadd.f32 %v3819, 2.0
    %v3822 = vmul.f32 %v3817, %v3820
    %v3823 = vmul.f32 %v3819, %v3821
    %v3824 = vmul.f32 %v3812, %v3822
    %v3825 = vmul.f32 %v3813, %v3823
    %v3826 = vadd.f32 %v3822, 2.0
    %v3827 = vadd.f32 %v3823, 2.0
    %v3828 = vrcp.pop %v3826
    %v3829 = vmul.f32 %v3826, %v3828
    %v3830 = vsub.f32 1.0, %v3829
    %v3831 = vmul.f32 %v3828, %v3830
    %v3832 = vadd.f32 %v3828, %v3831
    %vm3833 = vweird.f32 %v3826
    %vm3834 = vweird.f32 %v3828
    %vm3835 = vmor %vm3833, %vm3834
    %v3836 = vsel %vm3835, %v3828, %v3832
    %v3837 = vand.u32 2147483647, %v3826
    %vm3838 = vcmp.eq.f32.partialorder %v3837, 8.507059e+37
    %v3839 = vand.u32 %v3826, 2147483648
    %v3840 = vor.u32 1.1754944e-38, %v3839
    %v3841 = vsel %vm3838, %v3840, %v3836
    %v3842 = vrcp.pop %v3827
    %v3843 = vmul.f32 %v3827, %v3842
    %v3844 = vsub.f32 1.0, %v3843
    %v3845 = vmul.f32 %v3842, %v3844
    %v3846 = vadd.f32 %v3842, %v3845
    %vm3847 = vweird.f32 %v3827
    %vm3848 = vweird.f32 %v3842
    %vm3849 = vmor %vm3847, %vm3848
    %v3850 = vsel %vm3849, %v3842, %v3846
    %v3851 = vand.u32 2147483647, %v3827
    %vm3852 = vcmp.eq.f32.partialorder %v3851, 8.507059e+37
    %v3853 = vand.u32 %v3827, 2147483648
    %v3854 = vor.u32 1.1754944e-38, %v3853
    %v3855 = vsel %vm3852, %v3854, %v3850
    %v3856 = vmul.f32 %v3824, %v3841
    %v3857 = vmul.f32 %v3825, %v3855
    %v3860 = vrot.slane %v501, 1
    %v3861 = vrot.slane %v590, 1
    %vm3864 = vcmp.ge.f32.partialorder %v501, %v3860
    %vm3865 = vcmp.ge.f32.partialorder %v590, %v3861
    %v3866 = vrot.slane %v501, 2
    %v3867 = vrot.slane %v590, 2
    %vm3870 = vcmp.ge.f32.partialorder %v501, %v3866
    %vm3871 = vcmp.ge.f32.partialorder %v590, %v3867
    %vm3872 = vmand %vm3864, %vm3870
    %vm3873 = vmand %vm3865, %vm3871
    %vm3874 = vmxor %vm3872, 1
    %vm3875 = vmxor %vm3873, 1
    %v3876 = vsel %vm3864, 1, 0
    %v3877 = vsel %vm3865, 1, 0
    %v3878 = vrot.slane %v3876, 1
    %v3879 = vrot.slane %v3877, 1
    %vm3880 = vcmp.ne.s32.totalorder %v3878, 0
    %vm3881 = vcmp.ne.s32.totalorder %v3879, 0
    %vm3882 = vmand %vm3874, %vm3880
    %vm3883 = vmand %vm3875, %vm3881
    %v3886 = vrot.slane %v3856, 1
    %v3887 = vrot.slane %v3857, 1
    %v3890 = vrot.slane %v3856, 2
    %v3891 = vrot.slane %v3857, 2
    %v3894 = vsel %vm3882, %v3886, %v3890
    %v3895 = vsel %vm3883, %v3887, %v3891
    %v3896 = vsel %vm3872, %v3856, %v3894
    %v3897 = vsel %vm3873, %v3857, %v3895
    %v3900 = vrot.slane %v3897, 7
    %vm3901 = vcmask 1040384
    %v3902 = vsel %vm3901, %v3896, %v3900
    %v3904 = vlaneseq
    %vm3905 = vcmp.ge.s32.totalorder %v3904, 0
    %vm3906 = vcmp.lt.s32.totalorder %v3904, 256
    %vm3907 = vmand %vm3905, %vm3906
    %3908 = vst.msk [vmem:[#allocation2] sm:$0x3] %vm3907, %v3902
    // Predicated region
    $region54: #{tpu_custom_call.1} parent=1 // pred_check
      _
    $region55: #{tpu_custom_call.1} parent=1 // pred_check_branch
      %3910 = sbr.rel (0) target = $region57
    $region56: #{tpu_custom_call.1} parent=1 // pred_region
      %3912 = vsyncadd [#allocation3], 0
      %s3914 = sshll.u32 [#allocation2], 4
      %s3915 = int_to_ptr.vmem [resolvable:$true] %s3914
      %s3916 = sshll.u32 %s13, 4
      %s3917 = int_to_ptr.hbm [resolvable:$true] %s3916
      %3919 = dma.vmem_to_hbm [thread:$0]  %s3915, 32, %s3917, [#allocation3]
    $region57: #{tpu_custom_call.1} parent=1 // pred_fallthru
      _
    // Predicated region
    $region58: #{tpu_custom_call.1} parent=1 // pred_check
      _
    $region59: #{tpu_custom_call.1} parent=1 // pred_check_branch
      %3921 = sbr.rel (0) target = $region61
    $region60: #{tpu_custom_call.1} parent=1 // pred_region
      %3923 = dma.done [#allocation3], 32
    $region61: #{tpu_custom_call.1} parent=1 // pred_fallthru
      _
    %3924 = vsyncpa [#allocation3], 1

</llo_original>
